<compile_context>
chip_gen: v6e
topology: v6e:2x2x1
jax: 0.10.0
libtpu: 0.0.40
codegen_flags: <defaults>
</compile_context>

<pallas_src>
import functools

import jax
import jax.numpy as jnp
import numpy as np
from jax import lax
from jax.experimental import pallas as pl
from jax.experimental.pallas import tpu as pltpu


def _const_spec(shape):
    nd = len(shape)
    return pl.BlockSpec(shape, lambda *_, _nd=nd: (0,) * _nd)


# ----------------------------------------------------------------------------
# Kernel 1: Bottleneck + ToStyleHead conv head (per grid step: B samples)
# ----------------------------------------------------------------------------
def _rbmad_spatial_kernel(a_ref, x_ref, wb1_ref, g1_ref, be1_ref, wdw_ref,
                          g2_ref, be2_ref, wb3_ref, g3_ref, be3_ref,
                          wh1_ref, bh1_ref, gh_ref, beh_ref,
                          pooled_ref, pad_scr,
                          *, B, H, W, C, eps):
    HW = H * W
    Hs, Ws = H - 2, W - 2                    # spatial size after VALID 3x3 dw-conv
    f32 = jnp.float32

    def inorm(t, g_ref, b_ref):
        # t: (B, S, C); per-sample, per-channel stats over S (two-pass variance).
        m = jnp.mean(t, axis=1, keepdims=True)
        c = t - m
        var = jnp.mean(c * c, axis=1, keepdims=True)
        scale = lax.rsqrt(var + eps) * g_ref[...].reshape(1, 1, C)
        return c * scale + b_ref[...].reshape(1, 1, C)

    x = x_ref[...]                           # (B, H, W, C) f32

    # --- Bottleneck.conv1 (1x1, no bias) + IN1 + ReLU6 ---
    t = jnp.dot(x.reshape(B * HW, C), wb1_ref[...],
                preferred_element_type=f32).reshape(B, HW, C)
    t = jnp.clip(inorm(t, g1_ref, be1_ref), 0.0, 6.0).reshape(B, H, W, C)

    # --- Bottleneck.conv2 (depthwise 3x3, VALID, no bias) + IN2 + ReLU6 ---
    wdw = wdw_ref[...]                       # (9, C) per-tap per-channel weights
    acc = t[:, 0:Hs, 0:Ws, :] * wdw[0:1, :].reshape(1, 1, 1, C)
    for tap in range(1, 9):
        dy, dx = tap // 3, tap % 3
        acc = acc + t[:, dy:dy + Hs, dx:dx + Ws, :] * wdw[tap:tap + 1, :].reshape(1, 1, 1, C)
    y = jnp.clip(inorm(acc.reshape(B, Hs * Ws, C), g2_ref, be2_ref), 0.0, 6.0)

    # --- Bottleneck.conv3 (1x1, no bias) ---
    z = jnp.dot(y.reshape(B * Hs * Ws, C), wb3_ref[...],
                preferred_element_type=f32).reshape(B, Hs, Ws, C)

    # --- ReflectionPad2d(1): the 1x1 conv commutes with the spatial pad, so
    #     pad conv3's output.  Vertical reflection is a register concat on the
    #     untiled H axis; the horizontal duplication is folded into the column
    #     stores below, so the padded tensor is never materialized in VMEM. ---
    zr = jnp.concatenate([z[:, 1:2], z, z[:, Hs - 2:Hs - 1]], axis=1)   # (B,H,Ws,C)

    # --- IN3: statistics over the reflect-padded (H, W) extent, computed from
    #     zr plus its two horizontally duplicated columns (two-pass variance).
    cL = zr[:, :, 1:2, :]                    # becomes padded column 0
    cR = zr[:, :, Ws - 2:Ws - 1, :]          # becomes padded column W-1
    npad = float(H * W)
    s3 = (jnp.sum(zr, axis=(1, 2), keepdims=True)
          + jnp.sum(cL, axis=(1, 2), keepdims=True)
          + jnp.sum(cR, axis=(1, 2), keepdims=True))
    m3 = s3 / npad                           # (B, 1, 1, C)
    d = zr - m3
    dL = cL - m3
    dR = cR - m3
    v3 = (jnp.sum(d * d, axis=(1, 2), keepdims=True)
          + jnp.sum(dL * dL, axis=(1, 2), keepdims=True)
          + jnp.sum(dR * dR, axis=(1, 2), keepdims=True)) / npad
    scale3 = lax.rsqrt(v3 + eps) * g3_ref[...].reshape(1, 1, 1, C)
    rbr = d * scale3 + be3_ref[...].reshape(1, 1, 1, C)       # normalized (B,H,Ws,C)

    # --- Build the zero-padded residual output for the ToStyleHead 3x3 conv.
    #     pad_scr keeps zeros on its 1-pixel border (re-zeroed every step:
    #     cheap and safe when the "parallel" axis is split across TensorCores)
    #     and receives IN3(reflect_pad(conv3)) + x in its interior. ---
    zero_row = jnp.zeros((B, 1, W + 2, C), f32)
    zero_col = jnp.zeros((B, H + 2, 1, C), f32)
    pad_scr[:, 0:1, :, :] = zero_row
    pad_scr[:, H + 1:H + 2, :, :] = zero_row
    pad_scr[:, :, 0:1, :] = zero_col
    pad_scr[:, :, W + 1:W + 2, :] = zero_col
    pad_scr[:, 1:H + 1, 2:W, :] = rbr + x[:, :, 1:W - 1, :]
    pad_scr[:, 1:H + 1, 1:2, :] = rbr[:, :, 1:2, :] + x[:, :, 0:1, :]
    pad_scr[:, 1:H + 1, W:W + 1, :] = rbr[:, :, Ws - 2:Ws - 1, :] + x[:, :, W - 1:W, :]

    # --- ToStyleHead 3x3 "same" conv: 9 accumulated per-tap matmuls (no
    #     im2col buffer, no full-buffer zero fill). ---
    wh1 = wh1_ref[...]                       # (9*C, C)
    conv = jnp.dot(pad_scr[:, 0:H, 0:W, :].reshape(B * HW, C), wh1[0:C, :],
                   preferred_element_type=f32)
    for tap in range(1, 9):
        dy, dx = tap // 3, tap % 3
        patch = pad_scr[:, dy:dy + H, dx:dx + W, :].reshape(B * HW, C)
        conv = conv + jnp.dot(patch, wh1[tap * C:(tap + 1) * C, :],
                              preferred_element_type=f32)
    conv = conv + bh1_ref[...]

    # --- InstanceNorm + shared-slope PReLU (slope from SMEM) + global pool ---
    hcs = inorm(conv.reshape(B, HW, C), gh_ref, beh_ref)
    slope = a_ref[0]
    hcs = jnp.where(hcs > 0, hcs, slope * hcs)
    pooled_ref[...] = jnp.mean(hcs, axis=1)[None]             # (1, B, C)


# ----------------------------------------------------------------------------
# Kernel 2: pooled 1x1 conv + all Linear / PReLU / tanh head math
# ----------------------------------------------------------------------------
def _rbmad_head_kernel(a_ref, pooled_ref, w2_ref, b2_ref, code_ref,
                       wcm1_ref, bcm1_ref, wcm2_ref, bcm2_ref,
                       wcm3_ref, bcm3_ref, wme_ref, bme_ref,
                       wmnl2a_ref, wmnl2b_ref, bmnl2_ref,
                       wsnl2a_ref, wsnl2b_ref, bsnl2_ref,
                       wmean_ref, wstd_ref, mean_ref, std_ref):
    f32 = jnp.float32

    def prelu(v, a):
        return jnp.where(v > 0, v, a * v)

    def dotw(v, w_ref):
        w = w_ref[...]
        # bf16 weights -> bf16 MXU matmul with f32 accumulation; f32 weights
        # stay f32 (the .astype is a no-op then).
        return jnp.dot(v.astype(w.dtype), w, preferred_element_type=f32)

    # ToStyleHead final 1x1 conv on pooled features (hoisted here: M = N rows).
    x_enc = dotw(pooled_ref[...], w2_ref) + b2_ref[...]                  # (N, 768)

    h = prelu(dotw(code_ref[...], wcm1_ref) + bcm1_ref[...], a_ref[0])
    h = prelu(dotw(h, wcm2_ref) + bcm2_ref[...], a_ref[1])
    code_c = jnp.tanh(dotw(h, wcm3_ref) + bcm3_ref[...])

    xm = prelu(dotw(x_enc, wme_ref) + bme_ref[...], a_ref[2])

    # merge = concat([xm, code_c]); the concat is folded into split weights.
    m = prelu(dotw(xm, wmnl2a_ref) + dotw(code_c, wmnl2b_ref) + bmnl2_ref[...],
              a_ref[3])
    s = prelu(dotw(xm, wsnl2a_ref) + dotw(code_c, wsnl2b_ref) + bsnl2_ref[...],
              a_ref[4])

    mean_ref[...] = dotw(m, wmean_ref)
    std_ref[...] = dotw(s, wstd_ref)


# ----------------------------------------------------------------------------
# Wrapper
# ----------------------------------------------------------------------------
def rbmad_forward_pallas(x_nchw, code, p, eps=1e-5):
    N, C, H, W = x_nchw.shape
    D = p['fc_mean_w'].shape[0]
    f32 = jnp.float32
    bf16 = jnp.bfloat16
    assert H >= 4 and W >= 4, "ReflectionPad2d(1) after the 3x3 VALID conv needs H,W >= 4"

    # ---- spatial kernel operands (NHWC activations, matrix-layout weights) ----
    x_nhwc = jnp.transpose(x_nchw, (0, 2, 3, 1)).astype(f32)

    wb1 = jnp.transpose(p['rb_conv1_w'][:, :, 0, 0], (1, 0)).astype(f32)     # (Cin, Cout)
    wdw = jnp.transpose(p['rb_conv2_w'][:, 0], (1, 2, 0)).reshape(9, C).astype(f32)
    wb3 = jnp.transpose(p['rb_conv3_w'][:, :, 0, 0], (1, 0)).astype(f32)
    # 3x3 conv weight OIHW -> HWIO -> (9*Cin, Cout).
    wh1 = jnp.transpose(p['h_conv1_w'], (2, 3, 1, 0)).reshape(9 * C, C).astype(f32)

    row = lambda v: jnp.reshape(v, (1, -1)).astype(f32)
    g1, be1 = row(p['rb_in1_g']), row(p['rb_in1_b'])
    g2, be2 = row(p['rb_in2_g']), row(p['rb_in2_b'])
    g3, be3 = row(p['rb_in3_g']), row(p['rb_in3_b'])
    bh1 = row(p['h_conv1_b'])
    gh, beh = row(p['h_in_g']), row(p['h_in_b'])
    slope_h = jnp.reshape(p['h_prelu'], (1,)).astype(f32)

    # Batch-group size per grid step: prefer M = B*H*W >= 128 for the conv
    # matmuls, but keep >= 2 grid steps when possible so the "parallel" axis
    # actually shards across v7x's two TensorCores.
    HW = H * W
    B = 1
    while B < N and B * HW < 128:
        B += 1
    while N % B:
        B -= 1
    if N >= 2 and N // B < 2 and HW >= 64:
        B = max(1, N // 2)
        while N % B:
            B -= 1
    G = N // B

    smem_spec = pl.BlockSpec(memory_space=pltpu.MemorySpace.SMEM)

    spatial_kernel = functools.partial(_rbmad_spatial_kernel,
                                       B=B, H=H, W=W, C=C, eps=eps)

    pooled = pl.pallas_call(
        spatial_kernel,
        out_shape=jax.ShapeDtypeStruct((G, B, C), f32),
        grid=(G,),
        in_specs=[
            smem_spec,                                            # PReLU slope
            pl.BlockSpec((B, H, W, C), lambda n: (n, 0, 0, 0)),   # activations
            _const_spec(wb1.shape), _const_spec(g1.shape), _const_spec(be1.shape),
            _const_spec(wdw.shape), _const_spec(g2.shape), _const_spec(be2.shape),
            _const_spec(wb3.shape), _const_spec(g3.shape), _const_spec(be3.shape),
            _const_spec(wh1.shape), _const_spec(bh1.shape),
            _const_spec(gh.shape), _const_spec(beh.shape),
        ],
        out_specs=pl.BlockSpec((1, B, C), lambda n: (n, 0, 0)),
        scratch_shapes=[
            pltpu.VMEM((B, H + 2, W + 2, C), f32),   # shared zero-padded buffer
        ],
        compiler_params=pltpu.CompilerParams(
            dimension_semantics=("parallel",)),      # default VMEM limit: buffers are tiny
    )(slope_h, x_nhwc, wb1, g1, be1, wdw, g2, be2, wb3, g3, be3,
      wh1, bh1, gh, beh)
    pooled = pooled.reshape(N, C)

    # ---- head kernel operands ----
    tW = lambda w, dt: jnp.transpose(w, (1, 0)).astype(dt)
    # Large, DMA-dominant weights go to HBM as bf16 (the head kernel is
    # weight-DMA-bound); tiny late-stage weights stay f32 so precision error
    # does not compound into the final outputs.
    w2 = tW(p['h_conv2_w'][:, :, 0, 0], f32)                              # (C, 768)
    b2 = row(p['h_conv2_b'])
    wcm1, bcm1 = tW(p['cm1_w'], bf16), row(p['cm1_b'])                    # 1920x1024
    wcm2, bcm2 = tW(p['cm2_w'], bf16), row(p['cm2_b'])                    # 1024x512
    wcm3, bcm3 = tW(p['cm3_w'], f32), row(p['cm3_b'])
    wme, bme = tW(p['me_w'], bf16), row(p['me_b'])                        # 768x2D
    wmnl2 = tW(p['mnl2_w'], f32)                                          # (4D, D)
    wmnl2a, wmnl2b = wmnl2[:2 * D], wmnl2[2 * D:]
    bmnl2 = row(p['mnl2_b'])
    wsnl2 = tW(p['snl2_w'], f32)
    wsnl2a, wsnl2b = wsnl2[:2 * D], wsnl2[2 * D:]
    bsnl2 = row(p['snl2_b'])
    wmean, wstd = tW(p['fc_mean_w'], f32), tW(p['fc_std_w'], f32)
    slopes = jnp.stack([p['cm1_a'], p['cm2_a'], p['me_a'],
                        p['mnl2_a'], p['snl2_a']]).astype(f32)
    code_f = code.astype(f32)

    vmem_args = [pooled, w2, b2, code_f, wcm1, bcm1, wcm2, bcm2, wcm3, bcm3,
                 wme, bme, wmnl2a, wmnl2b, bmnl2, wsnl2a, wsnl2b, bsnl2,
                 wmean, wstd]

    # VMEM budget from actual operand sizes (inputs are double-buffered even at
    # grid=(1,)); clamp well below v7x's 64 MiB physical VMEM.
    head_bytes = sum(int(a.size) * a.dtype.itemsize for a in vmem_args)
    head_vmem = int(min(2 * head_bytes + (8 << 20), 56 << 20))

    mean, std = pl.pallas_call(
        _rbmad_head_kernel,
        out_shape=(jax.ShapeDtypeStruct((N, D), f32),
                   jax.ShapeDtypeStruct((N, D), f32)),
        grid=(1,),
        in_specs=[smem_spec] + [_const_spec(a.shape) for a in vmem_args],
        out_specs=(_const_spec((N, D)), _const_spec((N, D))),
        compiler_params=pltpu.CompilerParams(
            dimension_semantics=("arbitrary",),
            vmem_limit_bytes=head_vmem),
    )(slopes, *vmem_args)

    return mean, std


# ----------------------------------------------------------------------------
# Pure-JAX reference (mirrors the PyTorch module)
# ----------------------------------------------------------------------------
def rbmad_forward_reference(x, code, p, eps=1e-5):
    C = x.shape[1]

    def inorm(y, g, b):
        m = jnp.mean(y, axis=(2, 3), keepdims=True)
        v = jnp.mean((y - m) ** 2, axis=(2, 3), keepdims=True)
        return (y - m) / jnp.sqrt(v + eps) * g[None, :, None, None] \
            + b[None, :, None, None]

    relu6 = lambda y: jnp.clip(y, 0.0, 6.0)
    dn = ("NCHW", "OIHW", "NCHW")

    # Bottleneck
    y = lax.conv_general_dilated(x, p['rb_conv1_w'], (1, 1), 'VALID',
                                 dimension_numbers=dn)
    y = relu6(inorm(y, p['rb_in1_g'], p['rb_in1_b']))
    y = lax.conv_general_dilated(y, p['rb_conv2_w'], (1, 1), 'VALID',
                                 dimension_numbers=dn, feature_group_count=C)
    y = relu6(inorm(y, p['rb_in2_g'], p['rb_in2_b']))
    y = jnp.pad(y, ((0, 0), (0, 0), (1, 1), (1, 1)), mode="reflect")
    y = lax.conv_general_dilated(y, p['rb_conv3_w'], (1, 1), 'VALID',
                                 dimension_numbers=dn)
    y = inorm(y, p['rb_in3_g'], p['rb_in3_b'])
    x_rb = x + y

    # ToStyleHead
    h = lax.conv_general_dilated(x_rb, p['h_conv1_w'], (1, 1),
                                 ((1, 1), (1, 1)), dimension_numbers=dn)
    h = h + p['h_conv1_b'][None, :, None, None]
    h = inorm(h, p['h_in_g'], p['h_in_b'])
    h = jnp.where(h > 0, h, p['h_prelu'] * h)
    pooled = jnp.mean(h, axis=(2, 3))                                   # (N, C)
    x_enc = pooled @ p['h_conv2_w'][:, :, 0, 0].T + p['h_conv2_b']      # (N, 768)

    prelu = lambda v, a: jnp.where(v > 0, v, a * v)
    lin = lambda v, W, b=None: (v @ W.T + b) if b is not None else v @ W.T

    cm = prelu(lin(code, p['cm1_w'], p['cm1_b']), p['cm1_a'])
    cm = prelu(lin(cm, p['cm2_w'], p['cm2_b']), p['cm2_a'])
    code_c = jnp.tanh(lin(cm, p['cm3_w'], p['cm3_b']))
    xm = prelu(lin(x_enc, p['me_w'], p['me_b']), p['me_a'])
    merge = jnp.concatenate([xm, code_c], axis=1)
    m = prelu(lin(merge, p['mnl2_w'], p['mnl2_b']), p['mnl2_a'])
    s = prelu(lin(merge, p['snl2_w'], p['snl2_b']), p['snl2_a'])
    return lin(m, p['fc_mean_w']), lin(s, p['fc_std_w'])


# ----------------------------------------------------------------------------
# Parameters (PyTorch layouts)
# ----------------------------------------------------------------------------
def make_params(key, input_dim, output_dim):
    C, D = input_dim, output_dim
    ks = iter(jax.random.split(key, 32))
    nrm = lambda shape, scale: scale * jax.random.normal(next(ks), shape, jnp.float32)
    conv_w = lambda cout, cin, k: nrm((cout, cin, k, k), 1.0 / np.sqrt(cin * k * k))
    lin_w = lambda cout, cin: nrm((cout, cin), 1.0 / np.sqrt(cin))
    lin_b = lambda cout: nrm((cout,), 0.1)
    in_g = lambda c: 1.0 + nrm((c,), 0.1)
    in_b = lambda c: nrm((c,), 0.1)

    p = {}
    # Bottleneck
    p['rb_conv1_w'] = conv_w(C, C, 1)
    p['rb_in1_g'], p['rb_in1_b'] = in_g(C), in_b(C)
    p['rb_conv2_w'] = nrm((C, 1, 3, 3), 1.0 / 3.0)           # depthwise
    p['rb_in2_g'], p['rb_in2_b'] = in_g(C), in_b(C)
    p['rb_conv3_w'] = conv_w(C, C, 1)
    p['rb_in3_g'], p['rb_in3_b'] = in_g(C), in_b(C)
    # ToStyleHead
    p['h_conv1_w'], p['h_conv1_b'] = conv_w(C, C, 3), lin_b(C)
    p['h_in_g'], p['h_in_b'] = in_g(C), in_b(C)
    p['h_prelu'] = jnp.float32(0.25)
    p['h_conv2_w'], p['h_conv2_b'] = conv_w(768, C, 1), lin_b(768)
    # code path
    p['cm1_w'], p['cm1_b'], p['cm1_a'] = lin_w(1024, 1920), lin_b(1024), jnp.float32(0.25)
    p['cm2_w'], p['cm2_b'], p['cm2_a'] = lin_w(512, 1024), lin_b(512), jnp.float32(0.25)
    p['cm3_w'], p['cm3_b'] = lin_w(2 * D, 512), lin_b(2 * D)
    # x_enc path + merge heads
    p['me_w'], p['me_b'], p['me_a'] = lin_w(2 * D, 768), lin_b(2 * D), jnp.float32(0.25)
    p['mnl2_w'], p['mnl2_b'], p['mnl2_a'] = lin_w(D, 4 * D), lin_b(D), jnp.float32(0.25)
    p['snl2_w'], p['snl2_b'], p['snl2_a'] = lin_w(D, 4 * D), lin_b(D), jnp.float32(0.25)
    p['fc_mean_w'] = lin_w(D, D)
    p['fc_std_w'] = lin_w(D, D)
    return p


if __name__ == "__main__":
    N, C, H, W = 2, 8, 8, 8
    D = 16                       # output_dim
    CODE_DIM = 1920              # fixed by the module (Linear(1920, 1024))

    key = jax.random.PRNGKey(0)
    kx, kc, kp = jax.random.split(key, 3)
    x = jax.random.normal(kx, (N, C, H, W), jnp.float32)
    code = jax.random.normal(kc, (N, CODE_DIM), jnp.float32)
    params = make_params(kp, C, D)

    mean, std = rbmad_forward_pallas(x, code, params)
    mean, std = jax.block_until_ready((mean, std))

    ref_mean, ref_std = rbmad_forward_reference(x, code, params)
    assert mean.shape == (N, D) and std.shape == (N, D)
    np.testing.assert_allclose(np.asarray(mean), np.asarray(ref_mean),
                               rtol=2e-2, atol=2e-2)
    np.testing.assert_allclose(np.asarray(std), np.asarray(ref_std),
                               rtol=2e-2, atol=2e-2)
    print("KERNEL_OK")
</pallas_src>

<mosaic_0001>
module attributes {stable_mosaic.version = 11 : i64} {
  func.func @_rbmad_spatial_kernel(%arg0: i32, %arg1: memref<1xf32, #tpu.memory_space<smem>>, %arg2: memref<1x8x8x8xf32, #tpu.memory_space<vmem>>, %arg3: memref<8x8xf32, #tpu.memory_space<vmem>>, %arg4: memref<1x8xf32, #tpu.memory_space<vmem>>, %arg5: memref<1x8xf32, #tpu.memory_space<vmem>>, %arg6: memref<9x8xf32, #tpu.memory_space<vmem>>, %arg7: memref<1x8xf32, #tpu.memory_space<vmem>>, %arg8: memref<1x8xf32, #tpu.memory_space<vmem>>, %arg9: memref<8x8xf32, #tpu.memory_space<vmem>>, %arg10: memref<1x8xf32, #tpu.memory_space<vmem>>, %arg11: memref<1x8xf32, #tpu.memory_space<vmem>>, %arg12: memref<72x8xf32, #tpu.memory_space<vmem>>, %arg13: memref<1x8xf32, #tpu.memory_space<vmem>>, %arg14: memref<1x8xf32, #tpu.memory_space<vmem>>, %arg15: memref<1x8xf32, #tpu.memory_space<vmem>>, %arg16: memref<1x1x8xf32, #tpu.memory_space<vmem>>, %arg17: memref<1x10x10x8xf32, #tpu.memory_space<vmem>>) attributes {dimension_semantics = [#tpu.dimension_semantics<parallel>], iteration_bounds = array<i64: 2>, scalar_prefetch = 0 : i64, scratch_operands = 1 : i64, tpu.core_type = #tpu.core_type<tc>, window_params = [{transform_indices = @transform_0, window_bounds = array<i64: 1>}, {transform_indices = @transform_1, window_bounds = array<i64: 1, 8, 8, 8>}, {pipeline_mode = #tpu.pipeline_mode<synchronous>, transform_indices = @transform_2, window_bounds = array<i64: 8, 8>}, {pipeline_mode = #tpu.pipeline_mode<synchronous>, transform_indices = @transform_3, window_bounds = array<i64: 1, 8>}, {pipeline_mode = #tpu.pipeline_mode<synchronous>, transform_indices = @transform_4, window_bounds = array<i64: 1, 8>}, {pipeline_mode = #tpu.pipeline_mode<synchronous>, transform_indices = @transform_5, window_bounds = array<i64: 9, 8>}, {pipeline_mode = #tpu.pipeline_mode<synchronous>, transform_indices = @transform_6, window_bounds = array<i64: 1, 8>}, {pipeline_mode = #tpu.pipeline_mode<synchronous>, transform_indices = @transform_7, window_bounds = array<i64: 1, 8>}, {pipeline_mode = #tpu.pipeline_mode<synchronous>, transform_indices = @transform_8, window_bounds = array<i64: 8, 8>}, {pipeline_mode = #tpu.pipeline_mode<synchronous>, transform_indices = @transform_9, window_bounds = array<i64: 1, 8>}, {pipeline_mode = #tpu.pipeline_mode<synchronous>, transform_indices = @transform_10, window_bounds = array<i64: 1, 8>}, {pipeline_mode = #tpu.pipeline_mode<synchronous>, transform_indices = @transform_11, window_bounds = array<i64: 72, 8>}, {pipeline_mode = #tpu.pipeline_mode<synchronous>, transform_indices = @transform_12, window_bounds = array<i64: 1, 8>}, {pipeline_mode = #tpu.pipeline_mode<synchronous>, transform_indices = @transform_13, window_bounds = array<i64: 1, 8>}, {pipeline_mode = #tpu.pipeline_mode<synchronous>, transform_indices = @transform_14, window_bounds = array<i64: 1, 8>}, {transform_indices = @transform_15, window_bounds = array<i64: 1, 1, 8>}]} {
    %c0 = arith.constant 0 : index
    %c0_0 = arith.constant 0 : index
    %c0_1 = arith.constant 0 : index
    %c0_2 = arith.constant 0 : index
    %0 = vector.load %arg2[%c0, %c0_0, %c0_1, %c0_2] : memref<1x8x8x8xf32, #tpu.memory_space<vmem>>, vector<1x8x8x8xf32>
    %1 = vector.shape_cast %0 : vector<1x8x8x8xf32> to vector<64x8xf32>
    %c0_3 = arith.constant 0 : index
    %c0_4 = arith.constant 0 : index
    %2 = vector.load %arg3[%c0_3, %c0_4] : memref<8x8xf32, #tpu.memory_space<vmem>>, vector<8x8xf32>
    %cst = arith.constant dense<0.000000e+00> : vector<64x8xf32>
    %3 = tpu.matmul %1, %2, %cst {dimension_numbers = #tpu.dot_dimension_numbers<[1], [0], [0], [1], [0, 0, 1, 1], [], []>} : vector<64x8xf32>, vector<8x8xf32>, vector<64x8xf32> -> vector<64x8xf32>
    %4 = vector.shape_cast %3 : vector<64x8xf32> to vector<1x64x8xf32>
    %cst_5 = arith.constant dense<0.000000e+00> : vector<1x8xf32>
    %5 = vector.multi_reduction <add>, %4, %cst_5 [1] : vector<1x64x8xf32> to vector<1x8xf32>
    %6 = vector.shape_cast %5 : vector<1x8xf32> to vector<1x1x8xf32>
    %cst_6 = arith.constant 6.400000e+01 : f32
    %7 = vector.broadcast %cst_6 : f32 to vector<1x1x8xf32>
    %8 = arith.divf %6, %7 : vector<1x1x8xf32>
    %9 = vector.broadcast %8 : vector<1x1x8xf32> to vector<1x64x8xf32>
    %10 = arith.subf %4, %9 : vector<1x64x8xf32>
    %11 = arith.mulf %10, %10 : vector<1x64x8xf32>
    %cst_7 = arith.constant dense<0.000000e+00> : vector<1x8xf32>
    %12 = vector.multi_reduction <add>, %11, %cst_7 [1] : vector<1x64x8xf32> to vector<1x8xf32>
    %13 = vector.shape_cast %12 : vector<1x8xf32> to vector<1x1x8xf32>
    %cst_8 = arith.constant 6.400000e+01 : f32
    %14 = vector.broadcast %cst_8 : f32 to vector<1x1x8xf32>
    %15 = arith.divf %13, %14 : vector<1x1x8xf32>
    %cst_9 = arith.constant 9.99999974E-6 : f32
    %16 = vector.broadcast %cst_9 : f32 to vector<1x1x8xf32>
    %17 = arith.addf %15, %16 : vector<1x1x8xf32>
    %18 = math.rsqrt %17 : vector<1x1x8xf32>
    %c0_10 = arith.constant 0 : index
    %c0_11 = arith.constant 0 : index
    %19 = vector.load %arg4[%c0_10, %c0_11] : memref<1x8xf32, #tpu.memory_space<vmem>>, vector<1x8xf32>
    %20 = vector.shape_cast %19 : vector<1x8xf32> to vector<1x1x8xf32>
    %21 = arith.mulf %18, %20 : vector<1x1x8xf32>
    %22 = vector.broadcast %21 : vector<1x1x8xf32> to vector<1x64x8xf32>
    %23 = arith.mulf %10, %22 : vector<1x64x8xf32>
    %c0_12 = arith.constant 0 : index
    %c0_13 = arith.constant 0 : index
    %24 = vector.load %arg5[%c0_12, %c0_13] : memref<1x8xf32, #tpu.memory_space<vmem>>, vector<1x8xf32>
    %25 = vector.shape_cast %24 : vector<1x8xf32> to vector<1x1x8xf32>
    %26 = vector.broadcast %25 : vector<1x1x8xf32> to vector<1x64x8xf32>
    %27 = arith.addf %23, %26 : vector<1x64x8xf32>
    %cst_14 = arith.constant 0.000000e+00 : f32
    %cst_15 = arith.constant 6.000000e+00 : f32
    %28 = vector.broadcast %cst_14 : f32 to vector<1x64x8xf32>
    %29 = arith.maximumf %28, %27 : vector<1x64x8xf32>
    %30 = vector.broadcast %cst_15 : f32 to vector<1x64x8xf32>
    %31 = arith.minimumf %30, %29 : vector<1x64x8xf32>
    %32 = vector.shape_cast %31 : vector<1x64x8xf32> to vector<1x8x8x8xf32>
    %c0_16 = arith.constant 0 : index
    %c0_17 = arith.constant 0 : index
    %33 = vector.load %arg6[%c0_16, %c0_17] : memref<9x8xf32, #tpu.memory_space<vmem>>, vector<9x8xf32>
    %34 = vector.extract_strided_slice %32 {offsets = [0, 0, 0, 0], sizes = [1, 6, 6, 8], strides = [1, 1, 1, 1]} : vector<1x8x8x8xf32> to vector<1x6x6x8xf32>
    %35 = vector.extract_strided_slice %33 {offsets = [0, 0], sizes = [1, 8], strides = [1, 1]} : vector<9x8xf32> to vector<1x8xf32>
    %36 = vector.shape_cast %35 : vector<1x8xf32> to vector<1x1x1x8xf32>
    %37 = vector.broadcast %36 : vector<1x1x1x8xf32> to vector<1x6x6x8xf32>
    %38 = arith.mulf %34, %37 : vector<1x6x6x8xf32>
    %39 = vector.extract_strided_slice %32 {offsets = [0, 0, 1, 0], sizes = [1, 6, 6, 8], strides = [1, 1, 1, 1]} : vector<1x8x8x8xf32> to vector<1x6x6x8xf32>
    %40 = vector.extract_strided_slice %33 {offsets = [1, 0], sizes = [1, 8], strides = [1, 1]} : vector<9x8xf32> to vector<1x8xf32>
    %41 = vector.shape_cast %40 : vector<1x8xf32> to vector<1x1x1x8xf32>
    %42 = vector.broadcast %41 : vector<1x1x1x8xf32> to vector<1x6x6x8xf32>
    %43 = arith.mulf %39, %42 : vector<1x6x6x8xf32>
    %44 = arith.addf %38, %43 : vector<1x6x6x8xf32>
    %45 = vector.extract_strided_slice %32 {offsets = [0, 0, 2, 0], sizes = [1, 6, 6, 8], strides = [1, 1, 1, 1]} : vector<1x8x8x8xf32> to vector<1x6x6x8xf32>
    %46 = vector.extract_strided_slice %33 {offsets = [2, 0], sizes = [1, 8], strides = [1, 1]} : vector<9x8xf32> to vector<1x8xf32>
    %47 = vector.shape_cast %46 : vector<1x8xf32> to vector<1x1x1x8xf32>
    %48 = vector.broadcast %47 : vector<1x1x1x8xf32> to vector<1x6x6x8xf32>
    %49 = arith.mulf %45, %48 : vector<1x6x6x8xf32>
    %50 = arith.addf %44, %49 : vector<1x6x6x8xf32>
    %51 = vector.extract_strided_slice %32 {offsets = [0, 1, 0, 0], sizes = [1, 6, 6, 8], strides = [1, 1, 1, 1]} : vector<1x8x8x8xf32> to vector<1x6x6x8xf32>
    %52 = vector.extract_strided_slice %33 {offsets = [3, 0], sizes = [1, 8], strides = [1, 1]} : vector<9x8xf32> to vector<1x8xf32>
    %53 = vector.shape_cast %52 : vector<1x8xf32> to vector<1x1x1x8xf32>
    %54 = vector.broadcast %53 : vector<1x1x1x8xf32> to vector<1x6x6x8xf32>
    %55 = arith.mulf %51, %54 : vector<1x6x6x8xf32>
    %56 = arith.addf %50, %55 : vector<1x6x6x8xf32>
    %57 = vector.extract_strided_slice %32 {offsets = [0, 1, 1, 0], sizes = [1, 6, 6, 8], strides = [1, 1, 1, 1]} : vector<1x8x8x8xf32> to vector<1x6x6x8xf32>
    %58 = vector.extract_strided_slice %33 {offsets = [4, 0], sizes = [1, 8], strides = [1, 1]} : vector<9x8xf32> to vector<1x8xf32>
    %59 = vector.shape_cast %58 : vector<1x8xf32> to vector<1x1x1x8xf32>
    %60 = vector.broadcast %59 : vector<1x1x1x8xf32> to vector<1x6x6x8xf32>
    %61 = arith.mulf %57, %60 : vector<1x6x6x8xf32>
    %62 = arith.addf %56, %61 : vector<1x6x6x8xf32>
    %63 = vector.extract_strided_slice %32 {offsets = [0, 1, 2, 0], sizes = [1, 6, 6, 8], strides = [1, 1, 1, 1]} : vector<1x8x8x8xf32> to vector<1x6x6x8xf32>
    %64 = vector.extract_strided_slice %33 {offsets = [5, 0], sizes = [1, 8], strides = [1, 1]} : vector<9x8xf32> to vector<1x8xf32>
    %65 = vector.shape_cast %64 : vector<1x8xf32> to vector<1x1x1x8xf32>
    %66 = vector.broadcast %65 : vector<1x1x1x8xf32> to vector<1x6x6x8xf32>
    %67 = arith.mulf %63, %66 : vector<1x6x6x8xf32>
    %68 = arith.addf %62, %67 : vector<1x6x6x8xf32>
    %69 = vector.extract_strided_slice %32 {offsets = [0, 2, 0, 0], sizes = [1, 6, 6, 8], strides = [1, 1, 1, 1]} : vector<1x8x8x8xf32> to vector<1x6x6x8xf32>
    %70 = vector.extract_strided_slice %33 {offsets = [6, 0], sizes = [1, 8], strides = [1, 1]} : vector<9x8xf32> to vector<1x8xf32>
    %71 = vector.shape_cast %70 : vector<1x8xf32> to vector<1x1x1x8xf32>
    %72 = vector.broadcast %71 : vector<1x1x1x8xf32> to vector<1x6x6x8xf32>
    %73 = arith.mulf %69, %72 : vector<1x6x6x8xf32>
    %74 = arith.addf %68, %73 : vector<1x6x6x8xf32>
    %75 = vector.extract_strided_slice %32 {offsets = [0, 2, 1, 0], sizes = [1, 6, 6, 8], strides = [1, 1, 1, 1]} : vector<1x8x8x8xf32> to vector<1x6x6x8xf32>
    %76 = vector.extract_strided_slice %33 {offsets = [7, 0], sizes = [1, 8], strides = [1, 1]} : vector<9x8xf32> to vector<1x8xf32>
    %77 = vector.shape_cast %76 : vector<1x8xf32> to vector<1x1x1x8xf32>
    %78 = vector.broadcast %77 : vector<1x1x1x8xf32> to vector<1x6x6x8xf32>
    %79 = arith.mulf %75, %78 : vector<1x6x6x8xf32>
    %80 = arith.addf %74, %79 : vector<1x6x6x8xf32>
    %81 = vector.extract_strided_slice %32 {offsets = [0, 2, 2, 0], sizes = [1, 6, 6, 8], strides = [1, 1, 1, 1]} : vector<1x8x8x8xf32> to vector<1x6x6x8xf32>
    %82 = vector.extract_strided_slice %33 {offsets = [8, 0], sizes = [1, 8], strides = [1, 1]} : vector<9x8xf32> to vector<1x8xf32>
    %83 = vector.shape_cast %82 : vector<1x8xf32> to vector<1x1x1x8xf32>
    %84 = vector.broadcast %83 : vector<1x1x1x8xf32> to vector<1x6x6x8xf32>
    %85 = arith.mulf %81, %84 : vector<1x6x6x8xf32>
    %86 = arith.addf %80, %85 : vector<1x6x6x8xf32>
    %87 = vector.shape_cast %86 : vector<1x6x6x8xf32> to vector<1x36x8xf32>
    %cst_18 = arith.constant dense<0.000000e+00> : vector<1x8xf32>
    %88 = vector.multi_reduction <add>, %87, %cst_18 [1] : vector<1x36x8xf32> to vector<1x8xf32>
    %89 = vector.shape_cast %88 : vector<1x8xf32> to vector<1x1x8xf32>
    %cst_19 = arith.constant 3.600000e+01 : f32
    %90 = vector.broadcast %cst_19 : f32 to vector<1x1x8xf32>
    %91 = arith.divf %89, %90 : vector<1x1x8xf32>
    %92 = vector.broadcast %91 : vector<1x1x8xf32> to vector<1x36x8xf32>
    %93 = arith.subf %87, %92 : vector<1x36x8xf32>
    %94 = arith.mulf %93, %93 : vector<1x36x8xf32>
    %cst_20 = arith.constant dense<0.000000e+00> : vector<1x8xf32>
    %95 = vector.multi_reduction <add>, %94, %cst_20 [1] : vector<1x36x8xf32> to vector<1x8xf32>
    %96 = vector.shape_cast %95 : vector<1x8xf32> to vector<1x1x8xf32>
    %cst_21 = arith.constant 3.600000e+01 : f32
    %97 = vector.broadcast %cst_21 : f32 to vector<1x1x8xf32>
    %98 = arith.divf %96, %97 : vector<1x1x8xf32>
    %cst_22 = arith.constant 9.99999974E-6 : f32
    %99 = vector.broadcast %cst_22 : f32 to vector<1x1x8xf32>
    %100 = arith.addf %98, %99 : vector<1x1x8xf32>
    %101 = math.rsqrt %100 : vector<1x1x8xf32>
    %c0_23 = arith.constant 0 : index
    %c0_24 = arith.constant 0 : index
    %102 = vector.load %arg7[%c0_23, %c0_24] : memref<1x8xf32, #tpu.memory_space<vmem>>, vector<1x8xf32>
    %103 = vector.shape_cast %102 : vector<1x8xf32> to vector<1x1x8xf32>
    %104 = arith.mulf %101, %103 : vector<1x1x8xf32>
    %105 = vector.broadcast %104 : vector<1x1x8xf32> to vector<1x36x8xf32>
    %106 = arith.mulf %93, %105 : vector<1x36x8xf32>
    %c0_25 = arith.constant 0 : index
    %c0_26 = arith.constant 0 : index
    %107 = vector.load %arg8[%c0_25, %c0_26] : memref<1x8xf32, #tpu.memory_space<vmem>>, vector<1x8xf32>
    %108 = vector.shape_cast %107 : vector<1x8xf32> to vector<1x1x8xf32>
    %109 = vector.broadcast %108 : vector<1x1x8xf32> to vector<1x36x8xf32>
    %110 = arith.addf %106, %109 : vector<1x36x8xf32>
    %cst_27 = arith.constant 0.000000e+00 : f32
    %cst_28 = arith.constant 6.000000e+00 : f32
    %111 = vector.broadcast %cst_27 : f32 to vector<1x36x8xf32>
    %112 = arith.maximumf %111, %110 : vector<1x36x8xf32>
    %113 = vector.broadcast %cst_28 : f32 to vector<1x36x8xf32>
    %114 = arith.minimumf %113, %112 : vector<1x36x8xf32>
    %115 = vector.shape_cast %114 : vector<1x36x8xf32> to vector<36x8xf32>
    %c0_29 = arith.constant 0 : index
    %c0_30 = arith.constant 0 : index
    %116 = vector.load %arg9[%c0_29, %c0_30] : memref<8x8xf32, #tpu.memory_space<vmem>>, vector<8x8xf32>
    %cst_31 = arith.constant dense<0.000000e+00> : vector<36x8xf32>
    %117 = tpu.matmul %115, %116, %cst_31 {dimension_numbers = #tpu.dot_dimension_numbers<[1], [0], [0], [1], [0, 0, 1, 1], [], []>} : vector<36x8xf32>, vector<8x8xf32>, vector<36x8xf32> -> vector<36x8xf32>
    %118 = vector.shape_cast %117 : vector<36x8xf32> to vector<1x6x6x8xf32>
    %119 = vector.extract_strided_slice %118 {offsets = [0, 1, 0, 0], sizes = [1, 1, 6, 8], strides = [1, 1, 1, 1]} : vector<1x6x6x8xf32> to vector<1x1x6x8xf32>
    %120 = vector.extract_strided_slice %118 {offsets = [0, 4, 0, 0], sizes = [1, 1, 6, 8], strides = [1, 1, 1, 1]} : vector<1x6x6x8xf32> to vector<1x1x6x8xf32>
    %121 = tpu.concatenate %119, %118, %120 in 1 : vector<1x1x6x8xf32>, vector<1x6x6x8xf32>, vector<1x1x6x8xf32> -> vector<1x8x6x8xf32>
    %122 = vector.extract_strided_slice %121 {offsets = [0, 0, 1, 0], sizes = [1, 8, 1, 8], strides = [1, 1, 1, 1]} : vector<1x8x6x8xf32> to vector<1x8x1x8xf32>
    %123 = vector.extract_strided_slice %121 {offsets = [0, 0, 4, 0], sizes = [1, 8, 1, 8], strides = [1, 1, 1, 1]} : vector<1x8x6x8xf32> to vector<1x8x1x8xf32>
    %cst_32 = arith.constant dense<0.000000e+00> : vector<1x8xf32>
    %124 = vector.multi_reduction <add>, %121, %cst_32 [1, 2] : vector<1x8x6x8xf32> to vector<1x8xf32>
    %125 = vector.shape_cast %124 : vector<1x8xf32> to vector<1x1x1x8xf32>
    %cst_33 = arith.constant dense<0.000000e+00> : vector<1x8xf32>
    %126 = vector.multi_reduction <add>, %122, %cst_33 [1, 2] : vector<1x8x1x8xf32> to vector<1x8xf32>
    %127 = vector.shape_cast %126 : vector<1x8xf32> to vector<1x1x1x8xf32>
    %128 = arith.addf %125, %127 : vector<1x1x1x8xf32>
    %cst_34 = arith.constant dense<0.000000e+00> : vector<1x8xf32>
    %129 = vector.multi_reduction <add>, %123, %cst_34 [1, 2] : vector<1x8x1x8xf32> to vector<1x8xf32>
    %130 = vector.shape_cast %129 : vector<1x8xf32> to vector<1x1x1x8xf32>
    %131 = arith.addf %128, %130 : vector<1x1x1x8xf32>
    %cst_35 = arith.constant 6.400000e+01 : f32
    %132 = vector.broadcast %cst_35 : f32 to vector<1x1x1x8xf32>
    %133 = arith.divf %131, %132 : vector<1x1x1x8xf32>
    %134 = vector.broadcast %133 : vector<1x1x1x8xf32> to vector<1x8x6x8xf32>
    %135 = arith.subf %121, %134 : vector<1x8x6x8xf32>
    %136 = vector.broadcast %133 : vector<1x1x1x8xf32> to vector<1x8x1x8xf32>
    %137 = arith.subf %122, %136 : vector<1x8x1x8xf32>
    %138 = vector.broadcast %133 : vector<1x1x1x8xf32> to vector<1x8x1x8xf32>
    %139 = arith.subf %123, %138 : vector<1x8x1x8xf32>
    %140 = arith.mulf %135, %135 : vector<1x8x6x8xf32>
    %cst_36 = arith.constant dense<0.000000e+00> : vector<1x8xf32>
    %141 = vector.multi_reduction <add>, %140, %cst_36 [1, 2] : vector<1x8x6x8xf32> to vector<1x8xf32>
    %142 = vector.shape_cast %141 : vector<1x8xf32> to vector<1x1x1x8xf32>
    %143 = arith.mulf %137, %137 : vector<1x8x1x8xf32>
    %cst_37 = arith.constant dense<0.000000e+00> : vector<1x8xf32>
    %144 = vector.multi_reduction <add>, %143, %cst_37 [1, 2] : vector<1x8x1x8xf32> to vector<1x8xf32>
    %145 = vector.shape_cast %144 : vector<1x8xf32> to vector<1x1x1x8xf32>
    %146 = arith.addf %142, %145 : vector<1x1x1x8xf32>
    %147 = arith.mulf %139, %139 : vector<1x8x1x8xf32>
    %cst_38 = arith.constant dense<0.000000e+00> : vector<1x8xf32>
    %148 = vector.multi_reduction <add>, %147, %cst_38 [1, 2] : vector<1x8x1x8xf32> to vector<1x8xf32>
    %149 = vector.shape_cast %148 : vector<1x8xf32> to vector<1x1x1x8xf32>
    %150 = arith.addf %146, %149 : vector<1x1x1x8xf32>
    %cst_39 = arith.constant 6.400000e+01 : f32
    %151 = vector.broadcast %cst_39 : f32 to vector<1x1x1x8xf32>
    %152 = arith.divf %150, %151 : vector<1x1x1x8xf32>
    %cst_40 = arith.constant 9.99999974E-6 : f32
    %153 = vector.broadcast %cst_40 : f32 to vector<1x1x1x8xf32>
    %154 = arith.addf %152, %153 : vector<1x1x1x8xf32>
    %155 = math.rsqrt %154 : vector<1x1x1x8xf32>
    %c0_41 = arith.constant 0 : index
    %c0_42 = arith.constant 0 : index
    %156 = vector.load %arg10[%c0_41, %c0_42] : memref<1x8xf32, #tpu.memory_space<vmem>>, vector<1x8xf32>
    %157 = vector.shape_cast %156 : vector<1x8xf32> to vector<1x1x1x8xf32>
    %158 = arith.mulf %155, %157 : vector<1x1x1x8xf32>
    %159 = vector.broadcast %158 : vector<1x1x1x8xf32> to vector<1x8x6x8xf32>
    %160 = arith.mulf %135, %159 : vector<1x8x6x8xf32>
    %c0_43 = arith.constant 0 : index
    %c0_44 = arith.constant 0 : index
    %161 = vector.load %arg11[%c0_43, %c0_44] : memref<1x8xf32, #tpu.memory_space<vmem>>, vector<1x8xf32>
    %162 = vector.shape_cast %161 : vector<1x8xf32> to vector<1x1x1x8xf32>
    %163 = vector.broadcast %162 : vector<1x1x1x8xf32> to vector<1x8x6x8xf32>
    %164 = arith.addf %160, %163 : vector<1x8x6x8xf32>
    %cst_45 = arith.constant 0.000000e+00 : f32
    %165 = vector.broadcast %cst_45 : f32 to vector<1x1x10x8xf32>
    %cst_46 = arith.constant 0.000000e+00 : f32
    %166 = vector.broadcast %cst_46 : f32 to vector<1x10x1x8xf32>
    %c0_47 = arith.constant 0 : index
    %c0_48 = arith.constant 0 : index
    %c0_49 = arith.constant 0 : index
    %c0_50 = arith.constant 0 : index
    %167 = vector.load %arg17[%c0_47, %c0_48, %c0_49, %c0_50] : memref<1x10x10x8xf32, #tpu.memory_space<vmem>>, vector<1x1x10x8xf32>
    tpu.vector_store %arg17[%c0_47, %c0_48, %c0_49, %c0_50], %165 {strides = array<i32>} : memref<1x10x10x8xf32, #tpu.memory_space<vmem>>, vector<1x1x10x8xf32>,
    %c0_51 = arith.constant 0 : index
    %c9 = arith.constant 9 : index
    %c0_52 = arith.constant 0 : index
    %c0_53 = arith.constant 0 : index
    %168 = vector.load %arg17[%c0_51, %c9, %c0_52, %c0_53] : memref<1x10x10x8xf32, #tpu.memory_space<vmem>>, vector<1x1x10x8xf32>
    tpu.vector_store %arg17[%c0_51, %c9, %c0_52, %c0_53], %165 {strides = array<i32>} : memref<1x10x10x8xf32, #tpu.memory_space<vmem>>, vector<1x1x10x8xf32>,
    %c0_54 = arith.constant 0 : index
    %c0_55 = arith.constant 0 : index
    %c0_56 = arith.constant 0 : index
    %c0_57 = arith.constant 0 : index
    %169 = vector.load %arg17[%c0_54, %c0_55, %c0_56, %c0_57] : memref<1x10x10x8xf32, #tpu.memory_space<vmem>>, vector<1x10x1x8xf32>
    tpu.vector_store %arg17[%c0_54, %c0_55, %c0_56, %c0_57], %166 {strides = array<i32>} : memref<1x10x10x8xf32, #tpu.memory_space<vmem>>, vector<1x10x1x8xf32>,
    %c0_58 = arith.constant 0 : index
    %c0_59 = arith.constant 0 : index
    %c9_60 = arith.constant 9 : index
    %c0_61 = arith.constant 0 : index
    %170 = vector.load %arg17[%c0_58, %c0_59, %c9_60, %c0_61] : memref<1x10x10x8xf32, #tpu.memory_space<vmem>>, vector<1x10x1x8xf32>
    tpu.vector_store %arg17[%c0_58, %c0_59, %c9_60, %c0_61], %166 {strides = array<i32>} : memref<1x10x10x8xf32, #tpu.memory_space<vmem>>, vector<1x10x1x8xf32>,
    %171 = vector.extract_strided_slice %0 {offsets = [0, 0, 1, 0], sizes = [1, 8, 6, 8], strides = [1, 1, 1, 1]} : vector<1x8x8x8xf32> to vector<1x8x6x8xf32>
    %172 = arith.addf %164, %171 : vector<1x8x6x8xf32>
    %c0_62 = arith.constant 0 : index
    %c1 = arith.constant 1 : index
    %c2 = arith.constant 2 : index
    %c0_63 = arith.constant 0 : index
    %173 = vector.load %arg17[%c0_62, %c1, %c2, %c0_63] : memref<1x10x10x8xf32, #tpu.memory_space<vmem>>, vector<1x8x6x8xf32>
    tpu.vector_store %arg17[%c0_62, %c1, %c2, %c0_63], %172 {strides = array<i32>} : memref<1x10x10x8xf32, #tpu.memory_space<vmem>>, vector<1x8x6x8xf32>,
    %174 = vector.extract_strided_slice %164 {offsets = [0, 0, 1, 0], sizes = [1, 8, 1, 8], strides = [1, 1, 1, 1]} : vector<1x8x6x8xf32> to vector<1x8x1x8xf32>
    %175 = vector.extract_strided_slice %0 {offsets = [0, 0, 0, 0], sizes = [1, 8, 1, 8], strides = [1, 1, 1, 1]} : vector<1x8x8x8xf32> to vector<1x8x1x8xf32>
    %176 = arith.addf %174, %175 : vector<1x8x1x8xf32>
    %c0_64 = arith.constant 0 : index
    %c1_65 = arith.constant 1 : index
    %c1_66 = arith.constant 1 : index
    %c0_67 = arith.constant 0 : index
    %177 = vector.load %arg17[%c0_64, %c1_65, %c1_66, %c0_67] : memref<1x10x10x8xf32, #tpu.memory_space<vmem>>, vector<1x8x1x8xf32>
    tpu.vector_store %arg17[%c0_64, %c1_65, %c1_66, %c0_67], %176 {strides = array<i32>} : memref<1x10x10x8xf32, #tpu.memory_space<vmem>>, vector<1x8x1x8xf32>,
    %178 = vector.extract_strided_slice %164 {offsets = [0, 0, 4, 0], sizes = [1, 8, 1, 8], strides = [1, 1, 1, 1]} : vector<1x8x6x8xf32> to vector<1x8x1x8xf32>
    %179 = vector.extract_strided_slice %0 {offsets = [0, 0, 7, 0], sizes = [1, 8, 1, 8], strides = [1, 1, 1, 1]} : vector<1x8x8x8xf32> to vector<1x8x1x8xf32>
    %180 = arith.addf %178, %179 : vector<1x8x1x8xf32>
    %c0_68 = arith.constant 0 : index
    %c1_69 = arith.constant 1 : index
    %c8 = arith.constant 8 : index
    %c0_70 = arith.constant 0 : index
    %181 = vector.load %arg17[%c0_68, %c1_69, %c8, %c0_70] : memref<1x10x10x8xf32, #tpu.memory_space<vmem>>, vector<1x8x1x8xf32>
    tpu.vector_store %arg17[%c0_68, %c1_69, %c8, %c0_70], %180 {strides = array<i32>} : memref<1x10x10x8xf32, #tpu.memory_space<vmem>>, vector<1x8x1x8xf32>,
    %c0_71 = arith.constant 0 : index
    %c0_72 = arith.constant 0 : index
    %182 = vector.load %arg12[%c0_71, %c0_72] : memref<72x8xf32, #tpu.memory_space<vmem>>, vector<72x8xf32>
    %c0_73 = arith.constant 0 : index
    %c0_74 = arith.constant 0 : index
    %c0_75 = arith.constant 0 : index
    %c0_76 = arith.constant 0 : index
    %183 = vector.load %arg17[%c0_73, %c0_74, %c0_75, %c0_76] : memref<1x10x10x8xf32, #tpu.memory_space<vmem>>, vector<1x8x8x8xf32>
    %184 = vector.shape_cast %183 : vector<1x8x8x8xf32> to vector<64x8xf32>
    %185 = vector.extract_strided_slice %182 {offsets = [0, 0], sizes = [8, 8], strides = [1, 1]} : vector<72x8xf32> to vector<8x8xf32>
    %cst_77 = arith.constant dense<0.000000e+00> : vector<64x8xf32>
    %186 = tpu.matmul %184, %185, %cst_77 {dimension_numbers = #tpu.dot_dimension_numbers<[1], [0], [0], [1], [0, 0, 1, 1], [], []>} : vector<64x8xf32>, vector<8x8xf32>, vector<64x8xf32> -> vector<64x8xf32>
    %c0_78 = arith.constant 0 : index
    %c0_79 = arith.constant 0 : index
    %c1_80 = arith.constant 1 : index
    %c0_81 = arith.constant 0 : index
    %187 = vector.load %arg17[%c0_78, %c0_79, %c1_80, %c0_81] : memref<1x10x10x8xf32, #tpu.memory_space<vmem>>, vector<1x8x8x8xf32>
    %188 = vector.shape_cast %187 : vector<1x8x8x8xf32> to vector<64x8xf32>
    %189 = vector.extract_strided_slice %182 {offsets = [8, 0], sizes = [8, 8], strides = [1, 1]} : vector<72x8xf32> to vector<8x8xf32>
    %cst_82 = arith.constant dense<0.000000e+00> : vector<64x8xf32>
    %190 = tpu.matmul %188, %189, %cst_82 {dimension_numbers = #tpu.dot_dimension_numbers<[1], [0], [0], [1], [0, 0, 1, 1], [], []>} : vector<64x8xf32>, vector<8x8xf32>, vector<64x8xf32> -> vector<64x8xf32>
    %191 = arith.addf %186, %190 : vector<64x8xf32>
    %c0_83 = arith.constant 0 : index
    %c0_84 = arith.constant 0 : index
    %c2_85 = arith.constant 2 : index
    %c0_86 = arith.constant 0 : index
    %192 = vector.load %arg17[%c0_83, %c0_84, %c2_85, %c0_86] : memref<1x10x10x8xf32, #tpu.memory_space<vmem>>, vector<1x8x8x8xf32>
    %193 = vector.shape_cast %192 : vector<1x8x8x8xf32> to vector<64x8xf32>
    %194 = vector.extract_strided_slice %182 {offsets = [16, 0], sizes = [8, 8], strides = [1, 1]} : vector<72x8xf32> to vector<8x8xf32>
    %cst_87 = arith.constant dense<0.000000e+00> : vector<64x8xf32>
    %195 = tpu.matmul %193, %194, %cst_87 {dimension_numbers = #tpu.dot_dimension_numbers<[1], [0], [0], [1], [0, 0, 1, 1], [], []>} : vector<64x8xf32>, vector<8x8xf32>, vector<64x8xf32> -> vector<64x8xf32>
    %196 = arith.addf %191, %195 : vector<64x8xf32>
    %c0_88 = arith.constant 0 : index
    %c1_89 = arith.constant 1 : index
    %c0_90 = arith.constant 0 : index
    %c0_91 = arith.constant 0 : index
    %197 = vector.load %arg17[%c0_88, %c1_89, %c0_90, %c0_91] : memref<1x10x10x8xf32, #tpu.memory_space<vmem>>, vector<1x8x8x8xf32>
    %198 = vector.shape_cast %197 : vector<1x8x8x8xf32> to vector<64x8xf32>
    %199 = vector.extract_strided_slice %182 {offsets = [24, 0], sizes = [8, 8], strides = [1, 1]} : vector<72x8xf32> to vector<8x8xf32>
    %cst_92 = arith.constant dense<0.000000e+00> : vector<64x8xf32>
    %200 = tpu.matmul %198, %199, %cst_92 {dimension_numbers = #tpu.dot_dimension_numbers<[1], [0], [0], [1], [0, 0, 1, 1], [], []>} : vector<64x8xf32>, vector<8x8xf32>, vector<64x8xf32> -> vector<64x8xf32>
    %201 = arith.addf %196, %200 : vector<64x8xf32>
    %c0_93 = arith.constant 0 : index
    %c1_94 = arith.constant 1 : index
    %c1_95 = arith.constant 1 : index
    %c0_96 = arith.constant 0 : index
    %202 = vector.load %arg17[%c0_93, %c1_94, %c1_95, %c0_96] : memref<1x10x10x8xf32, #tpu.memory_space<vmem>>, vector<1x8x8x8xf32>
    %203 = vector.shape_cast %202 : vector<1x8x8x8xf32> to vector<64x8xf32>
    %204 = vector.extract_strided_slice %182 {offsets = [32, 0], sizes = [8, 8], strides = [1, 1]} : vector<72x8xf32> to vector<8x8xf32>
    %cst_97 = arith.constant dense<0.000000e+00> : vector<64x8xf32>
    %205 = tpu.matmul %203, %204, %cst_97 {dimension_numbers = #tpu.dot_dimension_numbers<[1], [0], [0], [1], [0, 0, 1, 1], [], []>} : vector<64x8xf32>, vector<8x8xf32>, vector<64x8xf32> -> vector<64x8xf32>
    %206 = arith.addf %201, %205 : vector<64x8xf32>
    %c0_98 = arith.constant 0 : index
    %c1_99 = arith.constant 1 : index
    %c2_100 = arith.constant 2 : index
    %c0_101 = arith.constant 0 : index
    %207 = vector.load %arg17[%c0_98, %c1_99, %c2_100, %c0_101] : memref<1x10x10x8xf32, #tpu.memory_space<vmem>>, vector<1x8x8x8xf32>
    %208 = vector.shape_cast %207 : vector<1x8x8x8xf32> to vector<64x8xf32>
    %209 = vector.extract_strided_slice %182 {offsets = [40, 0], sizes = [8, 8], strides = [1, 1]} : vector<72x8xf32> to vector<8x8xf32>
    %cst_102 = arith.constant dense<0.000000e+00> : vector<64x8xf32>
    %210 = tpu.matmul %208, %209, %cst_102 {dimension_numbers = #tpu.dot_dimension_numbers<[1], [0], [0], [1], [0, 0, 1, 1], [], []>} : vector<64x8xf32>, vector<8x8xf32>, vector<64x8xf32> -> vector<64x8xf32>
    %211 = arith.addf %206, %210 : vector<64x8xf32>
    %c0_103 = arith.constant 0 : index
    %c2_104 = arith.constant 2 : index
    %c0_105 = arith.constant 0 : index
    %c0_106 = arith.constant 0 : index
    %212 = vector.load %arg17[%c0_103, %c2_104, %c0_105, %c0_106] : memref<1x10x10x8xf32, #tpu.memory_space<vmem>>, vector<1x8x8x8xf32>
    %213 = vector.shape_cast %212 : vector<1x8x8x8xf32> to vector<64x8xf32>
    %214 = vector.extract_strided_slice %182 {offsets = [48, 0], sizes = [8, 8], strides = [1, 1]} : vector<72x8xf32> to vector<8x8xf32>
    %cst_107 = arith.constant dense<0.000000e+00> : vector<64x8xf32>
    %215 = tpu.matmul %213, %214, %cst_107 {dimension_numbers = #tpu.dot_dimension_numbers<[1], [0], [0], [1], [0, 0, 1, 1], [], []>} : vector<64x8xf32>, vector<8x8xf32>, vector<64x8xf32> -> vector<64x8xf32>
    %216 = arith.addf %211, %215 : vector<64x8xf32>
    %c0_108 = arith.constant 0 : index
    %c2_109 = arith.constant 2 : index
    %c1_110 = arith.constant 1 : index
    %c0_111 = arith.constant 0 : index
    %217 = vector.load %arg17[%c0_108, %c2_109, %c1_110, %c0_111] : memref<1x10x10x8xf32, #tpu.memory_space<vmem>>, vector<1x8x8x8xf32>
    %218 = vector.shape_cast %217 : vector<1x8x8x8xf32> to vector<64x8xf32>
    %219 = vector.extract_strided_slice %182 {offsets = [56, 0], sizes = [8, 8], strides = [1, 1]} : vector<72x8xf32> to vector<8x8xf32>
    %cst_112 = arith.constant dense<0.000000e+00> : vector<64x8xf32>
    %220 = tpu.matmul %218, %219, %cst_112 {dimension_numbers = #tpu.dot_dimension_numbers<[1], [0], [0], [1], [0, 0, 1, 1], [], []>} : vector<64x8xf32>, vector<8x8xf32>, vector<64x8xf32> -> vector<64x8xf32>
    %221 = arith.addf %216, %220 : vector<64x8xf32>
    %c0_113 = arith.constant 0 : index
    %c2_114 = arith.constant 2 : index
    %c2_115 = arith.constant 2 : index
    %c0_116 = arith.constant 0 : index
    %222 = vector.load %arg17[%c0_113, %c2_114, %c2_115, %c0_116] : memref<1x10x10x8xf32, #tpu.memory_space<vmem>>, vector<1x8x8x8xf32>
    %223 = vector.shape_cast %222 : vector<1x8x8x8xf32> to vector<64x8xf32>
    %224 = vector.extract_strided_slice %182 {offsets = [64, 0], sizes = [8, 8], strides = [1, 1]} : vector<72x8xf32> to vector<8x8xf32>
    %cst_117 = arith.constant dense<0.000000e+00> : vector<64x8xf32>
    %225 = tpu.matmul %223, %224, %cst_117 {dimension_numbers = #tpu.dot_dimension_numbers<[1], [0], [0], [1], [0, 0, 1, 1], [], []>} : vector<64x8xf32>, vector<8x8xf32>, vector<64x8xf32> -> vector<64x8xf32>
    %226 = arith.addf %221, %225 : vector<64x8xf32>
    %c0_118 = arith.constant 0 : index
    %c0_119 = arith.constant 0 : index
    %227 = vector.load %arg13[%c0_118, %c0_119] : memref<1x8xf32, #tpu.memory_space<vmem>>, vector<1x8xf32>
    %228 = vector.broadcast %227 : vector<1x8xf32> to vector<64x8xf32>
    %229 = arith.addf %226, %228 : vector<64x8xf32>
    %230 = vector.shape_cast %229 : vector<64x8xf32> to vector<1x64x8xf32>
    %cst_120 = arith.constant dense<0.000000e+00> : vector<1x8xf32>
    %231 = vector.multi_reduction <add>, %230, %cst_120 [1] : vector<1x64x8xf32> to vector<1x8xf32>
    %232 = vector.shape_cast %231 : vector<1x8xf32> to vector<1x1x8xf32>
    %cst_121 = arith.constant 6.400000e+01 : f32
    %233 = vector.broadcast %cst_121 : f32 to vector<1x1x8xf32>
    %234 = arith.divf %232, %233 : vector<1x1x8xf32>
    %235 = vector.broadcast %234 : vector<1x1x8xf32> to vector<1x64x8xf32>
    %236 = arith.subf %230, %235 : vector<1x64x8xf32>
    %237 = arith.mulf %236, %236 : vector<1x64x8xf32>
    %cst_122 = arith.constant dense<0.000000e+00> : vector<1x8xf32>
    %238 = vector.multi_reduction <add>, %237, %cst_122 [1] : vector<1x64x8xf32> to vector<1x8xf32>
    %239 = vector.shape_cast %238 : vector<1x8xf32> to vector<1x1x8xf32>
    %cst_123 = arith.constant 6.400000e+01 : f32
    %240 = vector.broadcast %cst_123 : f32 to vector<1x1x8xf32>
    %241 = arith.divf %239, %240 : vector<1x1x8xf32>
    %cst_124 = arith.constant 9.99999974E-6 : f32
    %242 = vector.broadcast %cst_124 : f32 to vector<1x1x8xf32>
    %243 = arith.addf %241, %242 : vector<1x1x8xf32>
    %244 = math.rsqrt %243 : vector<1x1x8xf32>
    %c0_125 = arith.constant 0 : index
    %c0_126 = arith.constant 0 : index
    %245 = vector.load %arg14[%c0_125, %c0_126] : memref<1x8xf32, #tpu.memory_space<vmem>>, vector<1x8xf32>
    %246 = vector.shape_cast %245 : vector<1x8xf32> to vector<1x1x8xf32>
    %247 = arith.mulf %244, %246 : vector<1x1x8xf32>
    %248 = vector.broadcast %247 : vector<1x1x8xf32> to vector<1x64x8xf32>
    %249 = arith.mulf %236, %248 : vector<1x64x8xf32>
    %c0_127 = arith.constant 0 : index
    %c0_128 = arith.constant 0 : index
    %250 = vector.load %arg15[%c0_127, %c0_128] : memref<1x8xf32, #tpu.memory_space<vmem>>, vector<1x8xf32>
    %251 = vector.shape_cast %250 : vector<1x8xf32> to vector<1x1x8xf32>
    %252 = vector.broadcast %251 : vector<1x1x8xf32> to vector<1x64x8xf32>
    %253 = arith.addf %249, %252 : vector<1x64x8xf32>
    %c0_129 = arith.constant 0 : index
    %254 = memref.load %arg1[%c0_129] : memref<1xf32, #tpu.memory_space<smem>>
    %cst_130 = arith.constant 0.000000e+00 : f32
    %255 = vector.broadcast %cst_130 : f32 to vector<1x64x8xf32>
    %256 = arith.cmpf ogt, %253, %255 : vector<1x64x8xf32>
    %257 = vector.broadcast %254 : f32 to vector<1x64x8xf32>
    %258 = arith.mulf %257, %253 : vector<1x64x8xf32>
    %259 = arith.select %256, %253, %258 : vector<1x64x8xi1>, vector<1x64x8xf32>
    %cst_131 = arith.constant dense<0.000000e+00> : vector<1x8xf32>
    %260 = vector.multi_reduction <add>, %259, %cst_131 [1] : vector<1x64x8xf32> to vector<1x8xf32>
    %cst_132 = arith.constant 6.400000e+01 : f32
    %261 = vector.broadcast %cst_132 : f32 to vector<1x8xf32>
    %262 = arith.divf %260, %261 : vector<1x8xf32>
    %263 = vector.shape_cast %262 : vector<1x8xf32> to vector<1x1x8xf32>
    %c0_133 = arith.constant 0 : index
    %c0_134 = arith.constant 0 : index
    %c0_135 = arith.constant 0 : index
    %264 = vector.load %arg16[%c0_133, %c0_134, %c0_135] : memref<1x1x8xf32, #tpu.memory_space<vmem>>, vector<1x1x8xf32>
    tpu.vector_store %arg16[%c0_133, %c0_134, %c0_135], %263 {strides = array<i32>} : memref<1x1x8xf32, #tpu.memory_space<vmem>>, vector<1x1x8xf32>,
    return
  }
  func.func @transform_0(%arg0: i32) -> i32 {
    %c0_i32 = arith.constant 0 : i32
    %c0_i32_0 = arith.constant 0 : i32
    return %c0_i32 : i32
  }
  func.func @transform_1(%arg0: i32) -> (i32, i32, i32, i32) {
    %c0_i32 = arith.constant 0 : i32
    %c0_i32_0 = arith.constant 0 : i32
    %c0_i32_1 = arith.constant 0 : i32
    %c0_i32_2 = arith.constant 0 : i32
    return %arg0, %c0_i32, %c0_i32_0, %c0_i32_1 : i32, i32, i32, i32
  }
  func.func @transform_2(%arg0: i32) -> (i32, i32) {
    %c0_i32 = arith.constant 0 : i32
    %c0_i32_0 = arith.constant 0 : i32
    %c0_i32_1 = arith.constant 0 : i32
    return %c0_i32, %c0_i32_0 : i32, i32
  }
  func.func @transform_3(%arg0: i32) -> (i32, i32) {
    %c0_i32 = arith.constant 0 : i32
    %c0_i32_0 = arith.constant 0 : i32
    %c0_i32_1 = arith.constant 0 : i32
    return %c0_i32, %c0_i32_0 : i32, i32
  }
  func.func @transform_4(%arg0: i32) -> (i32, i32) {
    %c0_i32 = arith.constant 0 : i32
    %c0_i32_0 = arith.constant 0 : i32
    %c0_i32_1 = arith.constant 0 : i32
    return %c0_i32, %c0_i32_0 : i32, i32
  }
  func.func @transform_5(%arg0: i32) -> (i32, i32) {
    %c0_i32 = arith.constant 0 : i32
    %c0_i32_0 = arith.constant 0 : i32
    %c0_i32_1 = arith.constant 0 : i32
    return %c0_i32, %c0_i32_0 : i32, i32
  }
  func.func @transform_6(%arg0: i32) -> (i32, i32) {
    %c0_i32 = arith.constant 0 : i32
    %c0_i32_0 = arith.constant 0 : i32
    %c0_i32_1 = arith.constant 0 : i32
    return %c0_i32, %c0_i32_0 : i32, i32
  }
  func.func @transform_7(%arg0: i32) -> (i32, i32) {
    %c0_i32 = arith.constant 0 : i32
    %c0_i32_0 = arith.constant 0 : i32
    %c0_i32_1 = arith.constant 0 : i32
    return %c0_i32, %c0_i32_0 : i32, i32
  }
  func.func @transform_8(%arg0: i32) -> (i32, i32) {
    %c0_i32 = arith.constant 0 : i32
    %c0_i32_0 = arith.constant 0 : i32
    %c0_i32_1 = arith.constant 0 : i32
    return %c0_i32, %c0_i32_0 : i32, i32
  }
  func.func @transform_9(%arg0: i32) -> (i32, i32) {
    %c0_i32 = arith.constant 0 : i32
    %c0_i32_0 = arith.constant 0 : i32
    %c0_i32_1 = arith.constant 0 : i32
    return %c0_i32, %c0_i32_0 : i32, i32
  }
  func.func @transform_10(%arg0: i32) -> (i32, i32) {
    %c0_i32 = arith.constant 0 : i32
    %c0_i32_0 = arith.constant 0 : i32
    %c0_i32_1 = arith.constant 0 : i32
    return %c0_i32, %c0_i32_0 : i32, i32
  }
  func.func @transform_11(%arg0: i32) -> (i32, i32) {
    %c0_i32 = arith.constant 0 : i32
    %c0_i32_0 = arith.constant 0 : i32
    %c0_i32_1 = arith.constant 0 : i32
    return %c0_i32, %c0_i32_0 : i32, i32
  }
  func.func @transform_12(%arg0: i32) -> (i32, i32) {
    %c0_i32 = arith.constant 0 : i32
    %c0_i32_0 = arith.constant 0 : i32
    %c0_i32_1 = arith.constant 0 : i32
    return %c0_i32, %c0_i32_0 : i32, i32
  }
  func.func @transform_13(%arg0: i32) -> (i32, i32) {
    %c0_i32 = arith.constant 0 : i32
    %c0_i32_0 = arith.constant 0 : i32
    %c0_i32_1 = arith.constant 0 : i32
    return %c0_i32, %c0_i32_0 : i32, i32
  }
  func.func @transform_14(%arg0: i32) -> (i32, i32) {
    %c0_i32 = arith.constant 0 : i32
    %c0_i32_0 = arith.constant 0 : i32
    %c0_i32_1 = arith.constant 0 : i32
    return %c0_i32, %c0_i32_0 : i32, i32
  }
  func.func @transform_15(%arg0: i32) -> (i32, i32, i32) {
    %c0_i32 = arith.constant 0 : i32
    %c0_i32_0 = arith.constant 0 : i32
    %c0_i32_1 = arith.constant 0 : i32
    return %arg0, %c0_i32, %c0_i32_0 : i32, i32, i32
  }
}

</mosaic_0001>

<llo_original>
// kernel: tpu_custom_call.1
$region0: #{tpu_custom_call.1}
  #allocation0 [shape = 'u32[]', space=smem, size = 0x4, offset = 0x4, fixed_abs, tag = 'smem constant byte address 0x4 - core index']
  #allocation1 [shape = 'u32[144,128]{1,0:T(1,128)}', space=vmem, size = 0x12000, scoped, tag = 'internal scratch']
  #allocation2 [shape = 'f32[1,10,10,8]{3,2,1,0:T(8,128)}', space=vmem, size = 0x14000, scoped, tag = 'scratch operand']
  #allocation3 [shape = 'f32[1]{0:T(128)S(6)}', space=smem, size = 0x200, scoped, tag = 'scoped memory for tpu_custom_call.1']
  %s0 = inlined_call_operand.<no memory space> [shape: f32[1], index: 0, kind: input, shape index: {}]
  %s1 = inlined_call_operand.hbm [shape: f32[2,8,8,8], index: 1, kind: input, shape index: {}]
  %s2 = inlined_call_operand.vmem [shape: f32[8,8], index: 2, kind: input, shape index: {}]
  %s3 = inlined_call_operand.vmem [shape: f32[1,8], index: 3, kind: input, shape index: {}]
  %s4 = inlined_call_operand.vmem [shape: f32[1,8], index: 4, kind: input, shape index: {}]
  %s5 = inlined_call_operand.vmem [shape: f32[9,8], index: 5, kind: input, shape index: {}]
  %s6 = inlined_call_operand.vmem [shape: f32[1,8], index: 6, kind: input, shape index: {}]
  %s7 = inlined_call_operand.vmem [shape: f32[1,8], index: 7, kind: input, shape index: {}]
  %s8 = inlined_call_operand.vmem [shape: f32[8,8], index: 8, kind: input, shape index: {}]
  %s9 = inlined_call_operand.vmem [shape: f32[1,8], index: 9, kind: input, shape index: {}]
  %s10 = inlined_call_operand.vmem [shape: f32[1,8], index: 10, kind: input, shape index: {}]
  %s11 = inlined_call_operand.vmem [shape: f32[72,8], index: 11, kind: input, shape index: {}]
  %s12 = inlined_call_operand.vmem [shape: f32[1,8], index: 12, kind: input, shape index: {}]
  %s13 = inlined_call_operand.vmem [shape: f32[1,8], index: 13, kind: input, shape index: {}]
  %s14 = inlined_call_operand.vmem [shape: f32[1,8], index: 14, kind: input, shape index: {}]
  %s15 = inlined_call_operand.hbm [shape: f32[2,1,8], index: 15, kind: output, shape index: {}]
  %s16 = sld [smem:[#allocation0]]
  $region97: #{tpu_custom_call.1} parent=0
    _
  %s18 = ssub.s32 1, %s16
  %s19 = scalar_select 0, %s18, %s16
  %20 = sst [smem:[#allocation3]] %s0
  $region1: #{tpu_custom_call.1} parent=0
    #allocation4 [shape = 'u8[65536]{0}', space=vmem, size = 0x10000, scoped, tag = 'input window, operand 1']
    #allocation5 [shape = 's32[2]{0}', space=sflag, size = 0x8, scoped, tag = 'scoped memory for tpu_custom_call.1']
    #allocation6 [shape = 's32[2]{0}', space=sflag, size = 0x8, scoped, tag = 'scoped memory for tpu_custom_call.1']
    #allocation7 [shape = 'u8[1024]{0}', space=vmem, size = 0x400, scoped, tag = 'output window, operand 0']
    %21 = vsyncpa [#allocation5], 0
    %s22 = scalar_lea.sflag [#allocation5], 1
    %23 = vsyncpa %s22, 0
    %24 = vsyncpa [#allocation6], 0
    %s25 = scalar_lea.sflag [#allocation6], 1
    %26 = vsyncpa %s25, 0
    loop: start=0, step=1, limit=4
    $region2: #{tpu_custom_call.1} parent=1 // loop_pre_header
      _
    $region3: #{tpu_custom_call.1} parent=1 // loop_header
      %s28 = sphi 0, %s32
      %p29 = scmp.ge.s32.totalorder %s28, 4
      %s36 = sphi 0, %s36
      %s38 = sphi 0, %s36
      %s39 = sphi 0, %s38
      %s53 = sphi 0, %s39
      %s59 = sphi 0, %s61
      %s62 = sphi 0, %s59
      %s63 = sphi 0, %s62
      %s79 = sphi 0, %s63
      %s83 = sphi 0, %s83
      %s85 = sphi 0, %s83
      %s86 = sphi 0, %s85
      %s100 = sphi 0, %s86
      %s104 = sphi 0, %s104
      %s106 = sphi 0, %s104
      %s107 = sphi 0, %s106
      %s121 = sphi 0, %s107
      %s125 = sphi 0, %s125
      %s127 = sphi 0, %s125
      %s128 = sphi 0, %s127
      %s142 = sphi 0, %s128
      %s146 = sphi 0, %s146
      %s148 = sphi 0, %s146
      %s149 = sphi 0, %s148
      %s163 = sphi 0, %s149
      %s167 = sphi 0, %s167
      %s169 = sphi 0, %s167
      %s170 = sphi 0, %s169
      %s184 = sphi 0, %s170
      %s188 = sphi 0, %s188
      %s190 = sphi 0, %s188
      %s191 = sphi 0, %s190
      %s205 = sphi 0, %s191
      %s209 = sphi 0, %s209
      %s211 = sphi 0, %s209
      %s212 = sphi 0, %s211
      %s226 = sphi 0, %s212
      %s230 = sphi 0, %s230
      %s232 = sphi 0, %s230
      %s233 = sphi 0, %s232
      %s247 = sphi 0, %s233
      %s251 = sphi 0, %s251
      %s253 = sphi 0, %s251
      %s254 = sphi 0, %s253
      %s268 = sphi 0, %s254
      %s272 = sphi 0, %s272
      %s274 = sphi 0, %s272
      %s275 = sphi 0, %s274
      %s289 = sphi 0, %s275
      %s293 = sphi 0, %s293
      %s295 = sphi 0, %s293
      %s296 = sphi 0, %s295
      %s310 = sphi 0, %s296
      %s314 = sphi 0, %s314
      %s316 = sphi 0, %s314
      %s317 = sphi 0, %s316
      %s331 = sphi 0, %s317
      %s335 = sphi 0, %s335
      %s337 = sphi 0, %s335
      %s338 = sphi 0, %s337
      %s352 = sphi 0, %s338
      %s358 = sphi 0, %s360
      %s361 = sphi 0, %s358
      %s362 = sphi 0, %s361
      %s378 = sphi 0, %s362
    $region4: #{tpu_custom_call.1} parent=1 // loop_header_branch
      %31 = sbr.rel (%p29) target = $region8
    $region5: #{tpu_custom_call.1} parent=1 // loop_body
      %s33 = ssub.s32 %s28, 1
      %s34 = ssub.s32 %s28, 2
      %s35 = sadd.s32 %s28, 1
      %s37 = sadd.s32 %s36, 1
      %p40 = scmp.eq.s32.totalorder %s28, 1
      %p41 = scmp.ne.s32.totalorder %s36, %s38
      %p42 = scmp.eq.s32.totalorder %s28, 0
      %p43 = por %p41, %p42
      %p44 = scmp.ne.s32.totalorder %s36, %s38
      %p45 = scmp.eq.s32.totalorder %s33, 1
      %p46 = por %p44, %p45
      %p47 = scmp.ne.s32.totalorder %s38, %s39
      %p48 = scmp.eq.s32.totalorder %s33, 0
      %p49 = por %p47, %p48
      %p50 = scmp.ne.s32.totalorder %s38, %s39
      %p51 = scmp.eq.s32.totalorder %s34, 1
      %p52 = por %p50, %p51
      %p54 = scmp.ne.s32.totalorder %s39, %s53
      %p55 = scmp.eq.s32.totalorder %s34, 0
      %p56 = por %p54, %p55
      %s57 = ssub.s32 %s28, %s35
      %p58 = scmp.eq.s32.totalorder %s57, 0
      %s60 = sadd.s32 %s59, 1
      %s61 = scalar_select %p58, %s59, %s60
      %p64 = pneg %p58
      %p65 = scmp.eq.s32.totalorder %s28, 1
      %p66 = por %p64, %p65
      %p67 = scmp.ne.s32.totalorder %s59, %s62
      %p68 = scmp.eq.s32.totalorder %s28, 0
      %p69 = por %p67, %p68
      %p70 = scmp.ne.s32.totalorder %s59, %s62
      %p71 = scmp.eq.s32.totalorder %s33, 1
      %p72 = por %p70, %p71
      %p73 = scmp.ne.s32.totalorder %s62, %s63
      %p74 = scmp.eq.s32.totalorder %s33, 0
      %p75 = por %p73, %p74
      %p76 = scmp.ne.s32.totalorder %s62, %s63
      %p77 = scmp.eq.s32.totalorder %s34, 1
      %p78 = por %p76, %p77
      %p80 = scmp.ne.s32.totalorder %s63, %s79
      %p81 = scmp.eq.s32.totalorder %s34, 0
      %p82 = por %p80, %p81
      %s84 = sadd.s32 %s83, 1
      %p87 = scmp.eq.s32.totalorder %s28, 1
      %p88 = scmp.ne.s32.totalorder %s83, %s85
      %p89 = scmp.eq.s32.totalorder %s28, 0
      %p90 = por %p88, %p89
      %p91 = scmp.ne.s32.totalorder %s83, %s85
      %p92 = scmp.eq.s32.totalorder %s33, 1
      %p93 = por %p91, %p92
      %p94 = scmp.ne.s32.totalorder %s85, %s86
      %p95 = scmp.eq.s32.totalorder %s33, 0
      %p96 = por %p94, %p95
      %p97 = scmp.ne.s32.totalorder %s85, %s86
      %p98 = scmp.eq.s32.totalorder %s34, 1
      %p99 = por %p97, %p98
      %p101 = scmp.ne.s32.totalorder %s86, %s100
      %p102 = scmp.eq.s32.totalorder %s34, 0
      %p103 = por %p101, %p102
      %s105 = sadd.s32 %s104, 1
      %p108 = scmp.eq.s32.totalorder %s28, 1
      %p109 = scmp.ne.s32.totalorder %s104, %s106
      %p110 = scmp.eq.s32.totalorder %s28, 0
      %p111 = por %p109, %p110
      %p112 = scmp.ne.s32.totalorder %s104, %s106
      %p113 = scmp.eq.s32.totalorder %s33, 1
      %p114 = por %p112, %p113
      %p115 = scmp.ne.s32.totalorder %s106, %s107
      %p116 = scmp.eq.s32.totalorder %s33, 0
      %p117 = por %p115, %p116
      %p118 = scmp.ne.s32.totalorder %s106, %s107
      %p119 = scmp.eq.s32.totalorder %s34, 1
      %p120 = por %p118, %p119
      %p122 = scmp.ne.s32.totalorder %s107, %s121
      %p123 = scmp.eq.s32.totalorder %s34, 0
      %p124 = por %p122, %p123
      %s126 = sadd.s32 %s125, 1
      %p129 = scmp.eq.s32.totalorder %s28, 1
      %p130 = scmp.ne.s32.totalorder %s125, %s127
      %p131 = scmp.eq.s32.totalorder %s28, 0
      %p132 = por %p130, %p131
      %p133 = scmp.ne.s32.totalorder %s125, %s127
      %p134 = scmp.eq.s32.totalorder %s33, 1
      %p135 = por %p133, %p134
      %p136 = scmp.ne.s32.totalorder %s127, %s128
      %p137 = scmp.eq.s32.totalorder %s33, 0
      %p138 = por %p136, %p137
      %p139 = scmp.ne.s32.totalorder %s127, %s128
      %p140 = scmp.eq.s32.totalorder %s34, 1
      %p141 = por %p139, %p140
      %p143 = scmp.ne.s32.totalorder %s128, %s142
      %p144 = scmp.eq.s32.totalorder %s34, 0
      %p145 = por %p143, %p144
      %s147 = sadd.s32 %s146, 1
      %p150 = scmp.eq.s32.totalorder %s28, 1
      %p151 = scmp.ne.s32.totalorder %s146, %s148
      %p152 = scmp.eq.s32.totalorder %s28, 0
      %p153 = por %p151, %p152
      %p154 = scmp.ne.s32.totalorder %s146, %s148
      %p155 = scmp.eq.s32.totalorder %s33, 1
      %p156 = por %p154, %p155
      %p157 = scmp.ne.s32.totalorder %s148, %s149
      %p158 = scmp.eq.s32.totalorder %s33, 0
      %p159 = por %p157, %p158
      %p160 = scmp.ne.s32.totalorder %s148, %s149
      %p161 = scmp.eq.s32.totalorder %s34, 1
      %p162 = por %p160, %p161
      %p164 = scmp.ne.s32.totalorder %s149, %s163
      %p165 = scmp.eq.s32.totalorder %s34, 0
      %p166 = por %p164, %p165
      %s168 = sadd.s32 %s167, 1
      %p171 = scmp.eq.s32.totalorder %s28, 1
      %p172 = scmp.ne.s32.totalorder %s167, %s169
      %p173 = scmp.eq.s32.totalorder %s28, 0
      %p174 = por %p172, %p173
      %p175 = scmp.ne.s32.totalorder %s167, %s169
      %p176 = scmp.eq.s32.totalorder %s33, 1
      %p177 = por %p175, %p176
      %p178 = scmp.ne.s32.totalorder %s169, %s170
      %p179 = scmp.eq.s32.totalorder %s33, 0
      %p180 = por %p178, %p179
      %p181 = scmp.ne.s32.totalorder %s169, %s170
      %p182 = scmp.eq.s32.totalorder %s34, 1
      %p183 = por %p181, %p182
      %p185 = scmp.ne.s32.totalorder %s170, %s184
      %p186 = scmp.eq.s32.totalorder %s34, 0
      %p187 = por %p185, %p186
      %s189 = sadd.s32 %s188, 1
      %p192 = scmp.eq.s32.totalorder %s28, 1
      %p193 = scmp.ne.s32.totalorder %s188, %s190
      %p194 = scmp.eq.s32.totalorder %s28, 0
      %p195 = por %p193, %p194
      %p196 = scmp.ne.s32.totalorder %s188, %s190
      %p197 = scmp.eq.s32.totalorder %s33, 1
      %p198 = por %p196, %p197
      %p199 = scmp.ne.s32.totalorder %s190, %s191
      %p200 = scmp.eq.s32.totalorder %s33, 0
      %p201 = por %p199, %p200
      %p202 = scmp.ne.s32.totalorder %s190, %s191
      %p203 = scmp.eq.s32.totalorder %s34, 1
      %p204 = por %p202, %p203
      %p206 = scmp.ne.s32.totalorder %s191, %s205
      %p207 = scmp.eq.s32.totalorder %s34, 0
      %p208 = por %p206, %p207
      %s210 = sadd.s32 %s209, 1
      %p213 = scmp.eq.s32.totalorder %s28, 1
      %p214 = scmp.ne.s32.totalorder %s209, %s211
      %p215 = scmp.eq.s32.totalorder %s28, 0
      %p216 = por %p214, %p215
      %p217 = scmp.ne.s32.totalorder %s209, %s211
      %p218 = scmp.eq.s32.totalorder %s33, 1
      %p219 = por %p217, %p218
      %p220 = scmp.ne.s32.totalorder %s211, %s212
      %p221 = scmp.eq.s32.totalorder %s33, 0
      %p222 = por %p220, %p221
      %p223 = scmp.ne.s32.totalorder %s211, %s212
      %p224 = scmp.eq.s32.totalorder %s34, 1
      %p225 = por %p223, %p224
      %p227 = scmp.ne.s32.totalorder %s212, %s226
      %p228 = scmp.eq.s32.totalorder %s34, 0
      %p229 = por %p227, %p228
      %s231 = sadd.s32 %s230, 1
      %p234 = scmp.eq.s32.totalorder %s28, 1
      %p235 = scmp.ne.s32.totalorder %s230, %s232
      %p236 = scmp.eq.s32.totalorder %s28, 0
      %p237 = por %p235, %p236
      %p238 = scmp.ne.s32.totalorder %s230, %s232
      %p239 = scmp.eq.s32.totalorder %s33, 1
      %p240 = por %p238, %p239
      %p241 = scmp.ne.s32.totalorder %s232, %s233
      %p242 = scmp.eq.s32.totalorder %s33, 0
      %p243 = por %p241, %p242
      %p244 = scmp.ne.s32.totalorder %s232, %s233
      %p245 = scmp.eq.s32.totalorder %s34, 1
      %p246 = por %p244, %p245
      %p248 = scmp.ne.s32.totalorder %s233, %s247
      %p249 = scmp.eq.s32.totalorder %s34, 0
      %p250 = por %p248, %p249
      %s252 = sadd.s32 %s251, 1
      %p255 = scmp.eq.s32.totalorder %s28, 1
      %p256 = scmp.ne.s32.totalorder %s251, %s253
      %p257 = scmp.eq.s32.totalorder %s28, 0
      %p258 = por %p256, %p257
      %p259 = scmp.ne.s32.totalorder %s251, %s253
      %p260 = scmp.eq.s32.totalorder %s33, 1
      %p261 = por %p259, %p260
      %p262 = scmp.ne.s32.totalorder %s253, %s254
      %p263 = scmp.eq.s32.totalorder %s33, 0
      %p264 = por %p262, %p263
      %p265 = scmp.ne.s32.totalorder %s253, %s254
      %p266 = scmp.eq.s32.totalorder %s34, 1
      %p267 = por %p265, %p266
      %p269 = scmp.ne.s32.totalorder %s254, %s268
      %p270 = scmp.eq.s32.totalorder %s34, 0
      %p271 = por %p269, %p270
      %s273 = sadd.s32 %s272, 1
      %p276 = scmp.eq.s32.totalorder %s28, 1
      %p277 = scmp.ne.s32.totalorder %s272, %s274
      %p278 = scmp.eq.s32.totalorder %s28, 0
      %p279 = por %p277, %p278
      %p280 = scmp.ne.s32.totalorder %s272, %s274
      %p281 = scmp.eq.s32.totalorder %s33, 1
      %p282 = por %p280, %p281
      %p283 = scmp.ne.s32.totalorder %s274, %s275
      %p284 = scmp.eq.s32.totalorder %s33, 0
      %p285 = por %p283, %p284
      %p286 = scmp.ne.s32.totalorder %s274, %s275
      %p287 = scmp.eq.s32.totalorder %s34, 1
      %p288 = por %p286, %p287
      %p290 = scmp.ne.s32.totalorder %s275, %s289
      %p291 = scmp.eq.s32.totalorder %s34, 0
      %p292 = por %p290, %p291
      %s294 = sadd.s32 %s293, 1
      %p297 = scmp.eq.s32.totalorder %s28, 1
      %p298 = scmp.ne.s32.totalorder %s293, %s295
      %p299 = scmp.eq.s32.totalorder %s28, 0
      %p300 = por %p298, %p299
      %p301 = scmp.ne.s32.totalorder %s293, %s295
      %p302 = scmp.eq.s32.totalorder %s33, 1
      %p303 = por %p301, %p302
      %p304 = scmp.ne.s32.totalorder %s295, %s296
      %p305 = scmp.eq.s32.totalorder %s33, 0
      %p306 = por %p304, %p305
      %p307 = scmp.ne.s32.totalorder %s295, %s296
      %p308 = scmp.eq.s32.totalorder %s34, 1
      %p309 = por %p307, %p308
      %p311 = scmp.ne.s32.totalorder %s296, %s310
      %p312 = scmp.eq.s32.totalorder %s34, 0
      %p313 = por %p311, %p312
      %s315 = sadd.s32 %s314, 1
      %p318 = scmp.eq.s32.totalorder %s28, 1
      %p319 = scmp.ne.s32.totalorder %s314, %s316
      %p320 = scmp.eq.s32.totalorder %s28, 0
      %p321 = por %p319, %p320
      %p322 = scmp.ne.s32.totalorder %s314, %s316
      %p323 = scmp.eq.s32.totalorder %s33, 1
      %p324 = por %p322, %p323
      %p325 = scmp.ne.s32.totalorder %s316, %s317
      %p326 = scmp.eq.s32.totalorder %s33, 0
      %p327 = por %p325, %p326
      %p328 = scmp.ne.s32.totalorder %s316, %s317
      %p329 = scmp.eq.s32.totalorder %s34, 1
      %p330 = por %p328, %p329
      %p332 = scmp.ne.s32.totalorder %s317, %s331
      %p333 = scmp.eq.s32.totalorder %s34, 0
      %p334 = por %p332, %p333
      %s336 = sadd.s32 %s335, 1
      %p339 = scmp.eq.s32.totalorder %s28, 1
      %p340 = scmp.ne.s32.totalorder %s335, %s337
      %p341 = scmp.eq.s32.totalorder %s28, 0
      %p342 = por %p340, %p341
      %p343 = scmp.ne.s32.totalorder %s335, %s337
      %p344 = scmp.eq.s32.totalorder %s33, 1
      %p345 = por %p343, %p344
      %p346 = scmp.ne.s32.totalorder %s337, %s338
      %p347 = scmp.eq.s32.totalorder %s33, 0
      %p348 = por %p346, %p347
      %p349 = scmp.ne.s32.totalorder %s337, %s338
      %p350 = scmp.eq.s32.totalorder %s34, 1
      %p351 = por %p349, %p350
      %p353 = scmp.ne.s32.totalorder %s338, %s352
      %p354 = scmp.eq.s32.totalorder %s34, 0
      %p355 = por %p353, %p354
      %s356 = ssub.s32 %s28, %s35
      %p357 = scmp.eq.s32.totalorder %s356, 0
      %s359 = sadd.s32 %s358, 1
      %s360 = scalar_select %p357, %s358, %s359
      %p363 = pneg %p357
      %p364 = scmp.eq.s32.totalorder %s28, 1
      %p365 = por %p363, %p364
      %p366 = scmp.ne.s32.totalorder %s358, %s361
      %p367 = scmp.eq.s32.totalorder %s28, 0
      %p368 = por %p366, %p367
      %p369 = scmp.ne.s32.totalorder %s358, %s361
      %p370 = scmp.eq.s32.totalorder %s33, 1
      %p371 = por %p369, %p370
      %p372 = scmp.ne.s32.totalorder %s361, %s362
      %p373 = scmp.eq.s32.totalorder %s33, 0
      %p374 = por %p372, %p373
      %p375 = scmp.ne.s32.totalorder %s361, %s362
      %p376 = scmp.eq.s32.totalorder %s34, 1
      %p377 = por %p375, %p376
      %p379 = scmp.ne.s32.totalorder %s362, %s378
      %p380 = scmp.eq.s32.totalorder %s34, 0
      %p381 = por %p379, %p380
      %p382 = scmp.le.s32.totalorder 1, %s28
      %p383 = scmp.lt.s32.totalorder %s28, 3
      %p384 = pnand %p382, %p383
      %p385 = pneg %p384
      // Predicated region
      $region9: #{tpu_custom_call.1} parent=5 // pred_check
        _
      $region10: #{tpu_custom_call.1} parent=5 // pred_check_branch
        %387 = sbr.rel (%p384) target = $region12
      $region11: #{tpu_custom_call.1} parent=5 // pred_region
        %s388 = ssub.s32 %s28, 1
        // Predicated region
        $region13: #{tpu_custom_call.1} parent=11 // pred_check
          %p389 = pneg %p49
        $region14: #{tpu_custom_call.1} parent=11 // pred_check_branch
          %391 = sbr.rel (%p389) target = $region16
        $region15: #{tpu_custom_call.1} parent=11 // pred_region
          _
        $region16: #{tpu_custom_call.1} parent=11 // pred_fallthru
          _
        // Predicated region
        $region17: #{tpu_custom_call.1} parent=11 // pred_check
          %p392 = pneg %p96
        $region18: #{tpu_custom_call.1} parent=11 // pred_check_branch
          %394 = sbr.rel (%p392) target = $region20
        $region19: #{tpu_custom_call.1} parent=11 // pred_region
          _
        $region20: #{tpu_custom_call.1} parent=11 // pred_fallthru
          _
        // Predicated region
        $region21: #{tpu_custom_call.1} parent=11 // pred_check
          %p395 = pneg %p117
        $region22: #{tpu_custom_call.1} parent=11 // pred_check_branch
          %397 = sbr.rel (%p395) target = $region24
        $region23: #{tpu_custom_call.1} parent=11 // pred_region
          _
        $region24: #{tpu_custom_call.1} parent=11 // pred_fallthru
          _
        // Predicated region
        $region25: #{tpu_custom_call.1} parent=11 // pred_check
          %p398 = pneg %p138
        $region26: #{tpu_custom_call.1} parent=11 // pred_check_branch
          %400 = sbr.rel (%p398) target = $region28
        $region27: #{tpu_custom_call.1} parent=11 // pred_region
          _
        $region28: #{tpu_custom_call.1} parent=11 // pred_fallthru
          _
        // Predicated region
        $region29: #{tpu_custom_call.1} parent=11 // pred_check
          %p401 = pneg %p159
        $region30: #{tpu_custom_call.1} parent=11 // pred_check_branch
          %403 = sbr.rel (%p401) target = $region32
        $region31: #{tpu_custom_call.1} parent=11 // pred_region
          _
        $region32: #{tpu_custom_call.1} parent=11 // pred_fallthru
          _
        // Predicated region
        $region33: #{tpu_custom_call.1} parent=11 // pred_check
          %p404 = pneg %p180
        $region34: #{tpu_custom_call.1} parent=11 // pred_check_branch
          %406 = sbr.rel (%p404) target = $region36
        $region35: #{tpu_custom_call.1} parent=11 // pred_region
          _
        $region36: #{tpu_custom_call.1} parent=11 // pred_fallthru
          _
        // Predicated region
        $region37: #{tpu_custom_call.1} parent=11 // pred_check
          %p407 = pneg %p201
        $region38: #{tpu_custom_call.1} parent=11 // pred_check_branch
          %409 = sbr.rel (%p407) target = $region40
        $region39: #{tpu_custom_call.1} parent=11 // pred_region
          _
        $region40: #{tpu_custom_call.1} parent=11 // pred_fallthru
          _
        // Predicated region
        $region41: #{tpu_custom_call.1} parent=11 // pred_check
          %p410 = pneg %p222
        $region42: #{tpu_custom_call.1} parent=11 // pred_check_branch
          %412 = sbr.rel (%p410) target = $region44
        $region43: #{tpu_custom_call.1} parent=11 // pred_region
          _
        $region44: #{tpu_custom_call.1} parent=11 // pred_fallthru
          _
        // Predicated region
        $region45: #{tpu_custom_call.1} parent=11 // pred_check
          %p413 = pneg %p243
        $region46: #{tpu_custom_call.1} parent=11 // pred_check_branch
          %415 = sbr.rel (%p413) target = $region48
        $region47: #{tpu_custom_call.1} parent=11 // pred_region
          _
        $region48: #{tpu_custom_call.1} parent=11 // pred_fallthru
          _
        // Predicated region
        $region49: #{tpu_custom_call.1} parent=11 // pred_check
          %p416 = pneg %p264
        $region50: #{tpu_custom_call.1} parent=11 // pred_check_branch
          %418 = sbr.rel (%p416) target = $region52
        $region51: #{tpu_custom_call.1} parent=11 // pred_region
          _
        $region52: #{tpu_custom_call.1} parent=11 // pred_fallthru
          _
        // Predicated region
        $region53: #{tpu_custom_call.1} parent=11 // pred_check
          %p419 = pneg %p285
        $region54: #{tpu_custom_call.1} parent=11 // pred_check_branch
          %421 = sbr.rel (%p419) target = $region56
        $region55: #{tpu_custom_call.1} parent=11 // pred_region
          _
        $region56: #{tpu_custom_call.1} parent=11 // pred_fallthru
          _
        // Predicated region
        $region57: #{tpu_custom_call.1} parent=11 // pred_check
          %p422 = pneg %p306
        $region58: #{tpu_custom_call.1} parent=11 // pred_check_branch
          %424 = sbr.rel (%p422) target = $region60
        $region59: #{tpu_custom_call.1} parent=11 // pred_region
          _
        $region60: #{tpu_custom_call.1} parent=11 // pred_fallthru
          _
        // Predicated region
        $region61: #{tpu_custom_call.1} parent=11 // pred_check
          %p425 = pneg %p327
        $region62: #{tpu_custom_call.1} parent=11 // pred_check_branch
          %427 = sbr.rel (%p425) target = $region64
        $region63: #{tpu_custom_call.1} parent=11 // pred_region
          _
        $region64: #{tpu_custom_call.1} parent=11 // pred_fallthru
          _
        // Predicated region
        $region65: #{tpu_custom_call.1} parent=11 // pred_check
          %p428 = pneg %p348
        $region66: #{tpu_custom_call.1} parent=11 // pred_check_branch
          %430 = sbr.rel (%p428) target = $region68
        $region67: #{tpu_custom_call.1} parent=11 // pred_region
          _
        $region68: #{tpu_custom_call.1} parent=11 // pred_fallthru
          _
      $region12: #{tpu_custom_call.1} parent=5 // pred_fallthru
        _
      %p431 = scmp.lt.s32.totalorder %s28, 2
      // Predicated region
      $region69: #{tpu_custom_call.1} parent=5 // pred_check
        %p432 = pneg %p431
      $region70: #{tpu_custom_call.1} parent=5 // pred_check_branch
        %434 = sbr.rel (%p432) target = $region72
      $region71: #{tpu_custom_call.1} parent=5 // pred_region
        // Predicated region
        $region73: #{tpu_custom_call.1} parent=71 // pred_check
          %p435 = pneg %p69
        $region74: #{tpu_custom_call.1} parent=71 // pred_check_branch
          %437 = sbr.rel (%p435) target = $region76
        $region75: #{tpu_custom_call.1} parent=71 // pred_region
          %s438 = sand.u32 %s59, 1
          %s439 = scalar_lea.sflag [#allocation5], %s438
          %s440 = sand.u32 %s59, 1
          %s441 = smul.addr %s440, 64
          %s442 = scalar_lea.vmem [#allocation4], %s441
          %s444 = ssub.s32 1024, 1024
          %445 = vsyncadd %s439, %s444
          %s446 = smul.addr %s28, 8
          %s447 = smul.addr %s446, 128
          %s448 = scalar_lea.hbm %s1, %s447
          %s449 = sshll.u32 %s442, 4
          %s450 = int_to_ptr.vmem [resolvable:$true] %s449
          %455 = dma.hbm_to_vmem [thread:$0]  %s448, 1024, %s450, %s439, 128, 128, 8
        $region76: #{tpu_custom_call.1} parent=71 // pred_fallthru
          _
      $region72: #{tpu_custom_call.1} parent=5 // pred_fallthru
        _
      %p456 = scmp.le.s32.totalorder 1, %s28
      %p457 = scmp.lt.s32.totalorder %s28, 3
      %p458 = pnand %p456, %p457
      %p459 = pneg %p458
      // Predicated region
      $region77: #{tpu_custom_call.1} parent=5 // pred_check
        _
      $region78: #{tpu_custom_call.1} parent=5 // pred_check_branch
        %461 = sbr.rel (%p458) target = $region80
      $region79: #{tpu_custom_call.1} parent=5 // pred_region
        %s462 = ssub.s32 %s28, 1
        %s463 = sand.u32 %s62, 1
        %s464 = scalar_lea.sflag [#allocation5], %s463
        %s465 = sand.u32 %s62, 1
        %s466 = smul.addr %s465, 64
        %s467 = scalar_lea.vmem [#allocation4], %s466
        // Predicated region
        $region81: #{tpu_custom_call.1} parent=79 // pred_check
          %p468 = pneg %p75
        $region82: #{tpu_custom_call.1} parent=79 // pred_check_branch
          %470 = sbr.rel (%p468) target = $region84
        $region83: #{tpu_custom_call.1} parent=79 // pred_region
          %471 = dma.done %s464, 1024
        $region84: #{tpu_custom_call.1} parent=79 // pred_fallthru
          _
        %p472 = pneg %p49
        %p473 = pneg %p46
        %s474 = sand.u32 %s62, 1
        %s475 = scalar_lea.sflag [#allocation5], %s474
        %s476 = sand.u32 %s62, 1
        %s477 = smul.addr %s476, 64
        %s478 = scalar_lea.vmem [#allocation4], %s477
        %p479 = pneg %p75
        %p480 = pneg %p72
        %p481 = pneg %p96
        %p482 = pneg %p93
        %p483 = pneg %p117
        %p484 = pneg %p114
        %p485 = pneg %p138
        %p486 = pneg %p135
        %p487 = pneg %p159
        %p488 = pneg %p156
        %p489 = pneg %p180
        %p490 = pneg %p177
        %p491 = pneg %p201
        %p492 = pneg %p198
        %p493 = pneg %p222
        %p494 = pneg %p219
        %p495 = pneg %p243
        %p496 = pneg %p240
        %p497 = pneg %p264
        %p498 = pneg %p261
        %p499 = pneg %p285
        %p500 = pneg %p282
        %p501 = pneg %p306
        %p502 = pneg %p303
        %p503 = pneg %p327
        %p504 = pneg %p324
        %p505 = pneg %p348
        %p506 = pneg %p345
        %p507 = pneg %p374
        %p508 = pneg %p371
        %s509 = sand.u32 %s361, 1
        %s510 = scalar_lea.sflag [#allocation6], %s509
        %s511 = sand.u32 %s361, 1
        %s512 = scalar_lea.vmem [#allocation7], %s511
        %v513 = vld [vmem:[%s467] sm:$0xff]
        %v514 = vld [vmem:[%s467 + $0x8] sm:$0xff]
        %v515 = vld [vmem:[%s467 + $0x10] sm:$0xff]
        %v516 = vld [vmem:[%s467 + $0x18] sm:$0xff]
        %v517 = vld [vmem:[%s467 + $0x20] sm:$0xff]
        %v518 = vld [vmem:[%s467 + $0x28] sm:$0xff]
        %v519 = vld [vmem:[%s467 + $0x30] sm:$0xff]
        %v520 = vld [vmem:[%s467 + $0x38] sm:$0xff]
        %v521 = vld [vmem:[%s2] sm:$0xff]
        %vm522 = vcmask 64512
        %v524 = vsel %vm522, %v513, 0
        %v527 = vsel %vm522, %v514, 0
        %v530 = vsel %vm522, %v515, 0
        %v533 = vsel %vm522, %v516, 0
        %v536 = vsel %vm522, %v517, 0
        %v539 = vsel %vm522, %v518, 0
        %v542 = vsel %vm522, %v519, 0
        %v545 = vsel %vm522, %v520, 0
        %547 = vmatprep.subr.mxu0 0.0
        %548 = vmatpush1.msra.mxu0 0.0
        %549 = vmatprep.subr.mxu0 0.0
        %550 = vmatpush1.msra.mxu0 0.0
        %551 = vmatprep.subr.mxu0 0.0
        %552 = vmatpush1.msra.mxu0 0.0
        %553 = vmatprep.subr.mxu0 0.0
        %554 = vmatpush1.msra.mxu0 0.0
        %555 = vmatprep.subr.mxu0 0.0
        %556 = vmatpush1.msra.mxu0 0.0
        %557 = vmatprep.subr.mxu0 0.0
        %558 = vmatpush1.msra.mxu0 0.0
        %559 = vmatprep.subr.mxu0 0.0
        %560 = vmatpush1.msra.mxu0 0.0
        %561 = vmatprep.subr.mxu0 0.0
        %562 = vmatpush1.msra.mxu0 0.0
        %563 = vmatprep.subr.mxu0 0.0
        %564 = vmatpush1.msra.mxu0 0.0
        %565 = vmatprep.subr.mxu0 0.0
        %566 = vmatpush1.msra.mxu0 0.0
        %567 = vmatprep.subr.mxu0 0.0
        %568 = vmatpush1.msra.mxu0 0.0
        %569 = vmatprep.subr.mxu0 0.0
        %570 = vmatpush1.msra.mxu0 0.0
        %571 = vmatprep.subr.mxu0 0.0
        %572 = vmatpush1.msra.mxu0 0.0
        %573 = vmatprep.subr.mxu0 0.0
        %574 = vmatpush1.msra.mxu0 0.0
        %575 = vmatprep.subr.mxu0 0.0
        %576 = vmatpush1.msra.mxu0 0.0
        %577 = vmatprep.subr.mxu0 0.0
        %578 = vmatpush1.msra.mxu0 %v521
        %579 = vmatprep.subr.mxu0 0.0
        %580 = vmatpush2.msra.mxu0 0.0
        %581 = vmatprep.subr.mxu0 0.0
        %582 = vmatpush2.msra.mxu0 0.0
        %583 = vmatprep.subr.mxu0 0.0
        %584 = vmatpush2.msra.mxu0 0.0
        %585 = vmatprep.subr.mxu0 0.0
        %586 = vmatpush2.msra.mxu0 0.0
        %587 = vmatprep.subr.mxu0 0.0
        %588 = vmatpush2.msra.mxu0 0.0
        %589 = vmatprep.subr.mxu0 0.0
        %590 = vmatpush2.msra.mxu0 0.0
        %591 = vmatprep.subr.mxu0 0.0
        %592 = vmatpush2.msra.mxu0 0.0
        %593 = vmatprep.subr.mxu0 0.0
        %594 = vmatpush2.msra.mxu0 0.0
        %595 = vmatprep.subr.mxu0 0.0
        %596 = vmatpush2.msra.mxu0 0.0
        %597 = vmatprep.subr.mxu0 0.0
        %598 = vmatpush2.msra.mxu0 0.0
        %599 = vmatprep.subr.mxu0 0.0
        %600 = vmatpush2.msra.mxu0 0.0
        %601 = vmatprep.subr.mxu0 0.0
        %602 = vmatpush2.msra.mxu0 0.0
        %603 = vmatprep.subr.mxu0 0.0
        %604 = vmatpush2.msra.mxu0 0.0
        %605 = vmatprep.subr.mxu0 0.0
        %606 = vmatpush2.msra.mxu0 0.0
        %607 = vmatprep.subr.mxu0 0.0
        %608 = vmatpush2.msra.mxu0 0.0
        %609 = vmatprep.subr.mxu0 0.0
        %610 = vmatpush2.msra.mxu0 0.0
        %611 = vmatprep.mubr.f32.mxu0 0.0
        %612 = vmatmul.mubr.f32.gmra.mxu0 %v524
        %v613 = vpop.f32.mrf.mxu0
        %v614 = vadd.f32 0.0, %v613
        %v615 = vpop.f32.mrf.mxu0
        %616 = vmatprep.mubr.f32.mxu0 0.0
        %617 = vmatmul.mubr.f32.gmra.mxu0 %v527
        %v618 = vpop.f32.mrf.mxu0
        %v619 = vadd.f32 0.0, %v618
        %v620 = vpop.f32.mrf.mxu0
        %621 = vmatprep.mubr.f32.mxu0 0.0
        %622 = vmatmul.mubr.f32.gmra.mxu0 %v530
        %v623 = vpop.f32.mrf.mxu0
        %v624 = vadd.f32 0.0, %v623
        %v625 = vpop.f32.mrf.mxu0
        %626 = vmatprep.mubr.f32.mxu0 0.0
        %627 = vmatmul.mubr.f32.gmra.mxu0 %v533
        %v628 = vpop.f32.mrf.mxu0
        %v629 = vadd.f32 0.0, %v628
        %v630 = vpop.f32.mrf.mxu0
        %631 = vmatprep.mubr.f32.mxu0 0.0
        %632 = vmatmul.mubr.f32.gmra.mxu0 %v536
        %v633 = vpop.f32.mrf.mxu0
        %v634 = vadd.f32 0.0, %v633
        %v635 = vpop.f32.mrf.mxu0
        %636 = vmatprep.mubr.f32.mxu0 0.0
        %637 = vmatmul.mubr.f32.gmra.mxu0 %v539
        %v638 = vpop.f32.mrf.mxu0
        %v639 = vadd.f32 0.0, %v638
        %v640 = vpop.f32.mrf.mxu0
        %641 = vmatprep.mubr.f32.mxu0 0.0
        %642 = vmatmul.mubr.f32.gmra.mxu0 %v542
        %v643 = vpop.f32.mrf.mxu0
        %v644 = vadd.f32 0.0, %v643
        %v645 = vpop.f32.mrf.mxu0
        %646 = vmatprep.mubr.f32.mxu0 0.0
        %647 = vmatmul.mubr.f32.gmra.mxu0 %v545
        %v648 = vpop.f32.mrf.mxu0
        %v649 = vadd.f32 0.0, %v648
        %v650 = vpop.f32.mrf.mxu0
        %651 = vdwg.mxu0
        %v652 = vsel %vm522, %v614, 0.0
        %v653 = vsel %vm522, %v619, 0.0
        %v654 = vadd.f32 %v652, %v653
        %v655 = vsel %vm522, %v624, 0.0
        %v656 = vadd.f32 %v654, %v655
        %v657 = vsel %vm522, %v629, 0.0
        %v658 = vadd.f32 %v656, %v657
        %v659 = vsel %vm522, %v634, 0.0
        %v660 = vadd.f32 %v658, %v659
        %v661 = vsel %vm522, %v639, 0.0
        %v662 = vadd.f32 %v660, %v661
        %v663 = vsel %vm522, %v644, 0.0
        %v664 = vadd.f32 %v662, %v663
        %v665 = vsel %vm522, %v649, 0.0
        %v666 = vadd.f32 %v664, %v665
        %v667 = vrot.slane %v666, 4
        %v668 = vadd.f32 %v666, %v667
        %v669 = vrot.slane %v668, 2
        %v670 = vadd.f32 %v668, %v669
        %v671 = vrot.slane %v670, 1
        %v672 = vadd.f32 %v670, %v671
        %v673 = vrcp.pop 64.0
        %v674 = vmul.f32 %v672, %v673
        %v675 = vsub.f32 %v614, %v674
        %v676 = vsub.f32 %v619, %v674
        %v677 = vsub.f32 %v624, %v674
        %v678 = vsub.f32 %v629, %v674
        %v679 = vsub.f32 %v634, %v674
        %v680 = vsub.f32 %v639, %v674
        %v681 = vsub.f32 %v644, %v674
        %v682 = vsub.f32 %v649, %v674
        %v683 = vmul.f32 %v675, %v675
        %v684 = vmul.f32 %v676, %v676
        %v685 = vmul.f32 %v677, %v677
        %v686 = vmul.f32 %v678, %v678
        %v687 = vmul.f32 %v679, %v679
        %v688 = vmul.f32 %v680, %v680
        %v689 = vmul.f32 %v681, %v681
        %v690 = vmul.f32 %v682, %v682
        %v691 = vsel %vm522, %v683, 0.0
        %v692 = vsel %vm522, %v684, 0.0
        %v693 = vadd.f32 %v691, %v692
        %v694 = vsel %vm522, %v685, 0.0
        %v695 = vadd.f32 %v693, %v694
        %v696 = vsel %vm522, %v686, 0.0
        %v697 = vadd.f32 %v695, %v696
        %v698 = vsel %vm522, %v687, 0.0
        %v699 = vadd.f32 %v697, %v698
        %v700 = vsel %vm522, %v688, 0.0
        %v701 = vadd.f32 %v699, %v700
        %v702 = vsel %vm522, %v689, 0.0
        %v703 = vadd.f32 %v701, %v702
        %v704 = vsel %vm522, %v690, 0.0
        %v705 = vadd.f32 %v703, %v704
        %v706 = vrot.slane %v705, 4
        %v707 = vadd.f32 %v705, %v706
        %v708 = vrot.slane %v707, 2
        %v709 = vadd.f32 %v707, %v708
        %v710 = vrot.slane %v709, 1
        %v711 = vadd.f32 %v709, %v710
        %v712 = vmul.f32 %v711, %v673
        %v713 = vadd.f32 %v712, 1e-05
        %v714 = vrsqrt.pop %v713
        %v715 = vld [vmem:[%s3] sm:$0x1]
        %v716 = vmul.f32 %v714, %v715
        %v717 = vlaneseq
        %v718 = vshrl.u32 %v717, 7
        %v719 = vsub.s32 0, %v718
        %v720 = vrot.slane %v716, %v719
        %v721 = vmul.f32 %v675, %v720
        %v722 = vmul.f32 %v676, %v720
        %v723 = vmul.f32 %v677, %v720
        %v724 = vmul.f32 %v678, %v720
        %v725 = vmul.f32 %v679, %v720
        %v726 = vmul.f32 %v680, %v720
        %v727 = vmul.f32 %v681, %v720
        %v728 = vmul.f32 %v682, %v720
        %v729 = vld [vmem:[%s4] sm:$0x1]
        %v731 = vlaneseq
        %v732 = vshrl.u32 %v731, 7
        %v733 = vsub.s32 0, %v732
        %v734 = vrot.slane %v729, %v733
        %v736 = vadd.f32 %v721, %v734
        %v737 = vadd.f32 %v722, %v734
        %v738 = vadd.f32 %v723, %v734
        %v739 = vadd.f32 %v724, %v734
        %v740 = vadd.f32 %v725, %v734
        %v741 = vadd.f32 %v726, %v734
        %v742 = vadd.f32 %v727, %v734
        %v743 = vadd.f32 %v728, %v734
        %v744 = vmax.f32 %v736, 0.0
        %v745 = vmax.f32 %v737, 0.0
        %v746 = vmax.f32 %v738, 0.0
        %v747 = vmax.f32 %v739, 0.0
        %v748 = vmax.f32 %v740, 0.0
        %v749 = vmax.f32 %v741, 0.0
        %v750 = vmax.f32 %v742, 0.0
        %v751 = vmax.f32 %v743, 0.0
        %v752 = vmin.f32 %v744, 6.0
        %v753 = vmin.f32 %v745, 6.0
        %v754 = vmin.f32 %v746, 6.0
        %v755 = vmin.f32 %v747, 6.0
        %v756 = vmin.f32 %v748, 6.0
        %v757 = vmin.f32 %v749, 6.0
        %v758 = vmin.f32 %v750, 6.0
        %v759 = vmin.f32 %v751, 6.0
        %v760 = vld [vmem:[%s5] sm:$0xff]
        %v761 = vld [vmem:[%s5 + $0x8] sm:$0x1]
        %v762 = vlaneseq
        %v763 = vshrl.u32 %v762, 7
        %v764 = vsub.s32 0, %v763
        %v765 = vrot.slane %v760, %v764
        %v766 = vmul.f32 %v752, %v765
        %v767 = vmul.f32 %v753, %v765
        %v768 = vmul.f32 %v754, %v765
        %v769 = vmul.f32 %v755, %v765
        %v770 = vmul.f32 %v756, %v765
        %v771 = vmul.f32 %v757, %v765
        %v772 = vlaneseq
        %v773 = vshrl.u32 %v772, 7
        %v774 = vsub.s32 1, %v773
        %v775 = vrot.slane %v760, %v774
        %v776 = vmul.f32 %v752, %v775
        %v777 = vmul.f32 %v753, %v775
        %v778 = vmul.f32 %v754, %v775
        %v779 = vmul.f32 %v755, %v775
        %v780 = vmul.f32 %v756, %v775
        %v781 = vmul.f32 %v757, %v775
        %v788 = vrot.slane %v776, 1
        %v789 = vrot.slane %v777, 1
        %v790 = vrot.slane %v778, 1
        %v791 = vrot.slane %v779, 1
        %v792 = vrot.slane %v780, 1
        %v793 = vrot.slane %v781, 1
        %v800 = vadd.f32 %v766, %v788
        %v801 = vadd.f32 %v767, %v789
        %v802 = vadd.f32 %v768, %v790
        %v803 = vadd.f32 %v769, %v791
        %v804 = vadd.f32 %v770, %v792
        %v805 = vadd.f32 %v771, %v793
        %v806 = vlaneseq
        %v807 = vshrl.u32 %v806, 7
        %v808 = vsub.s32 2, %v807
        %v809 = vrot.slane %v760, %v808
        %v810 = vmul.f32 %v752, %v809
        %v811 = vmul.f32 %v753, %v809
        %v812 = vmul.f32 %v754, %v809
        %v813 = vmul.f32 %v755, %v809
        %v814 = vmul.f32 %v756, %v809
        %v815 = vmul.f32 %v757, %v809
        %v822 = vrot.slane %v810, 2
        %v823 = vrot.slane %v811, 2
        %v824 = vrot.slane %v812, 2
        %v825 = vrot.slane %v813, 2
        %v826 = vrot.slane %v814, 2
        %v827 = vrot.slane %v815, 2
        %v834 = vadd.f32 %v800, %v822
        %v835 = vadd.f32 %v801, %v823
        %v836 = vadd.f32 %v802, %v824
        %v837 = vadd.f32 %v803, %v825
        %v838 = vadd.f32 %v804, %v826
        %v839 = vadd.f32 %v805, %v827
        %v840 = vlaneseq
        %v841 = vshrl.u32 %v840, 7
        %v842 = vsub.s32 3, %v841
        %v843 = vrot.slane %v760, %v842
        %v844 = vmul.f32 %v753, %v843
        %v845 = vmul.f32 %v754, %v843
        %v846 = vmul.f32 %v755, %v843
        %v847 = vmul.f32 %v756, %v843
        %v848 = vmul.f32 %v757, %v843
        %v849 = vmul.f32 %v758, %v843
        %v850 = vadd.f32 %v834, %v844
        %v851 = vadd.f32 %v835, %v845
        %v852 = vadd.f32 %v836, %v846
        %v853 = vadd.f32 %v837, %v847
        %v854 = vadd.f32 %v838, %v848
        %v855 = vadd.f32 %v839, %v849
        %v856 = vlaneseq
        %v857 = vshrl.u32 %v856, 7
        %v858 = vsub.s32 4, %v857
        %v859 = vrot.slane %v760, %v858
        %v860 = vmul.f32 %v753, %v859
        %v861 = vmul.f32 %v754, %v859
        %v862 = vmul.f32 %v755, %v859
        %v863 = vmul.f32 %v756, %v859
        %v864 = vmul.f32 %v757, %v859
        %v865 = vmul.f32 %v758, %v859
        %v872 = vrot.slane %v860, 1
        %v873 = vrot.slane %v861, 1
        %v874 = vrot.slane %v862, 1
        %v875 = vrot.slane %v863, 1
        %v876 = vrot.slane %v864, 1
        %v877 = vrot.slane %v865, 1
        %v884 = vadd.f32 %v850, %v872
        %v885 = vadd.f32 %v851, %v873
        %v886 = vadd.f32 %v852, %v874
        %v887 = vadd.f32 %v853, %v875
        %v888 = vadd.f32 %v854, %v876
        %v889 = vadd.f32 %v855, %v877
        %v890 = vlaneseq
        %v891 = vshrl.u32 %v890, 7
        %v892 = vsub.s32 5, %v891
        %v893 = vrot.slane %v760, %v892
        %v894 = vmul.f32 %v753, %v893
        %v895 = vmul.f32 %v754, %v893
        %v896 = vmul.f32 %v755, %v893
        %v897 = vmul.f32 %v756, %v893
        %v898 = vmul.f32 %v757, %v893
        %v899 = vmul.f32 %v758, %v893
        %v906 = vrot.slane %v894, 2
        %v907 = vrot.slane %v895, 2
        %v908 = vrot.slane %v896, 2
        %v909 = vrot.slane %v897, 2
        %v910 = vrot.slane %v898, 2
        %v911 = vrot.slane %v899, 2
        %v918 = vadd.f32 %v884, %v906
        %v919 = vadd.f32 %v885, %v907
        %v920 = vadd.f32 %v886, %v908
        %v921 = vadd.f32 %v887, %v909
        %v922 = vadd.f32 %v888, %v910
        %v923 = vadd.f32 %v889, %v911
        %v924 = vlaneseq
        %v925 = vshrl.u32 %v924, 7
        %v926 = vsub.s32 6, %v925
        %v927 = vrot.slane %v760, %v926
        %v928 = vmul.f32 %v754, %v927
        %v929 = vmul.f32 %v755, %v927
        %v930 = vmul.f32 %v756, %v927
        %v931 = vmul.f32 %v757, %v927
        %v932 = vmul.f32 %v758, %v927
        %v933 = vmul.f32 %v759, %v927
        %v934 = vadd.f32 %v918, %v928
        %v935 = vadd.f32 %v919, %v929
        %v936 = vadd.f32 %v920, %v930
        %v937 = vadd.f32 %v921, %v931
        %v938 = vadd.f32 %v922, %v932
        %v939 = vadd.f32 %v923, %v933
        %v940 = vlaneseq
        %v941 = vshrl.u32 %v940, 7
        %v942 = vsub.s32 7, %v941
        %v943 = vrot.slane %v760, %v942
        %v944 = vmul.f32 %v754, %v943
        %v945 = vmul.f32 %v755, %v943
        %v946 = vmul.f32 %v756, %v943
        %v947 = vmul.f32 %v757, %v943
        %v948 = vmul.f32 %v758, %v943
        %v949 = vmul.f32 %v759, %v943
        %v956 = vrot.slane %v944, 1
        %v957 = vrot.slane %v945, 1
        %v958 = vrot.slane %v946, 1
        %v959 = vrot.slane %v947, 1
        %v960 = vrot.slane %v948, 1
        %v961 = vrot.slane %v949, 1
        %v968 = vadd.f32 %v934, %v956
        %v969 = vadd.f32 %v935, %v957
        %v970 = vadd.f32 %v936, %v958
        %v971 = vadd.f32 %v937, %v959
        %v972 = vadd.f32 %v938, %v960
        %v973 = vadd.f32 %v939, %v961
        %v974 = vlaneseq
        %v975 = vshrl.u32 %v974, 7
        %v976 = vsub.s32 0, %v975
        %v977 = vrot.slane %v761, %v976
        %v978 = vmul.f32 %v754, %v977
        %v979 = vmul.f32 %v755, %v977
        %v980 = vmul.f32 %v756, %v977
        %v981 = vmul.f32 %v757, %v977
        %v982 = vmul.f32 %v758, %v977
        %v983 = vmul.f32 %v759, %v977
        %v990 = vrot.slane %v978, 2
        %v991 = vrot.slane %v979, 2
        %v992 = vrot.slane %v980, 2
        %v993 = vrot.slane %v981, 2
        %v994 = vrot.slane %v982, 2
        %v995 = vrot.slane %v983, 2
        %v1002 = vadd.f32 %v968, %v990
        %v1003 = vadd.f32 %v969, %v991
        %v1004 = vadd.f32 %v970, %v992
        %v1005 = vadd.f32 %v971, %v993
        %v1006 = vadd.f32 %v972, %v994
        %v1007 = vadd.f32 %v973, %v995
        %v1014 = vcombine.high %v1002, %v1002
        %v1016 = vunpack.c.l.s4 1983009808
        %v1017 = vunpack.c.0.s8 %v1016
        %v1018 = vlaneseq
        %v1019 = vshrl.u32 %v1018, 7
        %v1020 = vsub.s32 %v1017, %v1019
        %v1021 = vrot.slane %v1002, %v1020
        %v1023 = vunpack.c.l.s4 1983009808
        %v1024 = vunpack.c.0.s8 %v1023
        %v1025 = vlaneseq
        %v1026 = vshrl.u32 %v1025, 7
        %v1027 = vsub.s32 %v1024, %v1026
        %v1028 = vrot.slane %v1014, %v1027
        %v1029 = vcombine.high %v1021, %v1021
        %v1030 = vcombine.high %v1003, %v1003
        %v1032 = vunpack.c.l.s4 1983009808
        %v1033 = vunpack.c.0.s8 %v1032
        %v1034 = vlaneseq
        %v1035 = vshrl.u32 %v1034, 7
        %v1036 = vsub.s32 %v1033, %v1035
        %v1037 = vrot.slane %v1003, %v1036
        %v1039 = vunpack.c.l.s4 1983009808
        %v1040 = vunpack.c.0.s8 %v1039
        %v1041 = vlaneseq
        %v1042 = vshrl.u32 %v1041, 7
        %v1043 = vsub.s32 %v1040, %v1042
        %v1044 = vrot.slane %v1030, %v1043
        %v1045 = vcombine.high %v1037, %v1037
        %v1046 = vcombine.high %v1004, %v1004
        %v1048 = vunpack.c.l.s4 1983009808
        %v1049 = vunpack.c.0.s8 %v1048
        %v1050 = vlaneseq
        %v1051 = vshrl.u32 %v1050, 7
        %v1052 = vsub.s32 %v1049, %v1051
        %v1053 = vrot.slane %v1004, %v1052
        %v1055 = vunpack.c.l.s4 1983009808
        %v1056 = vunpack.c.0.s8 %v1055
        %v1057 = vlaneseq
        %v1058 = vshrl.u32 %v1057, 7
        %v1059 = vsub.s32 %v1056, %v1058
        %v1060 = vrot.slane %v1046, %v1059
        %v1061 = vcombine.high %v1053, %v1053
        %v1062 = vcombine.high %v1005, %v1005
        %v1064 = vunpack.c.l.s4 1983009808
        %v1065 = vunpack.c.0.s8 %v1064
        %v1066 = vlaneseq
        %v1067 = vshrl.u32 %v1066, 7
        %v1068 = vsub.s32 %v1065, %v1067
        %v1069 = vrot.slane %v1005, %v1068
        %v1071 = vunpack.c.l.s4 1983009808
        %v1072 = vunpack.c.0.s8 %v1071
        %v1073 = vlaneseq
        %v1074 = vshrl.u32 %v1073, 7
        %v1075 = vsub.s32 %v1072, %v1074
        %v1076 = vrot.slane %v1062, %v1075
        %v1077 = vcombine.high %v1069, %v1069
        %v1078 = vcombine.high %v1006, %v1006
        %v1080 = vunpack.c.l.s4 1983009808
        %v1081 = vunpack.c.0.s8 %v1080
        %v1082 = vlaneseq
        %v1083 = vshrl.u32 %v1082, 7
        %v1084 = vsub.s32 %v1081, %v1083
        %v1085 = vrot.slane %v1006, %v1084
        %v1087 = vunpack.c.l.s4 1983009808
        %v1088 = vunpack.c.0.s8 %v1087
        %v1089 = vlaneseq
        %v1090 = vshrl.u32 %v1089, 7
        %v1091 = vsub.s32 %v1088, %v1090
        %v1092 = vrot.slane %v1078, %v1091
        %v1093 = vcombine.high %v1085, %v1085
        %v1094 = vcombine.high %v1007, %v1007
        %v1096 = vunpack.c.l.s4 1983009808
        %v1097 = vunpack.c.0.s8 %v1096
        %v1098 = vlaneseq
        %v1099 = vshrl.u32 %v1098, 7
        %v1100 = vsub.s32 %v1097, %v1099
        %v1101 = vrot.slane %v1007, %v1100
        %v1103 = vunpack.c.l.s4 1983009808
        %v1104 = vunpack.c.0.s8 %v1103
        %v1105 = vlaneseq
        %v1106 = vshrl.u32 %v1105, 7
        %v1107 = vsub.s32 %v1104, %v1106
        %v1108 = vrot.slane %v1094, %v1107
        %v1109 = vcombine.high %v1101, %v1101
        %v1128 = vcombine.low %v1021, %v1029
        %v1129 = vcombine.low %v1028, %v1037
        %v1131 = vunpack.c.l.s4 1983009808
        %v1132 = vunpack.c.0.s8 %v1131
        %v1133 = vlaneseq
        %v1134 = vshrl.u32 %v1133, 7
        %v1135 = vsub.s32 %v1132, %v1134
        %v1136 = vrot.slane %v1128, %v1135
        %v1138 = vunpack.c.l.s4 1983009808
        %v1139 = vunpack.c.0.s8 %v1138
        %v1140 = vlaneseq
        %v1141 = vshrl.u32 %v1140, 7
        %v1142 = vsub.s32 %v1139, %v1141
        %v1143 = vrot.slane %v1129, %v1142
        %v1144 = vcombine.low %v1136, %v1143
        %v1145 = vcombine.low %v1045, %v1044
        %v1146 = vcombine.low %v1053, %v1061
        %v1148 = vunpack.c.l.s4 1983009808
        %v1149 = vunpack.c.0.s8 %v1148
        %v1150 = vlaneseq
        %v1151 = vshrl.u32 %v1150, 7
        %v1152 = vsub.s32 %v1149, %v1151
        %v1153 = vrot.slane %v1145, %v1152
        %v1155 = vunpack.c.l.s4 1983009808
        %v1156 = vunpack.c.0.s8 %v1155
        %v1157 = vlaneseq
        %v1158 = vshrl.u32 %v1157, 7
        %v1159 = vsub.s32 %v1156, %v1158
        %v1160 = vrot.slane %v1146, %v1159
        %v1161 = vcombine.low %v1153, %v1160
        %v1162 = vcombine.low %v1060, %v1069
        %v1163 = vcombine.low %v1077, %v1076
        %v1165 = vunpack.c.l.s4 1983009808
        %v1166 = vunpack.c.0.s8 %v1165
        %v1167 = vlaneseq
        %v1168 = vshrl.u32 %v1167, 7
        %v1169 = vsub.s32 %v1166, %v1168
        %v1170 = vrot.slane %v1162, %v1169
        %v1172 = vunpack.c.l.s4 1983009808
        %v1173 = vunpack.c.0.s8 %v1172
        %v1174 = vlaneseq
        %v1175 = vshrl.u32 %v1174, 7
        %v1176 = vsub.s32 %v1173, %v1175
        %v1177 = vrot.slane %v1163, %v1176
        %v1178 = vcombine.low %v1170, %v1177
        %v1179 = vcombine.low %v1085, %v1093
        %v1180 = vcombine.low %v1092, %v1101
        %v1182 = vunpack.c.l.s4 1983009808
        %v1183 = vunpack.c.0.s8 %v1182
        %v1184 = vlaneseq
        %v1185 = vshrl.u32 %v1184, 7
        %v1186 = vsub.s32 %v1183, %v1185
        %v1187 = vrot.slane %v1179, %v1186
        %v1189 = vunpack.c.l.s4 1983009808
        %v1190 = vunpack.c.0.s8 %v1189
        %v1191 = vlaneseq
        %v1192 = vshrl.u32 %v1191, 7
        %v1193 = vsub.s32 %v1190, %v1192
        %v1194 = vrot.slane %v1180, %v1193
        %v1195 = vcombine.low %v1187, %v1194
        %v1196 = vcombine.low %v1109, %v1108
        %v1198 = vunpack.c.l.s4 1983009808
        %v1199 = vunpack.c.0.s8 %v1198
        %v1200 = vlaneseq
        %v1201 = vshrl.u32 %v1200, 7
        %v1202 = vsub.s32 %v1199, %v1201
        %v1203 = vrot.slane %v1196, %v1202
        %v1209 = vsel %vm522, %v1144, 0.0
        %v1210 = vsel %vm522, %v1161, 0.0
        %v1211 = vadd.f32 %v1209, %v1210
        %v1212 = vsel %vm522, %v1178, 0.0
        %v1213 = vadd.f32 %v1211, %v1212
        %v1214 = vsel %vm522, %v1195, 0.0
        %v1215 = vadd.f32 %v1213, %v1214
        %vm1216 = vcmask 60416
        %v1217 = vsel %vm1216, %v1203, 0.0
        %v1218 = vadd.f32 %v1215, %v1217
        %v1219 = vrot.slane %v1218, 4
        %v1220 = vadd.f32 %v1218, %v1219
        %v1221 = vrot.slane %v1220, 2
        %v1222 = vadd.f32 %v1220, %v1221
        %v1223 = vrot.slane %v1222, 1
        %v1224 = vadd.f32 %v1222, %v1223
        %v1225 = vrcp.pop 36.0
        %v1226 = vmul.f32 %v1224, %v1225
        %v1228 = vcombine.high %v1226, %v1226
        %v1230 = vunpack.c.l.s4 1983009808
        %v1231 = vunpack.c.0.s8 %v1230
        %v1232 = vlaneseq
        %v1233 = vshrl.u32 %v1232, 7
        %v1234 = vsub.s32 %v1231, %v1233
        %v1235 = vrot.slane %v1226, %v1234
        %v1237 = vunpack.c.l.s4 1983009808
        %v1238 = vunpack.c.0.s8 %v1237
        %v1239 = vlaneseq
        %v1240 = vshrl.u32 %v1239, 7
        %v1241 = vsub.s32 %v1238, %v1240
        %v1242 = vrot.slane %v1228, %v1241
        %v1243 = vcombine.high %v1235, %v1235
        %v1244 = vcombine.high %v1242, %v1242
        %v1249 = vsub.f32 %v1021, %v1235
        %v1250 = vsub.f32 %v1029, %v1243
        %v1251 = vsub.f32 %v1028, %v1242
        %v1252 = vsub.f32 %v1037, %v1244
        %v1253 = vsub.f32 %v1045, %v1235
        %v1254 = vsub.f32 %v1044, %v1243
        %v1255 = vsub.f32 %v1053, %v1242
        %v1256 = vsub.f32 %v1061, %v1244
        %v1257 = vsub.f32 %v1060, %v1235
        %v1258 = vsub.f32 %v1069, %v1243
        %v1259 = vsub.f32 %v1077, %v1242
        %v1260 = vsub.f32 %v1076, %v1244
        %v1261 = vsub.f32 %v1085, %v1235
        %v1262 = vsub.f32 %v1093, %v1243
        %v1263 = vsub.f32 %v1092, %v1242
        %v1264 = vsub.f32 %v1101, %v1244
        %v1265 = vsub.f32 %v1109, %v1235
        %v1266 = vsub.f32 %v1108, %v1243
        %v1267 = vmul.f32 %v1249, %v1249
        %v1268 = vmul.f32 %v1250, %v1250
        %v1269 = vmul.f32 %v1251, %v1251
        %v1270 = vmul.f32 %v1252, %v1252
        %v1271 = vmul.f32 %v1253, %v1253
        %v1272 = vmul.f32 %v1254, %v1254
        %v1273 = vmul.f32 %v1255, %v1255
        %v1274 = vmul.f32 %v1256, %v1256
        %v1275 = vmul.f32 %v1257, %v1257
        %v1276 = vmul.f32 %v1258, %v1258
        %v1277 = vmul.f32 %v1259, %v1259
        %v1278 = vmul.f32 %v1260, %v1260
        %v1279 = vmul.f32 %v1261, %v1261
        %v1280 = vmul.f32 %v1262, %v1262
        %v1281 = vmul.f32 %v1263, %v1263
        %v1282 = vmul.f32 %v1264, %v1264
        %v1283 = vmul.f32 %v1265, %v1265
        %v1284 = vmul.f32 %v1266, %v1266
        %v1303 = vcombine.low %v1267, %v1268
        %v1304 = vcombine.low %v1269, %v1270
        %v1306 = vunpack.c.l.s4 1983009808
        %v1307 = vunpack.c.0.s8 %v1306
        %v1308 = vlaneseq
        %v1309 = vshrl.u32 %v1308, 7
        %v1310 = vsub.s32 %v1307, %v1309
        %v1311 = vrot.slane %v1303, %v1310
        %v1313 = vunpack.c.l.s4 1983009808
        %v1314 = vunpack.c.0.s8 %v1313
        %v1315 = vlaneseq
        %v1316 = vshrl.u32 %v1315, 7
        %v1317 = vsub.s32 %v1314, %v1316
        %v1318 = vrot.slane %v1304, %v1317
        %v1319 = vcombine.low %v1311, %v1318
        %v1320 = vcombine.low %v1271, %v1272
        %v1321 = vcombine.low %v1273, %v1274
        %v1323 = vunpack.c.l.s4 1983009808
        %v1324 = vunpack.c.0.s8 %v1323
        %v1325 = vlaneseq
        %v1326 = vshrl.u32 %v1325, 7
        %v1327 = vsub.s32 %v1324, %v1326
        %v1328 = vrot.slane %v1320, %v1327
        %v1330 = vunpack.c.l.s4 1983009808
        %v1331 = vunpack.c.0.s8 %v1330
        %v1332 = vlaneseq
        %v1333 = vshrl.u32 %v1332, 7
        %v1334 = vsub.s32 %v1331, %v1333
        %v1335 = vrot.slane %v1321, %v1334
        %v1336 = vcombine.low %v1328, %v1335
        %v1337 = vcombine.low %v1275, %v1276
        %v1338 = vcombine.low %v1277, %v1278
        %v1340 = vunpack.c.l.s4 1983009808
        %v1341 = vunpack.c.0.s8 %v1340
        %v1342 = vlaneseq
        %v1343 = vshrl.u32 %v1342, 7
        %v1344 = vsub.s32 %v1341, %v1343
        %v1345 = vrot.slane %v1337, %v1344
        %v1347 = vunpack.c.l.s4 1983009808
        %v1348 = vunpack.c.0.s8 %v1347
        %v1349 = vlaneseq
        %v1350 = vshrl.u32 %v1349, 7
        %v1351 = vsub.s32 %v1348, %v1350
        %v1352 = vrot.slane %v1338, %v1351
        %v1353 = vcombine.low %v1345, %v1352
        %v1354 = vcombine.low %v1279, %v1280
        %v1355 = vcombine.low %v1281, %v1282
        %v1357 = vunpack.c.l.s4 1983009808
        %v1358 = vunpack.c.0.s8 %v1357
        %v1359 = vlaneseq
        %v1360 = vshrl.u32 %v1359, 7
        %v1361 = vsub.s32 %v1358, %v1360
        %v1362 = vrot.slane %v1354, %v1361
        %v1364 = vunpack.c.l.s4 1983009808
        %v1365 = vunpack.c.0.s8 %v1364
        %v1366 = vlaneseq
        %v1367 = vshrl.u32 %v1366, 7
        %v1368 = vsub.s32 %v1365, %v1367
        %v1369 = vrot.slane %v1355, %v1368
        %v1370 = vcombine.low %v1362, %v1369
        %v1371 = vcombine.low %v1283, %v1284
        %v1373 = vunpack.c.l.s4 1983009808
        %v1374 = vunpack.c.0.s8 %v1373
        %v1375 = vlaneseq
        %v1376 = vshrl.u32 %v1375, 7
        %v1377 = vsub.s32 %v1374, %v1376
        %v1378 = vrot.slane %v1371, %v1377
        %v1384 = vsel %vm522, %v1319, 0.0
        %v1385 = vsel %vm522, %v1336, 0.0
        %v1386 = vadd.f32 %v1384, %v1385
        %v1387 = vsel %vm522, %v1353, 0.0
        %v1388 = vadd.f32 %v1386, %v1387
        %v1389 = vsel %vm522, %v1370, 0.0
        %v1390 = vadd.f32 %v1388, %v1389
        %v1391 = vsel %vm1216, %v1378, 0.0
        %v1392 = vadd.f32 %v1390, %v1391
        %v1393 = vrot.slane %v1392, 4
        %v1394 = vadd.f32 %v1392, %v1393
        %v1395 = vrot.slane %v1394, 2
        %v1396 = vadd.f32 %v1394, %v1395
        %v1397 = vrot.slane %v1396, 1
        %v1398 = vadd.f32 %v1396, %v1397
        %v1399 = vmul.f32 %v1398, %v1225
        %v1400 = vadd.f32 %v1399, 1e-05
        %v1401 = vrsqrt.pop %v1400
        %v1402 = vld [vmem:[%s6] sm:$0x1]
        %v1403 = vmul.f32 %v1401, %v1402
        %v1404 = vlaneseq
        %v1405 = vshrl.u32 %v1404, 7
        %v1406 = vsub.s32 0, %v1405
        %v1407 = vrot.slane %v1403, %v1406
        %v1409 = vcombine.high %v1407, %v1407
        %v1411 = vunpack.c.l.s4 1983009808
        %v1412 = vunpack.c.0.s8 %v1411
        %v1413 = vlaneseq
        %v1414 = vshrl.u32 %v1413, 7
        %v1415 = vsub.s32 %v1412, %v1414
        %v1416 = vrot.slane %v1407, %v1415
        %v1418 = vunpack.c.l.s4 1983009808
        %v1419 = vunpack.c.0.s8 %v1418
        %v1420 = vlaneseq
        %v1421 = vshrl.u32 %v1420, 7
        %v1422 = vsub.s32 %v1419, %v1421
        %v1423 = vrot.slane %v1409, %v1422
        %v1424 = vcombine.high %v1416, %v1416
        %v1425 = vcombine.high %v1423, %v1423
        %v1430 = vmul.f32 %v1249, %v1416
        %v1431 = vmul.f32 %v1250, %v1424
        %v1432 = vmul.f32 %v1251, %v1423
        %v1433 = vmul.f32 %v1252, %v1425
        %v1434 = vmul.f32 %v1253, %v1416
        %v1435 = vmul.f32 %v1254, %v1424
        %v1436 = vmul.f32 %v1255, %v1423
        %v1437 = vmul.f32 %v1256, %v1425
        %v1438 = vmul.f32 %v1257, %v1416
        %v1439 = vmul.f32 %v1258, %v1424
        %v1440 = vmul.f32 %v1259, %v1423
        %v1441 = vmul.f32 %v1260, %v1425
        %v1442 = vmul.f32 %v1261, %v1416
        %v1443 = vmul.f32 %v1262, %v1424
        %v1444 = vmul.f32 %v1263, %v1423
        %v1445 = vmul.f32 %v1264, %v1425
        %v1446 = vmul.f32 %v1265, %v1416
        %v1447 = vmul.f32 %v1266, %v1424
        %v1448 = vld [vmem:[%s7] sm:$0x1]
        %v1450 = vlaneseq
        %v1451 = vshrl.u32 %v1450, 7
        %v1452 = vsub.s32 0, %v1451
        %v1453 = vrot.slane %v1448, %v1452
        %v1454 = vcombine.high %v1453, %v1453
        %v1456 = vunpack.c.l.s4 1983009808
        %v1457 = vunpack.c.0.s8 %v1456
        %v1458 = vlaneseq
        %v1459 = vshrl.u32 %v1458, 7
        %v1460 = vsub.s32 %v1457, %v1459
        %v1461 = vrot.slane %v1453, %v1460
        %v1463 = vunpack.c.l.s4 1983009808
        %v1464 = vunpack.c.0.s8 %v1463
        %v1465 = vlaneseq
        %v1466 = vshrl.u32 %v1465, 7
        %v1467 = vsub.s32 %v1464, %v1466
        %v1468 = vrot.slane %v1454, %v1467
        %v1469 = vcombine.high %v1461, %v1461
        %v1470 = vcombine.high %v1468, %v1468
        %v1475 = vadd.f32 %v1430, %v1461
        %v1476 = vadd.f32 %v1431, %v1469
        %v1477 = vadd.f32 %v1432, %v1468
        %v1478 = vadd.f32 %v1433, %v1470
        %v1479 = vadd.f32 %v1434, %v1461
        %v1480 = vadd.f32 %v1435, %v1469
        %v1481 = vadd.f32 %v1436, %v1468
        %v1482 = vadd.f32 %v1437, %v1470
        %v1483 = vadd.f32 %v1438, %v1461
        %v1484 = vadd.f32 %v1439, %v1469
        %v1485 = vadd.f32 %v1440, %v1468
        %v1486 = vadd.f32 %v1441, %v1470
        %v1487 = vadd.f32 %v1442, %v1461
        %v1488 = vadd.f32 %v1443, %v1469
        %v1489 = vadd.f32 %v1444, %v1468
        %v1490 = vadd.f32 %v1445, %v1470
        %v1491 = vadd.f32 %v1446, %v1461
        %v1492 = vadd.f32 %v1447, %v1469
        %v1493 = vmax.f32 %v1475, 0.0
        %v1494 = vmax.f32 %v1476, 0.0
        %v1495 = vmax.f32 %v1477, 0.0
        %v1496 = vmax.f32 %v1478, 0.0
        %v1497 = vmax.f32 %v1479, 0.0
        %v1498 = vmax.f32 %v1480, 0.0
        %v1499 = vmax.f32 %v1481, 0.0
        %v1500 = vmax.f32 %v1482, 0.0
        %v1501 = vmax.f32 %v1483, 0.0
        %v1502 = vmax.f32 %v1484, 0.0
        %v1503 = vmax.f32 %v1485, 0.0
        %v1504 = vmax.f32 %v1486, 0.0
        %v1505 = vmax.f32 %v1487, 0.0
        %v1506 = vmax.f32 %v1488, 0.0
        %v1507 = vmax.f32 %v1489, 0.0
        %v1508 = vmax.f32 %v1490, 0.0
        %v1509 = vmax.f32 %v1491, 0.0
        %v1510 = vmax.f32 %v1492, 0.0
        %v1511 = vmin.f32 %v1493, 6.0
        %v1512 = vmin.f32 %v1494, 6.0
        %v1513 = vmin.f32 %v1495, 6.0
        %v1514 = vmin.f32 %v1496, 6.0
        %v1515 = vmin.f32 %v1497, 6.0
        %v1516 = vmin.f32 %v1498, 6.0
        %v1517 = vmin.f32 %v1499, 6.0
        %v1518 = vmin.f32 %v1500, 6.0
        %v1519 = vmin.f32 %v1501, 6.0
        %v1520 = vmin.f32 %v1502, 6.0
        %v1521 = vmin.f32 %v1503, 6.0
        %v1522 = vmin.f32 %v1504, 6.0
        %v1523 = vmin.f32 %v1505, 6.0
        %v1524 = vmin.f32 %v1506, 6.0
        %v1525 = vmin.f32 %v1507, 6.0
        %v1526 = vmin.f32 %v1508, 6.0
        %v1527 = vmin.f32 %v1509, 6.0
        %v1528 = vmin.f32 %v1510, 6.0
        %v1529 = vld [vmem:[%s8] sm:$0xff]
        %v1548 = vcombine.low %v1511, %v1512
        %v1549 = vcombine.low %v1513, %v1514
        %v1551 = vunpack.c.l.s4 1983009808
        %v1552 = vunpack.c.0.s8 %v1551
        %v1553 = vlaneseq
        %v1554 = vshrl.u32 %v1553, 7
        %v1555 = vsub.s32 %v1552, %v1554
        %v1556 = vrot.slane %v1548, %v1555
        %v1558 = vunpack.c.l.s4 1983009808
        %v1559 = vunpack.c.0.s8 %v1558
        %v1560 = vlaneseq
        %v1561 = vshrl.u32 %v1560, 7
        %v1562 = vsub.s32 %v1559, %v1561
        %v1563 = vrot.slane %v1549, %v1562
        %v1564 = vcombine.low %v1556, %v1563
        %v1565 = vcombine.low %v1515, %v1516
        %v1566 = vcombine.low %v1517, %v1518
        %v1568 = vunpack.c.l.s4 1983009808
        %v1569 = vunpack.c.0.s8 %v1568
        %v1570 = vlaneseq
        %v1571 = vshrl.u32 %v1570, 7
        %v1572 = vsub.s32 %v1569, %v1571
        %v1573 = vrot.slane %v1565, %v1572
        %v1575 = vunpack.c.l.s4 1983009808
        %v1576 = vunpack.c.0.s8 %v1575
        %v1577 = vlaneseq
        %v1578 = vshrl.u32 %v1577, 7
        %v1579 = vsub.s32 %v1576, %v1578
        %v1580 = vrot.slane %v1566, %v1579
        %v1581 = vcombine.low %v1573, %v1580
        %v1582 = vcombine.low %v1519, %v1520
        %v1583 = vcombine.low %v1521, %v1522
        %v1585 = vunpack.c.l.s4 1983009808
        %v1586 = vunpack.c.0.s8 %v1585
        %v1587 = vlaneseq
        %v1588 = vshrl.u32 %v1587, 7
        %v1589 = vsub.s32 %v1586, %v1588
        %v1590 = vrot.slane %v1582, %v1589
        %v1592 = vunpack.c.l.s4 1983009808
        %v1593 = vunpack.c.0.s8 %v1592
        %v1594 = vlaneseq
        %v1595 = vshrl.u32 %v1594, 7
        %v1596 = vsub.s32 %v1593, %v1595
        %v1597 = vrot.slane %v1583, %v1596
        %v1598 = vcombine.low %v1590, %v1597
        %v1599 = vcombine.low %v1523, %v1524
        %v1600 = vcombine.low %v1525, %v1526
        %v1602 = vunpack.c.l.s4 1983009808
        %v1603 = vunpack.c.0.s8 %v1602
        %v1604 = vlaneseq
        %v1605 = vshrl.u32 %v1604, 7
        %v1606 = vsub.s32 %v1603, %v1605
        %v1607 = vrot.slane %v1599, %v1606
        %v1609 = vunpack.c.l.s4 1983009808
        %v1610 = vunpack.c.0.s8 %v1609
        %v1611 = vlaneseq
        %v1612 = vshrl.u32 %v1611, 7
        %v1613 = vsub.s32 %v1610, %v1612
        %v1614 = vrot.slane %v1600, %v1613
        %v1615 = vcombine.low %v1607, %v1614
        %v1616 = vcombine.low %v1527, %v1528
        %v1618 = vunpack.c.l.s4 1983009808
        %v1619 = vunpack.c.0.s8 %v1618
        %v1620 = vlaneseq
        %v1621 = vshrl.u32 %v1620, 7
        %v1622 = vsub.s32 %v1619, %v1621
        %v1623 = vrot.slane %v1616, %v1622
        %v1624 = vsel %vm522, %v1564, 0
        %v1626 = vsel %vm522, %v1581, 0
        %v1628 = vsel %vm522, %v1598, 0
        %v1630 = vsel %vm522, %v1615, 0
        %v1632 = vsel %vm522, %v1623, 0
        %1634 = vmatprep.subr.mxu0 0.0
        %1635 = vmatpush1.msra.mxu0 0.0
        %1636 = vmatprep.subr.mxu0 0.0
        %1637 = vmatpush1.msra.mxu0 0.0
        %1638 = vmatprep.subr.mxu0 0.0
        %1639 = vmatpush1.msra.mxu0 0.0
        %1640 = vmatprep.subr.mxu0 0.0
        %1641 = vmatpush1.msra.mxu0 0.0
        %1642 = vmatprep.subr.mxu0 0.0
        %1643 = vmatpush1.msra.mxu0 0.0
        %1644 = vmatprep.subr.mxu0 0.0
        %1645 = vmatpush1.msra.mxu0 0.0
        %1646 = vmatprep.subr.mxu0 0.0
        %1647 = vmatpush1.msra.mxu0 0.0
        %1648 = vmatprep.subr.mxu0 0.0
        %1649 = vmatpush1.msra.mxu0 0.0
        %1650 = vmatprep.subr.mxu0 0.0
        %1651 = vmatpush1.msra.mxu0 0.0
        %1652 = vmatprep.subr.mxu0 0.0
        %1653 = vmatpush1.msra.mxu0 0.0
        %1654 = vmatprep.subr.mxu0 0.0
        %1655 = vmatpush1.msra.mxu0 0.0
        %1656 = vmatprep.subr.mxu0 0.0
        %1657 = vmatpush1.msra.mxu0 0.0
        %1658 = vmatprep.subr.mxu0 0.0
        %1659 = vmatpush1.msra.mxu0 0.0
        %1660 = vmatprep.subr.mxu0 0.0
        %1661 = vmatpush1.msra.mxu0 0.0
        %1662 = vmatprep.subr.mxu0 0.0
        %1663 = vmatpush1.msra.mxu0 0.0
        %1664 = vmatprep.subr.mxu0 0.0
        %1665 = vmatpush1.msra.mxu0 %v1529
        %1666 = vmatprep.subr.mxu0 0.0
        %1667 = vmatpush2.msra.mxu0 0.0
        %1668 = vmatprep.subr.mxu0 0.0
        %1669 = vmatpush2.msra.mxu0 0.0
        %1670 = vmatprep.subr.mxu0 0.0
        %1671 = vmatpush2.msra.mxu0 0.0
        %1672 = vmatprep.subr.mxu0 0.0
        %1673 = vmatpush2.msra.mxu0 0.0
        %1674 = vmatprep.subr.mxu0 0.0
        %1675 = vmatpush2.msra.mxu0 0.0
        %1676 = vmatprep.subr.mxu0 0.0
        %1677 = vmatpush2.msra.mxu0 0.0
        %1678 = vmatprep.subr.mxu0 0.0
        %1679 = vmatpush2.msra.mxu0 0.0
        %1680 = vmatprep.subr.mxu0 0.0
        %1681 = vmatpush2.msra.mxu0 0.0
        %1682 = vmatprep.subr.mxu0 0.0
        %1683 = vmatpush2.msra.mxu0 0.0
        %1684 = vmatprep.subr.mxu0 0.0
        %1685 = vmatpush2.msra.mxu0 0.0
        %1686 = vmatprep.subr.mxu0 0.0
        %1687 = vmatpush2.msra.mxu0 0.0
        %1688 = vmatprep.subr.mxu0 0.0
        %1689 = vmatpush2.msra.mxu0 0.0
        %1690 = vmatprep.subr.mxu0 0.0
        %1691 = vmatpush2.msra.mxu0 0.0
        %1692 = vmatprep.subr.mxu0 0.0
        %1693 = vmatpush2.msra.mxu0 0.0
        %1694 = vmatprep.subr.mxu0 0.0
        %1695 = vmatpush2.msra.mxu0 0.0
        %1696 = vmatprep.subr.mxu0 0.0
        %1697 = vmatpush2.msra.mxu0 0.0
        %1698 = vmatprep.mubr.f32.mxu0 0.0
        %1699 = vmatmul.mubr.f32.gmra.mxu0 %v1624
        %v1700 = vpop.f32.mrf.mxu0
        %v1701 = vadd.f32 0.0, %v1700
        %v1702 = vpop.f32.mrf.mxu0
        %1703 = vmatprep.mubr.f32.mxu0 0.0
        %1704 = vmatmul.mubr.f32.gmra.mxu0 %v1626
        %v1705 = vpop.f32.mrf.mxu0
        %v1706 = vadd.f32 0.0, %v1705
        %v1707 = vpop.f32.mrf.mxu0
        %1708 = vmatprep.mubr.f32.mxu0 0.0
        %1709 = vmatmul.mubr.f32.gmra.mxu0 %v1628
        %v1710 = vpop.f32.mrf.mxu0
        %v1711 = vadd.f32 0.0, %v1710
        %v1712 = vpop.f32.mrf.mxu0
        %1713 = vmatprep.mubr.f32.mxu0 0.0
        %1714 = vmatmul.mubr.f32.gmra.mxu0 %v1630
        %v1715 = vpop.f32.mrf.mxu0
        %v1716 = vadd.f32 0.0, %v1715
        %v1717 = vpop.f32.mrf.mxu0
        %1718 = vmatprep.mubr.f32.mxu0 0.0
        %1719 = vmatmul.mubr.f32.gmra.mxu0 %v1632
        %v1720 = vpop.f32.mrf.mxu0
        %v1721 = vadd.f32 0.0, %v1720
        %v1722 = vpop.f32.mrf.mxu0
        %1723 = vdwg.mxu0
        %v1729 = vcombine.high %v1701, %v1701
        %v1731 = vunpack.c.l.s4 1983009808
        %v1732 = vunpack.c.0.s8 %v1731
        %v1733 = vlaneseq
        %v1734 = vshrl.u32 %v1733, 7
        %v1735 = vsub.s32 %v1732, %v1734
        %v1736 = vrot.slane %v1701, %v1735
        %v1738 = vunpack.c.l.s4 1983009808
        %v1739 = vunpack.c.0.s8 %v1738
        %v1740 = vlaneseq
        %v1741 = vshrl.u32 %v1740, 7
        %v1742 = vsub.s32 %v1739, %v1741
        %v1743 = vrot.slane %v1729, %v1742
        %v1744 = vcombine.high %v1736, %v1736
        %v1745 = vcombine.high %v1743, %v1743
        %v1746 = vcombine.high %v1706, %v1706
        %v1748 = vunpack.c.l.s4 1983009808
        %v1749 = vunpack.c.0.s8 %v1748
        %v1750 = vlaneseq
        %v1751 = vshrl.u32 %v1750, 7
        %v1752 = vsub.s32 %v1749, %v1751
        %v1753 = vrot.slane %v1706, %v1752
        %v1755 = vunpack.c.l.s4 1983009808
        %v1756 = vunpack.c.0.s8 %v1755
        %v1757 = vlaneseq
        %v1758 = vshrl.u32 %v1757, 7
        %v1759 = vsub.s32 %v1756, %v1758
        %v1760 = vrot.slane %v1746, %v1759
        %v1761 = vcombine.high %v1753, %v1753
        %v1762 = vcombine.high %v1760, %v1760
        %v1763 = vcombine.high %v1711, %v1711
        %v1765 = vunpack.c.l.s4 1983009808
        %v1766 = vunpack.c.0.s8 %v1765
        %v1767 = vlaneseq
        %v1768 = vshrl.u32 %v1767, 7
        %v1769 = vsub.s32 %v1766, %v1768
        %v1770 = vrot.slane %v1711, %v1769
        %v1772 = vunpack.c.l.s4 1983009808
        %v1773 = vunpack.c.0.s8 %v1772
        %v1774 = vlaneseq
        %v1775 = vshrl.u32 %v1774, 7
        %v1776 = vsub.s32 %v1773, %v1775
        %v1777 = vrot.slane %v1763, %v1776
        %v1778 = vcombine.high %v1770, %v1770
        %v1779 = vcombine.high %v1777, %v1777
        %v1780 = vcombine.high %v1716, %v1716
        %v1782 = vunpack.c.l.s4 1983009808
        %v1783 = vunpack.c.0.s8 %v1782
        %v1784 = vlaneseq
        %v1785 = vshrl.u32 %v1784, 7
        %v1786 = vsub.s32 %v1783, %v1785
        %v1787 = vrot.slane %v1716, %v1786
        %v1789 = vunpack.c.l.s4 1983009808
        %v1790 = vunpack.c.0.s8 %v1789
        %v1791 = vlaneseq
        %v1792 = vshrl.u32 %v1791, 7
        %v1793 = vsub.s32 %v1790, %v1792
        %v1794 = vrot.slane %v1780, %v1793
        %v1795 = vcombine.high %v1787, %v1787
        %v1796 = vcombine.high %v1794, %v1794
        %v1798 = vunpack.c.l.s4 1983009808
        %v1799 = vunpack.c.0.s8 %v1798
        %v1800 = vlaneseq
        %v1801 = vshrl.u32 %v1800, 7
        %v1802 = vsub.s32 %v1799, %v1801
        %v1803 = vrot.slane %v1721, %v1802
        %v1804 = vcombine.high %v1803, %v1803
        %v1823 = vcombine.low %v1745, %v1753
        %v1825 = vunpack.c.l.s4 1983009808
        %v1826 = vunpack.c.0.s8 %v1825
        %v1827 = vlaneseq
        %v1828 = vshrl.u32 %v1827, 7
        %v1829 = vsub.s32 %v1826, %v1828
        %v1830 = vrot.slane %v1823, %v1829
        %v1832 = vunpack.c.l.s4 1983009808
        %v1833 = vunpack.c.0.s8 %v1832
        %v1834 = vlaneseq
        %v1835 = vshrl.u32 %v1834, 7
        %v1836 = vsub.s32 %v1833, %v1835
        %v1837 = vrot.slane %v1761, %v1836
        %v1838 = vcombine.low %v1830, %v1837
        %v1839 = vcombine.low %v1736, %v1744
        %v1841 = vunpack.c.l.s4 1983009808
        %v1842 = vunpack.c.0.s8 %v1841
        %v1843 = vlaneseq
        %v1844 = vshrl.u32 %v1843, 7
        %v1845 = vsub.s32 %v1842, %v1844
        %v1846 = vrot.slane %v1839, %v1845
        %v1848 = vunpack.c.l.s4 1983009808
        %v1849 = vunpack.c.0.s8 %v1848
        %v1850 = vlaneseq
        %v1851 = vshrl.u32 %v1850, 7
        %v1852 = vsub.s32 %v1849, %v1851
        %v1853 = vrot.slane %v1743, %v1852
        %v1854 = vcombine.low %v1846, %v1853
        %v1855 = vcombine.low %v1760, %v1762
        %v1857 = vunpack.c.l.s4 1983009808
        %v1858 = vunpack.c.0.s8 %v1857
        %v1859 = vlaneseq
        %v1860 = vshrl.u32 %v1859, 7
        %v1861 = vsub.s32 %v1858, %v1860
        %v1862 = vrot.slane %v1855, %v1861
        %v1864 = vunpack.c.l.s4 1983009808
        %v1865 = vunpack.c.0.s8 %v1864
        %v1866 = vlaneseq
        %v1867 = vshrl.u32 %v1866, 7
        %v1868 = vsub.s32 %v1865, %v1867
        %v1869 = vrot.slane %v1770, %v1868
        %v1870 = vcombine.low %v1862, %v1869
        %v1871 = vcombine.low %v1778, %v1777
        %v1873 = vunpack.c.l.s4 1983009808
        %v1874 = vunpack.c.0.s8 %v1873
        %v1875 = vlaneseq
        %v1876 = vshrl.u32 %v1875, 7
        %v1877 = vsub.s32 %v1874, %v1876
        %v1878 = vrot.slane %v1871, %v1877
        %v1880 = vunpack.c.l.s4 1983009808
        %v1881 = vunpack.c.0.s8 %v1880
        %v1882 = vlaneseq
        %v1883 = vshrl.u32 %v1882, 7
        %v1884 = vsub.s32 %v1881, %v1883
        %v1885 = vrot.slane %v1779, %v1884
        %v1886 = vcombine.low %v1878, %v1885
        %v1887 = vcombine.low %v1787, %v1795
        %v1889 = vunpack.c.l.s4 1983009808
        %v1890 = vunpack.c.0.s8 %v1889
        %v1891 = vlaneseq
        %v1892 = vshrl.u32 %v1891, 7
        %v1893 = vsub.s32 %v1890, %v1892
        %v1894 = vrot.slane %v1887, %v1893
        %v1896 = vunpack.c.l.s4 1983009808
        %v1897 = vunpack.c.0.s8 %v1896
        %v1898 = vlaneseq
        %v1899 = vshrl.u32 %v1898, 7
        %v1900 = vsub.s32 %v1897, %v1899
        %v1901 = vrot.slane %v1794, %v1900
        %v1902 = vcombine.low %v1894, %v1901
        %v1903 = vcombine.low %v1796, %v1803
        %v1905 = vunpack.c.l.s4 1983009808
        %v1906 = vunpack.c.0.s8 %v1905
        %v1907 = vlaneseq
        %v1908 = vshrl.u32 %v1907, 7
        %v1909 = vsub.s32 %v1906, %v1908
        %v1910 = vrot.slane %v1903, %v1909
        %v1912 = vunpack.c.l.s4 1983009808
        %v1913 = vunpack.c.0.s8 %v1912
        %v1914 = vlaneseq
        %v1915 = vshrl.u32 %v1914, 7
        %v1916 = vsub.s32 %v1913, %v1915
        %v1917 = vrot.slane %v1804, %v1916
        %v1918 = vcombine.low %v1910, %v1917
        %vm1925 = vcmask 62464
        %v1926 = vsel %vm1925, %v1838, 0.0
        %v1927 = vsel %vm1925, %v1854, 0.0
        %v1928 = vadd.f32 %v1926, %v1927
        %v1929 = vadd.f32 %v1928, %v1926
        %v1930 = vsel %vm1925, %v1870, 0.0
        %v1931 = vadd.f32 %v1929, %v1930
        %v1932 = vsel %vm1925, %v1886, 0.0
        %v1933 = vadd.f32 %v1931, %v1932
        %v1934 = vsel %vm1925, %v1902, 0.0
        %v1935 = vadd.f32 %v1933, %v1934
        %v1936 = vsel %vm1925, %v1918, 0.0
        %v1937 = vadd.f32 %v1935, %v1936
        %v1938 = vadd.f32 %v1937, %v1934
        %v1939 = vrot.slane %v1938, 4
        %v1940 = vadd.f32 %v1938, %v1939
        %v1941 = vrot.slane %v1940, 2
        %v1942 = vadd.f32 %v1940, %v1941
        %v1943 = vrot.slane %v1942, 1
        %v1944 = vadd.f32 %v1942, %v1943
        %v1945 = vlaneseq
        %v1946 = vshrl.u32 %v1945, 7
        %v1947 = vsub.s32 1, %v1946
        %v1948 = vrot.slane %v1745, %v1947
        %v1949 = vlaneseq
        %v1950 = vshrl.u32 %v1949, 7
        %v1951 = vsub.s32 1, %v1950
        %v1952 = vrot.slane %v1736, %v1951
        %v1953 = vlaneseq
        %v1954 = vshrl.u32 %v1953, 7
        %v1955 = vsub.s32 1, %v1954
        %v1956 = vrot.slane %v1760, %v1955
        %v1957 = vlaneseq
        %v1958 = vshrl.u32 %v1957, 7
        %v1959 = vsub.s32 1, %v1958
        %v1960 = vrot.slane %v1778, %v1959
        %v1961 = vlaneseq
        %v1962 = vshrl.u32 %v1961, 7
        %v1963 = vsub.s32 1, %v1962
        %v1964 = vrot.slane %v1787, %v1963
        %v1965 = vlaneseq
        %v1966 = vshrl.u32 %v1965, 7
        %v1967 = vsub.s32 1, %v1966
        %v1968 = vrot.slane %v1796, %v1967
        %vm1975 = vcmask 57344
        %v1976 = vsel %vm1975, %v1948, 0.0
        %v1977 = vsel %vm1975, %v1952, 0.0
        %v1978 = vadd.f32 %v1976, %v1977
        %v1979 = vadd.f32 %v1978, %v1976
        %v1980 = vsel %vm1975, %v1956, 0.0
        %v1981 = vadd.f32 %v1979, %v1980
        %v1982 = vsel %vm1975, %v1960, 0.0
        %v1983 = vadd.f32 %v1981, %v1982
        %v1984 = vsel %vm1975, %v1964, 0.0
        %v1985 = vadd.f32 %v1983, %v1984
        %v1986 = vsel %vm1975, %v1968, 0.0
        %v1987 = vadd.f32 %v1985, %v1986
        %v1988 = vadd.f32 %v1987, %v1984
        %v1989 = vrot.slane %v1988, 4
        %v1990 = vadd.f32 %v1988, %v1989
        %v1991 = vrot.slane %v1990, 2
        %v1992 = vadd.f32 %v1990, %v1991
        %v1993 = vrot.slane %v1992, 1
        %v1994 = vadd.f32 %v1992, %v1993
        %v1995 = vadd.f32 %v1944, %v1994
        %v1996 = vsel %vm1975, %v1761, 0.0
        %v1997 = vsel %vm1975, %v1743, 0.0
        %v1998 = vadd.f32 %v1996, %v1997
        %v1999 = vadd.f32 %v1998, %v1996
        %v2000 = vsel %vm1975, %v1770, 0.0
        %v2001 = vadd.f32 %v1999, %v2000
        %v2002 = vsel %vm1975, %v1779, 0.0
        %v2003 = vadd.f32 %v2001, %v2002
        %v2004 = vsel %vm1975, %v1794, 0.0
        %v2005 = vadd.f32 %v2003, %v2004
        %v2006 = vsel %vm1975, %v1804, 0.0
        %v2007 = vadd.f32 %v2005, %v2006
        %v2008 = vadd.f32 %v2007, %v2004
        %v2009 = vrot.slane %v2008, 4
        %v2010 = vadd.f32 %v2008, %v2009
        %v2011 = vrot.slane %v2010, 2
        %v2012 = vadd.f32 %v2010, %v2011
        %v2013 = vrot.slane %v2012, 1
        %v2014 = vadd.f32 %v2012, %v2013
        %v2015 = vadd.f32 %v1995, %v2014
        %v2016 = vmul.f32 %v2015, %v673
        %v2018 = vcombine.high %v2016, %v2016
        %v2020 = vunpack.c.l.s4 1983009808
        %v2021 = vunpack.c.0.s8 %v2020
        %v2022 = vlaneseq
        %v2023 = vshrl.u32 %v2022, 7
        %v2024 = vsub.s32 %v2021, %v2023
        %v2025 = vrot.slane %v2016, %v2024
        %v2027 = vunpack.c.l.s4 1983009808
        %v2028 = vunpack.c.0.s8 %v2027
        %v2029 = vlaneseq
        %v2030 = vshrl.u32 %v2029, 7
        %v2031 = vsub.s32 %v2028, %v2030
        %v2032 = vrot.slane %v2018, %v2031
        %v2033 = vcombine.high %v2025, %v2025
        %v2037 = vsub.f32 %v1745, %v2025
        %v2038 = vsub.f32 %v1753, %v2033
        %v2039 = vsub.f32 %v1761, %v2032
        %v2040 = vsub.f32 %v1736, %v2025
        %v2041 = vsub.f32 %v1744, %v2033
        %v2042 = vsub.f32 %v1743, %v2032
        %v2043 = vsub.f32 %v1760, %v2025
        %v2044 = vsub.f32 %v1762, %v2033
        %v2045 = vsub.f32 %v1770, %v2032
        %v2046 = vsub.f32 %v1778, %v2025
        %v2047 = vsub.f32 %v1777, %v2033
        %v2048 = vsub.f32 %v1779, %v2032
        %v2049 = vsub.f32 %v1787, %v2025
        %v2050 = vsub.f32 %v1795, %v2033
        %v2051 = vsub.f32 %v1794, %v2032
        %v2052 = vsub.f32 %v1796, %v2025
        %v2053 = vsub.f32 %v1803, %v2033
        %v2054 = vsub.f32 %v1804, %v2032
        %v2055 = vsub.f32 %v1745, %v2016
        %v2056 = vsub.f32 %v1736, %v2016
        %v2057 = vsub.f32 %v1760, %v2016
        %v2058 = vsub.f32 %v1778, %v2016
        %v2059 = vsub.f32 %v1787, %v2016
        %v2060 = vsub.f32 %v1796, %v2016
        %v2061 = vsub.f32 %v1761, %v2016
        %v2062 = vsub.f32 %v1743, %v2016
        %v2063 = vsub.f32 %v1770, %v2016
        %v2064 = vsub.f32 %v1779, %v2016
        %v2065 = vsub.f32 %v1794, %v2016
        %v2066 = vsub.f32 %v1804, %v2016
        %v2067 = vmul.f32 %v2037, %v2037
        %v2068 = vmul.f32 %v2038, %v2038
        %v2069 = vmul.f32 %v2039, %v2039
        %v2070 = vmul.f32 %v2040, %v2040
        %v2071 = vmul.f32 %v2041, %v2041
        %v2072 = vmul.f32 %v2042, %v2042
        %v2073 = vmul.f32 %v2043, %v2043
        %v2074 = vmul.f32 %v2044, %v2044
        %v2075 = vmul.f32 %v2045, %v2045
        %v2076 = vmul.f32 %v2046, %v2046
        %v2077 = vmul.f32 %v2047, %v2047
        %v2078 = vmul.f32 %v2048, %v2048
        %v2079 = vmul.f32 %v2049, %v2049
        %v2080 = vmul.f32 %v2050, %v2050
        %v2081 = vmul.f32 %v2051, %v2051
        %v2082 = vmul.f32 %v2052, %v2052
        %v2083 = vmul.f32 %v2053, %v2053
        %v2084 = vmul.f32 %v2054, %v2054
        %v2103 = vcombine.low %v2067, %v2068
        %v2105 = vunpack.c.l.s4 1983009808
        %v2106 = vunpack.c.0.s8 %v2105
        %v2107 = vlaneseq
        %v2108 = vshrl.u32 %v2107, 7
        %v2109 = vsub.s32 %v2106, %v2108
        %v2110 = vrot.slane %v2103, %v2109
        %v2112 = vunpack.c.l.s4 1983009808
        %v2113 = vunpack.c.0.s8 %v2112
        %v2114 = vlaneseq
        %v2115 = vshrl.u32 %v2114, 7
        %v2116 = vsub.s32 %v2113, %v2115
        %v2117 = vrot.slane %v2069, %v2116
        %v2118 = vcombine.low %v2110, %v2117
        %v2119 = vcombine.low %v2070, %v2071
        %v2121 = vunpack.c.l.s4 1983009808
        %v2122 = vunpack.c.0.s8 %v2121
        %v2123 = vlaneseq
        %v2124 = vshrl.u32 %v2123, 7
        %v2125 = vsub.s32 %v2122, %v2124
        %v2126 = vrot.slane %v2119, %v2125
        %v2128 = vunpack.c.l.s4 1983009808
        %v2129 = vunpack.c.0.s8 %v2128
        %v2130 = vlaneseq
        %v2131 = vshrl.u32 %v2130, 7
        %v2132 = vsub.s32 %v2129, %v2131
        %v2133 = vrot.slane %v2072, %v2132
        %v2134 = vcombine.low %v2126, %v2133
        %v2135 = vcombine.low %v2073, %v2074
        %v2137 = vunpack.c.l.s4 1983009808
        %v2138 = vunpack.c.0.s8 %v2137
        %v2139 = vlaneseq
        %v2140 = vshrl.u32 %v2139, 7
        %v2141 = vsub.s32 %v2138, %v2140
        %v2142 = vrot.slane %v2135, %v2141
        %v2144 = vunpack.c.l.s4 1983009808
        %v2145 = vunpack.c.0.s8 %v2144
        %v2146 = vlaneseq
        %v2147 = vshrl.u32 %v2146, 7
        %v2148 = vsub.s32 %v2145, %v2147
        %v2149 = vrot.slane %v2075, %v2148
        %v2150 = vcombine.low %v2142, %v2149
        %v2151 = vcombine.low %v2076, %v2077
        %v2153 = vunpack.c.l.s4 1983009808
        %v2154 = vunpack.c.0.s8 %v2153
        %v2155 = vlaneseq
        %v2156 = vshrl.u32 %v2155, 7
        %v2157 = vsub.s32 %v2154, %v2156
        %v2158 = vrot.slane %v2151, %v2157
        %v2160 = vunpack.c.l.s4 1983009808
        %v2161 = vunpack.c.0.s8 %v2160
        %v2162 = vlaneseq
        %v2163 = vshrl.u32 %v2162, 7
        %v2164 = vsub.s32 %v2161, %v2163
        %v2165 = vrot.slane %v2078, %v2164
        %v2166 = vcombine.low %v2158, %v2165
        %v2167 = vcombine.low %v2079, %v2080
        %v2169 = vunpack.c.l.s4 1983009808
        %v2170 = vunpack.c.0.s8 %v2169
        %v2171 = vlaneseq
        %v2172 = vshrl.u32 %v2171, 7
        %v2173 = vsub.s32 %v2170, %v2172
        %v2174 = vrot.slane %v2167, %v2173
        %v2176 = vunpack.c.l.s4 1983009808
        %v2177 = vunpack.c.0.s8 %v2176
        %v2178 = vlaneseq
        %v2179 = vshrl.u32 %v2178, 7
        %v2180 = vsub.s32 %v2177, %v2179
        %v2181 = vrot.slane %v2081, %v2180
        %v2182 = vcombine.low %v2174, %v2181
        %v2183 = vcombine.low %v2082, %v2083
        %v2185 = vunpack.c.l.s4 1983009808
        %v2186 = vunpack.c.0.s8 %v2185
        %v2187 = vlaneseq
        %v2188 = vshrl.u32 %v2187, 7
        %v2189 = vsub.s32 %v2186, %v2188
        %v2190 = vrot.slane %v2183, %v2189
        %v2192 = vunpack.c.l.s4 1983009808
        %v2193 = vunpack.c.0.s8 %v2192
        %v2194 = vlaneseq
        %v2195 = vshrl.u32 %v2194, 7
        %v2196 = vsub.s32 %v2193, %v2195
        %v2197 = vrot.slane %v2084, %v2196
        %v2198 = vcombine.low %v2190, %v2197
        %v2205 = vsel %vm1925, %v2118, 0.0
        %v2206 = vsel %vm1925, %v2134, 0.0
        %v2207 = vadd.f32 %v2205, %v2206
        %v2208 = vadd.f32 %v2207, %v2205
        %v2209 = vsel %vm1925, %v2150, 0.0
        %v2210 = vadd.f32 %v2208, %v2209
        %v2211 = vsel %vm1925, %v2166, 0.0
        %v2212 = vadd.f32 %v2210, %v2211
        %v2213 = vsel %vm1925, %v2182, 0.0
        %v2214 = vadd.f32 %v2212, %v2213
        %v2215 = vsel %vm1925, %v2198, 0.0
        %v2216 = vadd.f32 %v2214, %v2215
        %v2217 = vadd.f32 %v2216, %v2213
        %v2218 = vrot.slane %v2217, 4
        %v2219 = vadd.f32 %v2217, %v2218
        %v2220 = vrot.slane %v2219, 2
        %v2221 = vadd.f32 %v2219, %v2220
        %v2222 = vrot.slane %v2221, 1
        %v2223 = vadd.f32 %v2221, %v2222
        %v2224 = vmul.f32 %v2055, %v2055
        %v2225 = vmul.f32 %v2056, %v2056
        %v2226 = vmul.f32 %v2057, %v2057
        %v2227 = vmul.f32 %v2058, %v2058
        %v2228 = vmul.f32 %v2059, %v2059
        %v2229 = vmul.f32 %v2060, %v2060
        %v2236 = vlaneseq
        %v2237 = vshrl.u32 %v2236, 7
        %v2238 = vsub.s32 1, %v2237
        %v2239 = vrot.slane %v2224, %v2238
        %v2240 = vlaneseq
        %v2241 = vshrl.u32 %v2240, 7
        %v2242 = vsub.s32 1, %v2241
        %v2243 = vrot.slane %v2225, %v2242
        %v2244 = vlaneseq
        %v2245 = vshrl.u32 %v2244, 7
        %v2246 = vsub.s32 1, %v2245
        %v2247 = vrot.slane %v2226, %v2246
        %v2248 = vlaneseq
        %v2249 = vshrl.u32 %v2248, 7
        %v2250 = vsub.s32 1, %v2249
        %v2251 = vrot.slane %v2227, %v2250
        %v2252 = vlaneseq
        %v2253 = vshrl.u32 %v2252, 7
        %v2254 = vsub.s32 1, %v2253
        %v2255 = vrot.slane %v2228, %v2254
        %v2256 = vlaneseq
        %v2257 = vshrl.u32 %v2256, 7
        %v2258 = vsub.s32 1, %v2257
        %v2259 = vrot.slane %v2229, %v2258
        %v2266 = vsel %vm1975, %v2239, 0.0
        %v2267 = vsel %vm1975, %v2243, 0.0
        %v2268 = vadd.f32 %v2266, %v2267
        %v2269 = vadd.f32 %v2268, %v2266
        %v2270 = vsel %vm1975, %v2247, 0.0
        %v2271 = vadd.f32 %v2269, %v2270
        %v2272 = vsel %vm1975, %v2251, 0.0
        %v2273 = vadd.f32 %v2271, %v2272
        %v2274 = vsel %vm1975, %v2255, 0.0
        %v2275 = vadd.f32 %v2273, %v2274
        %v2276 = vsel %vm1975, %v2259, 0.0
        %v2277 = vadd.f32 %v2275, %v2276
        %v2278 = vadd.f32 %v2277, %v2274
        %v2279 = vrot.slane %v2278, 4
        %v2280 = vadd.f32 %v2278, %v2279
        %v2281 = vrot.slane %v2280, 2
        %v2282 = vadd.f32 %v2280, %v2281
        %v2283 = vrot.slane %v2282, 1
        %v2284 = vadd.f32 %v2282, %v2283
        %v2285 = vadd.f32 %v2223, %v2284
        %v2286 = vmul.f32 %v2061, %v2061
        %v2287 = vmul.f32 %v2062, %v2062
        %v2288 = vmul.f32 %v2063, %v2063
        %v2289 = vmul.f32 %v2064, %v2064
        %v2290 = vmul.f32 %v2065, %v2065
        %v2291 = vmul.f32 %v2066, %v2066
        %v2292 = vsel %vm1975, %v2286, 0.0
        %v2293 = vsel %vm1975, %v2287, 0.0
        %v2294 = vadd.f32 %v2292, %v2293
        %v2295 = vadd.f32 %v2294, %v2292
        %v2296 = vsel %vm1975, %v2288, 0.0
        %v2297 = vadd.f32 %v2295, %v2296
        %v2298 = vsel %vm1975, %v2289, 0.0
        %v2299 = vadd.f32 %v2297, %v2298
        %v2300 = vsel %vm1975, %v2290, 0.0
        %v2301 = vadd.f32 %v2299, %v2300
        %v2302 = vsel %vm1975, %v2291, 0.0
        %v2303 = vadd.f32 %v2301, %v2302
        %v2304 = vadd.f32 %v2303, %v2300
        %v2305 = vrot.slane %v2304, 4
        %v2306 = vadd.f32 %v2304, %v2305
        %v2307 = vrot.slane %v2306, 2
        %v2308 = vadd.f32 %v2306, %v2307
        %v2309 = vrot.slane %v2308, 1
        %v2310 = vadd.f32 %v2308, %v2309
        %v2311 = vadd.f32 %v2285, %v2310
        %v2312 = vmul.f32 %v2311, %v673
        %v2313 = vadd.f32 %v2312, 1e-05
        %v2314 = vrsqrt.pop %v2313
        %v2315 = vld [vmem:[%s9] sm:$0x1]
        %v2316 = vmul.f32 %v2314, %v2315
        %v2317 = vlaneseq
        %v2318 = vshrl.u32 %v2317, 7
        %v2319 = vsub.s32 0, %v2318
        %v2320 = vrot.slane %v2316, %v2319
        %v2322 = vcombine.high %v2320, %v2320
        %v2324 = vunpack.c.l.s4 1983009808
        %v2325 = vunpack.c.0.s8 %v2324
        %v2326 = vlaneseq
        %v2327 = vshrl.u32 %v2326, 7
        %v2328 = vsub.s32 %v2325, %v2327
        %v2329 = vrot.slane %v2320, %v2328
        %v2331 = vunpack.c.l.s4 1983009808
        %v2332 = vunpack.c.0.s8 %v2331
        %v2333 = vlaneseq
        %v2334 = vshrl.u32 %v2333, 7
        %v2335 = vsub.s32 %v2332, %v2334
        %v2336 = vrot.slane %v2322, %v2335
        %v2337 = vcombine.high %v2329, %v2329
        %v2341 = vmul.f32 %v2037, %v2329
        %v2342 = vmul.f32 %v2038, %v2337
        %v2343 = vmul.f32 %v2039, %v2336
        %v2344 = vmul.f32 %v2040, %v2329
        %v2345 = vmul.f32 %v2041, %v2337
        %v2346 = vmul.f32 %v2042, %v2336
        %v2347 = vmul.f32 %v2043, %v2329
        %v2348 = vmul.f32 %v2044, %v2337
        %v2349 = vmul.f32 %v2045, %v2336
        %v2350 = vmul.f32 %v2046, %v2329
        %v2351 = vmul.f32 %v2047, %v2337
        %v2352 = vmul.f32 %v2048, %v2336
        %v2353 = vmul.f32 %v2049, %v2329
        %v2354 = vmul.f32 %v2050, %v2337
        %v2355 = vmul.f32 %v2051, %v2336
        %v2356 = vmul.f32 %v2052, %v2329
        %v2357 = vmul.f32 %v2053, %v2337
        %v2358 = vmul.f32 %v2054, %v2336
        %v2359 = vld [vmem:[%s10] sm:$0x1]
        %v2361 = vlaneseq
        %v2362 = vshrl.u32 %v2361, 7
        %v2363 = vsub.s32 0, %v2362
        %v2364 = vrot.slane %v2359, %v2363
        %v2365 = vcombine.high %v2364, %v2364
        %v2367 = vunpack.c.l.s4 1983009808
        %v2368 = vunpack.c.0.s8 %v2367
        %v2369 = vlaneseq
        %v2370 = vshrl.u32 %v2369, 7
        %v2371 = vsub.s32 %v2368, %v2370
        %v2372 = vrot.slane %v2364, %v2371
        %v2374 = vunpack.c.l.s4 1983009808
        %v2375 = vunpack.c.0.s8 %v2374
        %v2376 = vlaneseq
        %v2377 = vshrl.u32 %v2376, 7
        %v2378 = vsub.s32 %v2375, %v2377
        %v2379 = vrot.slane %v2365, %v2378
        %v2380 = vcombine.high %v2372, %v2372
        %v2384 = vadd.f32 %v2341, %v2372
        %v2385 = vadd.f32 %v2342, %v2380
        %v2386 = vadd.f32 %v2343, %v2379
        %v2387 = vadd.f32 %v2344, %v2372
        %v2388 = vadd.f32 %v2345, %v2380
        %v2389 = vadd.f32 %v2346, %v2379
        %v2390 = vadd.f32 %v2347, %v2372
        %v2391 = vadd.f32 %v2348, %v2380
        %v2392 = vadd.f32 %v2349, %v2379
        %v2393 = vadd.f32 %v2350, %v2372
        %v2394 = vadd.f32 %v2351, %v2380
        %v2395 = vadd.f32 %v2352, %v2379
        %v2396 = vadd.f32 %v2353, %v2372
        %v2397 = vadd.f32 %v2354, %v2380
        %v2398 = vadd.f32 %v2355, %v2379
        %v2399 = vadd.f32 %v2356, %v2372
        %v2400 = vadd.f32 %v2357, %v2380
        %v2401 = vadd.f32 %v2358, %v2379
        %2402 = vst.msk [vmem:[#allocation2] sm:$0xff] %vm522, 0.0
        %vm2403 = vcmask 58368
        %2404 = vst.msk [vmem:[#allocation2 + $0x8] sm:$0x3] %vm2403, 0.0
        %s2405 = scalar_lea.vmem [#allocation2], 144
        %2406 = vst.msk [vmem:[%s2405] sm:$0xff] %vm522, 0.0
        %2407 = vst.msk [vmem:[%s2405 + $0x8] sm:$0x3] %vm2403, 0.0
        %2408 = vst.msk [vmem:[#allocation2] sm:$0x1] %vm1975, 0.0
        %2409 = vst.msk [vmem:[#allocation2 + $0x10] sm:$0x1] %vm1975, 0.0
        %2410 = vst.msk [vmem:[#allocation2 + $0x20] sm:$0x1] %vm1975, 0.0
        %2411 = vst.msk [vmem:[#allocation2 + $0x30] sm:$0x1] %vm1975, 0.0
        %2412 = vst.msk [vmem:[#allocation2 + $0x40] sm:$0x1] %vm1975, 0.0
        %2413 = vst.msk [vmem:[#allocation2 + $0x50] sm:$0x1] %vm1975, 0.0
        %2414 = vst.msk [vmem:[#allocation2 + $0x60] sm:$0x1] %vm1975, 0.0
        %2415 = vst.msk [vmem:[#allocation2 + $0x70] sm:$0x1] %vm1975, 0.0
        %2416 = vst.msk [vmem:[#allocation2 + $0x80] sm:$0x1] %vm1975, 0.0
        %2417 = vst.msk [vmem:[#allocation2 + $0x90] sm:$0x1] %vm1975, 0.0
        %2418 = vst.msk [vmem:[#allocation2 + $0x9] sm:$0x1] %vm1975, 0.0
        %2419 = vst.msk [vmem:[#allocation2 + $0x19] sm:$0x1] %vm1975, 0.0
        %2420 = vst.msk [vmem:[#allocation2 + $0x29] sm:$0x1] %vm1975, 0.0
        %2421 = vst.msk [vmem:[#allocation2 + $0x39] sm:$0x1] %vm1975, 0.0
        %2422 = vst.msk [vmem:[#allocation2 + $0x49] sm:$0x1] %vm1975, 0.0
        %2423 = vst.msk [vmem:[#allocation2 + $0x59] sm:$0x1] %vm1975, 0.0
        %2424 = vst.msk [vmem:[#allocation2 + $0x69] sm:$0x1] %vm1975, 0.0
        %2425 = vst.msk [vmem:[#allocation2 + $0x79] sm:$0x1] %vm1975, 0.0
        %2426 = vst.msk [vmem:[#allocation2 + $0x89] sm:$0x1] %vm1975, 0.0
        %2427 = vst.msk [vmem:[#allocation2 + $0x99] sm:$0x1] %vm1975, 0.0
        %v2428 = vcombine.high %v513, %v513
        %v2430 = vunpack.c.l.s4 1983009808
        %v2431 = vunpack.c.0.s8 %v2430
        %v2432 = vlaneseq
        %v2433 = vshrl.u32 %v2432, 7
        %v2434 = vsub.s32 %v2431, %v2433
        %v2435 = vrot.slane %v513, %v2434
        %v2437 = vunpack.c.l.s4 1983009808
        %v2438 = vunpack.c.0.s8 %v2437
        %v2439 = vlaneseq
        %v2440 = vshrl.u32 %v2439, 7
        %v2441 = vsub.s32 %v2438, %v2440
        %v2442 = vrot.slane %v2428, %v2441
        %v2443 = vcombine.high %v2435, %v2435
        %v2444 = vcombine.high %v2442, %v2442
        %v2445 = vcombine.high %v514, %v514
        %v2447 = vunpack.c.l.s4 1983009808
        %v2448 = vunpack.c.0.s8 %v2447
        %v2449 = vlaneseq
        %v2450 = vshrl.u32 %v2449, 7
        %v2451 = vsub.s32 %v2448, %v2450
        %v2452 = vrot.slane %v514, %v2451
        %v2454 = vunpack.c.l.s4 1983009808
        %v2455 = vunpack.c.0.s8 %v2454
        %v2456 = vlaneseq
        %v2457 = vshrl.u32 %v2456, 7
        %v2458 = vsub.s32 %v2455, %v2457
        %v2459 = vrot.slane %v2445, %v2458
        %v2460 = vcombine.high %v2452, %v2452
        %v2461 = vcombine.high %v2459, %v2459
        %v2462 = vcombine.high %v515, %v515
        %v2464 = vunpack.c.l.s4 1983009808
        %v2465 = vunpack.c.0.s8 %v2464
        %v2466 = vlaneseq
        %v2467 = vshrl.u32 %v2466, 7
        %v2468 = vsub.s32 %v2465, %v2467
        %v2469 = vrot.slane %v515, %v2468
        %v2471 = vunpack.c.l.s4 1983009808
        %v2472 = vunpack.c.0.s8 %v2471
        %v2473 = vlaneseq
        %v2474 = vshrl.u32 %v2473, 7
        %v2475 = vsub.s32 %v2472, %v2474
        %v2476 = vrot.slane %v2462, %v2475
        %v2477 = vcombine.high %v2469, %v2469
        %v2478 = vcombine.high %v2476, %v2476
        %v2479 = vcombine.high %v516, %v516
        %v2481 = vunpack.c.l.s4 1983009808
        %v2482 = vunpack.c.0.s8 %v2481
        %v2483 = vlaneseq
        %v2484 = vshrl.u32 %v2483, 7
        %v2485 = vsub.s32 %v2482, %v2484
        %v2486 = vrot.slane %v516, %v2485
        %v2488 = vunpack.c.l.s4 1983009808
        %v2489 = vunpack.c.0.s8 %v2488
        %v2490 = vlaneseq
        %v2491 = vshrl.u32 %v2490, 7
        %v2492 = vsub.s32 %v2489, %v2491
        %v2493 = vrot.slane %v2479, %v2492
        %v2494 = vcombine.high %v2486, %v2486
        %v2495 = vcombine.high %v2493, %v2493
        %v2496 = vcombine.high %v517, %v517
        %v2498 = vunpack.c.l.s4 1983009808
        %v2499 = vunpack.c.0.s8 %v2498
        %v2500 = vlaneseq
        %v2501 = vshrl.u32 %v2500, 7
        %v2502 = vsub.s32 %v2499, %v2501
        %v2503 = vrot.slane %v517, %v2502
        %v2505 = vunpack.c.l.s4 1983009808
        %v2506 = vunpack.c.0.s8 %v2505
        %v2507 = vlaneseq
        %v2508 = vshrl.u32 %v2507, 7
        %v2509 = vsub.s32 %v2506, %v2508
        %v2510 = vrot.slane %v2496, %v2509
        %v2511 = vcombine.high %v2503, %v2503
        %v2512 = vcombine.high %v2510, %v2510
        %v2513 = vcombine.high %v518, %v518
        %v2515 = vunpack.c.l.s4 1983009808
        %v2516 = vunpack.c.0.s8 %v2515
        %v2517 = vlaneseq
        %v2518 = vshrl.u32 %v2517, 7
        %v2519 = vsub.s32 %v2516, %v2518
        %v2520 = vrot.slane %v518, %v2519
        %v2522 = vunpack.c.l.s4 1983009808
        %v2523 = vunpack.c.0.s8 %v2522
        %v2524 = vlaneseq
        %v2525 = vshrl.u32 %v2524, 7
        %v2526 = vsub.s32 %v2523, %v2525
        %v2527 = vrot.slane %v2513, %v2526
        %v2528 = vcombine.high %v2520, %v2520
        %v2529 = vcombine.high %v2527, %v2527
        %v2530 = vcombine.high %v519, %v519
        %v2532 = vunpack.c.l.s4 1983009808
        %v2533 = vunpack.c.0.s8 %v2532
        %v2534 = vlaneseq
        %v2535 = vshrl.u32 %v2534, 7
        %v2536 = vsub.s32 %v2533, %v2535
        %v2537 = vrot.slane %v519, %v2536
        %v2539 = vunpack.c.l.s4 1983009808
        %v2540 = vunpack.c.0.s8 %v2539
        %v2541 = vlaneseq
        %v2542 = vshrl.u32 %v2541, 7
        %v2543 = vsub.s32 %v2540, %v2542
        %v2544 = vrot.slane %v2530, %v2543
        %v2545 = vcombine.high %v2537, %v2537
        %v2546 = vcombine.high %v2544, %v2544
        %v2547 = vcombine.high %v520, %v520
        %v2549 = vunpack.c.l.s4 1983009808
        %v2550 = vunpack.c.0.s8 %v2549
        %v2551 = vlaneseq
        %v2552 = vshrl.u32 %v2551, 7
        %v2553 = vsub.s32 %v2550, %v2552
        %v2554 = vrot.slane %v520, %v2553
        %v2556 = vunpack.c.l.s4 1983009808
        %v2557 = vunpack.c.0.s8 %v2556
        %v2558 = vlaneseq
        %v2559 = vshrl.u32 %v2558, 7
        %v2560 = vsub.s32 %v2557, %v2559
        %v2561 = vrot.slane %v2547, %v2560
        %v2562 = vcombine.high %v2554, %v2554
        %v2563 = vcombine.high %v2561, %v2561
        %vm2564 = vcmask 1040384
        %vm2565 = vcmask 1042434
        %vm2566 = vmor %vm2564, %vm2565
        %vm2567 = vcmask 1044484
        %vm2568 = vmor %vm2566, %vm2567
        %vm2569 = vcmask 1046534
        %vm2570 = vmor %vm2568, %vm2569
        %v2571 = vrot.slane %v2435, 7
        %v2572 = vrot.slane %v2571, 2
        %v2573 = vrot.slane %v2443, 7
        %v2574 = vsel %vm2570, %v2572, %v2573
        %v2575 = vrot.slane %v2573, 2
        %v2576 = vrot.slane %v2442, 7
        %v2577 = vsel %vm2570, %v2575, %v2576
        %v2578 = vrot.slane %v2576, 2
        %v2579 = vrot.slane %v2444, 7
        %v2580 = vsel %vm2570, %v2578, %v2579
        %v2581 = vrot.slane %v2452, 7
        %v2582 = vrot.slane %v2581, 2
        %v2583 = vrot.slane %v2460, 7
        %v2584 = vsel %vm2570, %v2582, %v2583
        %v2585 = vrot.slane %v2583, 2
        %v2586 = vrot.slane %v2459, 7
        %v2587 = vsel %vm2570, %v2585, %v2586
        %v2588 = vrot.slane %v2586, 2
        %v2589 = vrot.slane %v2461, 7
        %v2590 = vsel %vm2570, %v2588, %v2589
        %v2591 = vrot.slane %v2469, 7
        %v2592 = vrot.slane %v2591, 2
        %v2593 = vrot.slane %v2477, 7
        %v2594 = vsel %vm2570, %v2592, %v2593
        %v2595 = vrot.slane %v2593, 2
        %v2596 = vrot.slane %v2476, 7
        %v2597 = vsel %vm2570, %v2595, %v2596
        %v2598 = vrot.slane %v2596, 2
        %v2599 = vrot.slane %v2478, 7
        %v2600 = vsel %vm2570, %v2598, %v2599
        %v2601 = vrot.slane %v2486, 7
        %v2602 = vrot.slane %v2601, 2
        %v2603 = vrot.slane %v2494, 7
        %v2604 = vsel %vm2570, %v2602, %v2603
        %v2605 = vrot.slane %v2603, 2
        %v2606 = vrot.slane %v2493, 7
        %v2607 = vsel %vm2570, %v2605, %v2606
        %v2608 = vrot.slane %v2606, 2
        %v2609 = vrot.slane %v2495, 7
        %v2610 = vsel %vm2570, %v2608, %v2609
        %v2611 = vrot.slane %v2503, 7
        %v2612 = vrot.slane %v2611, 2
        %v2613 = vrot.slane %v2511, 7
        %v2614 = vsel %vm2570, %v2612, %v2613
        %v2615 = vrot.slane %v2613, 2
        %v2616 = vrot.slane %v2510, 7
        %v2617 = vsel %vm2570, %v2615, %v2616
        %v2618 = vrot.slane %v2616, 2
        %v2619 = vrot.slane %v2512, 7
        %v2620 = vsel %vm2570, %v2618, %v2619
        %v2621 = vrot.slane %v2520, 7
        %v2622 = vrot.slane %v2621, 2
        %v2623 = vrot.slane %v2528, 7
        %v2624 = vsel %vm2570, %v2622, %v2623
        %v2625 = vrot.slane %v2623, 2
        %v2626 = vrot.slane %v2527, 7
        %v2627 = vsel %vm2570, %v2625, %v2626
        %v2628 = vrot.slane %v2626, 2
        %v2629 = vrot.slane %v2529, 7
        %v2630 = vsel %vm2570, %v2628, %v2629
        %v2631 = vrot.slane %v2537, 7
        %v2632 = vrot.slane %v2631, 2
        %v2633 = vrot.slane %v2545, 7
        %v2634 = vsel %vm2570, %v2632, %v2633
        %v2635 = vrot.slane %v2633, 2
        %v2636 = vrot.slane %v2544, 7
        %v2637 = vsel %vm2570, %v2635, %v2636
        %v2638 = vrot.slane %v2636, 2
        %v2639 = vrot.slane %v2546, 7
        %v2640 = vsel %vm2570, %v2638, %v2639
        %v2641 = vrot.slane %v2554, 7
        %v2642 = vrot.slane %v2641, 2
        %v2643 = vrot.slane %v2562, 7
        %v2644 = vsel %vm2570, %v2642, %v2643
        %v2645 = vrot.slane %v2643, 2
        %v2646 = vrot.slane %v2561, 7
        %v2647 = vsel %vm2570, %v2645, %v2646
        %v2648 = vrot.slane %v2646, 2
        %v2649 = vrot.slane %v2563, 7
        %v2650 = vsel %vm2570, %v2648, %v2649
        %v2675 = vadd.f32 %v2384, %v2574
        %v2676 = vadd.f32 %v2385, %v2577
        %v2677 = vadd.f32 %v2386, %v2580
        %v2678 = vadd.f32 %v2387, %v2584
        %v2679 = vadd.f32 %v2388, %v2587
        %v2680 = vadd.f32 %v2389, %v2590
        %v2681 = vadd.f32 %v2384, %v2594
        %v2682 = vadd.f32 %v2385, %v2597
        %v2683 = vadd.f32 %v2386, %v2600
        %v2684 = vadd.f32 %v2390, %v2604
        %v2685 = vadd.f32 %v2391, %v2607
        %v2686 = vadd.f32 %v2392, %v2610
        %v2687 = vadd.f32 %v2393, %v2614
        %v2688 = vadd.f32 %v2394, %v2617
        %v2689 = vadd.f32 %v2395, %v2620
        %v2690 = vadd.f32 %v2396, %v2624
        %v2691 = vadd.f32 %v2397, %v2627
        %v2692 = vadd.f32 %v2398, %v2630
        %v2693 = vadd.f32 %v2399, %v2634
        %v2694 = vadd.f32 %v2400, %v2637
        %v2695 = vadd.f32 %v2401, %v2640
        %v2696 = vadd.f32 %v2396, %v2644
        %v2697 = vadd.f32 %v2397, %v2647
        %v2698 = vadd.f32 %v2398, %v2650
        %v2723 = vcombine.low %v2675, %v2676
        %v2725 = vunpack.c.l.s4 1983009808
        %v2726 = vunpack.c.0.s8 %v2725
        %v2727 = vlaneseq
        %v2728 = vshrl.u32 %v2727, 7
        %v2729 = vsub.s32 %v2726, %v2728
        %v2730 = vrot.slane %v2723, %v2729
        %v2732 = vunpack.c.l.s4 1983009808
        %v2733 = vunpack.c.0.s8 %v2732
        %v2734 = vlaneseq
        %v2735 = vshrl.u32 %v2734, 7
        %v2736 = vsub.s32 %v2733, %v2735
        %v2737 = vrot.slane %v2677, %v2736
        %v2738 = vcombine.low %v2730, %v2737
        %v2739 = vcombine.low %v2678, %v2679
        %v2741 = vunpack.c.l.s4 1983009808
        %v2742 = vunpack.c.0.s8 %v2741
        %v2743 = vlaneseq
        %v2744 = vshrl.u32 %v2743, 7
        %v2745 = vsub.s32 %v2742, %v2744
        %v2746 = vrot.slane %v2739, %v2745
        %v2748 = vunpack.c.l.s4 1983009808
        %v2749 = vunpack.c.0.s8 %v2748
        %v2750 = vlaneseq
        %v2751 = vshrl.u32 %v2750, 7
        %v2752 = vsub.s32 %v2749, %v2751
        %v2753 = vrot.slane %v2680, %v2752
        %v2754 = vcombine.low %v2746, %v2753
        %v2755 = vcombine.low %v2681, %v2682
        %v2757 = vunpack.c.l.s4 1983009808
        %v2758 = vunpack.c.0.s8 %v2757
        %v2759 = vlaneseq
        %v2760 = vshrl.u32 %v2759, 7
        %v2761 = vsub.s32 %v2758, %v2760
        %v2762 = vrot.slane %v2755, %v2761
        %v2764 = vunpack.c.l.s4 1983009808
        %v2765 = vunpack.c.0.s8 %v2764
        %v2766 = vlaneseq
        %v2767 = vshrl.u32 %v2766, 7
        %v2768 = vsub.s32 %v2765, %v2767
        %v2769 = vrot.slane %v2683, %v2768
        %v2770 = vcombine.low %v2762, %v2769
        %v2771 = vcombine.low %v2684, %v2685
        %v2773 = vunpack.c.l.s4 1983009808
        %v2774 = vunpack.c.0.s8 %v2773
        %v2775 = vlaneseq
        %v2776 = vshrl.u32 %v2775, 7
        %v2777 = vsub.s32 %v2774, %v2776
        %v2778 = vrot.slane %v2771, %v2777
        %v2780 = vunpack.c.l.s4 1983009808
        %v2781 = vunpack.c.0.s8 %v2780
        %v2782 = vlaneseq
        %v2783 = vshrl.u32 %v2782, 7
        %v2784 = vsub.s32 %v2781, %v2783
        %v2785 = vrot.slane %v2686, %v2784
        %v2786 = vcombine.low %v2778, %v2785
        %v2787 = vcombine.low %v2687, %v2688
        %v2789 = vunpack.c.l.s4 1983009808
        %v2790 = vunpack.c.0.s8 %v2789
        %v2791 = vlaneseq
        %v2792 = vshrl.u32 %v2791, 7
        %v2793 = vsub.s32 %v2790, %v2792
        %v2794 = vrot.slane %v2787, %v2793
        %v2796 = vunpack.c.l.s4 1983009808
        %v2797 = vunpack.c.0.s8 %v2796
        %v2798 = vlaneseq
        %v2799 = vshrl.u32 %v2798, 7
        %v2800 = vsub.s32 %v2797, %v2799
        %v2801 = vrot.slane %v2689, %v2800
        %v2802 = vcombine.low %v2794, %v2801
        %v2803 = vcombine.low %v2690, %v2691
        %v2805 = vunpack.c.l.s4 1983009808
        %v2806 = vunpack.c.0.s8 %v2805
        %v2807 = vlaneseq
        %v2808 = vshrl.u32 %v2807, 7
        %v2809 = vsub.s32 %v2806, %v2808
        %v2810 = vrot.slane %v2803, %v2809
        %v2812 = vunpack.c.l.s4 1983009808
        %v2813 = vunpack.c.0.s8 %v2812
        %v2814 = vlaneseq
        %v2815 = vshrl.u32 %v2814, 7
        %v2816 = vsub.s32 %v2813, %v2815
        %v2817 = vrot.slane %v2692, %v2816
        %v2818 = vcombine.low %v2810, %v2817
        %v2819 = vcombine.low %v2693, %v2694
        %v2821 = vunpack.c.l.s4 1983009808
        %v2822 = vunpack.c.0.s8 %v2821
        %v2823 = vlaneseq
        %v2824 = vshrl.u32 %v2823, 7
        %v2825 = vsub.s32 %v2822, %v2824
        %v2826 = vrot.slane %v2819, %v2825
        %v2828 = vunpack.c.l.s4 1983009808
        %v2829 = vunpack.c.0.s8 %v2828
        %v2830 = vlaneseq
        %v2831 = vshrl.u32 %v2830, 7
        %v2832 = vsub.s32 %v2829, %v2831
        %v2833 = vrot.slane %v2695, %v2832
        %v2834 = vcombine.low %v2826, %v2833
        %v2835 = vcombine.low %v2696, %v2697
        %v2837 = vunpack.c.l.s4 1983009808
        %v2838 = vunpack.c.0.s8 %v2837
        %v2839 = vlaneseq
        %v2840 = vshrl.u32 %v2839, 7
        %v2841 = vsub.s32 %v2838, %v2840
        %v2842 = vrot.slane %v2835, %v2841
        %v2844 = vunpack.c.l.s4 1983009808
        %v2845 = vunpack.c.0.s8 %v2844
        %v2846 = vlaneseq
        %v2847 = vshrl.u32 %v2846, 7
        %v2848 = vsub.s32 %v2845, %v2847
        %v2849 = vrot.slane %v2698, %v2848
        %v2850 = vcombine.low %v2842, %v2849
        %s2859 = scalar_lea.vmem [#allocation2], 16
        %2860 = vst.msk [vmem:[%s2859 + $0x2] sm:$0x3f] %vm1925, %v2738
        %2861 = vst.msk [vmem:[%s2859 + $0x12] sm:$0x3f] %vm1925, %v2754
        %2862 = vst.msk [vmem:[%s2859 + $0x22] sm:$0x3f] %vm1925, %v2770
        %2863 = vst.msk [vmem:[%s2859 + $0x32] sm:$0x3f] %vm1925, %v2786
        %2864 = vst.msk [vmem:[%s2859 + $0x42] sm:$0x3f] %vm1925, %v2802
        %2865 = vst.msk [vmem:[%s2859 + $0x52] sm:$0x3f] %vm1925, %v2818
        %2866 = vst.msk [vmem:[%s2859 + $0x62] sm:$0x3f] %vm1925, %v2834
        %2867 = vst.msk [vmem:[%s2859 + $0x72] sm:$0x3f] %vm1925, %v2850
        %v2876 = vadd.f32 %v2384, %v2571
        %v2877 = vadd.f32 %v2387, %v2581
        %v2878 = vadd.f32 %v2384, %v2591
        %v2879 = vadd.f32 %v2390, %v2601
        %v2880 = vadd.f32 %v2393, %v2611
        %v2881 = vadd.f32 %v2396, %v2621
        %v2882 = vadd.f32 %v2399, %v2631
        %v2883 = vadd.f32 %v2396, %v2641
        %vm2884 = vcmask 58369
        %2885 = vst.msk [vmem:[%s2859] sm:$0x2] %vm2884, %v2876
        %2886 = vst.msk [vmem:[%s2859 + $0x10] sm:$0x2] %vm2884, %v2877
        %2887 = vst.msk [vmem:[%s2859 + $0x20] sm:$0x2] %vm2884, %v2878
        %2888 = vst.msk [vmem:[%s2859 + $0x30] sm:$0x2] %vm2884, %v2879
        %2889 = vst.msk [vmem:[%s2859 + $0x40] sm:$0x2] %vm2884, %v2880
        %2890 = vst.msk [vmem:[%s2859 + $0x50] sm:$0x2] %vm2884, %v2881
        %2891 = vst.msk [vmem:[%s2859 + $0x60] sm:$0x2] %vm2884, %v2882
        %2892 = vst.msk [vmem:[%s2859 + $0x70] sm:$0x2] %vm2884, %v2883
        %v2893 = vrot.slane %v2579, 2
        %v2894 = vrot.slane %v2589, 2
        %v2895 = vrot.slane %v2599, 2
        %v2896 = vrot.slane %v2609, 2
        %v2897 = vrot.slane %v2619, 2
        %v2898 = vrot.slane %v2629, 2
        %v2899 = vrot.slane %v2639, 2
        %v2900 = vrot.slane %v2649, 2
        %v2909 = vadd.f32 %v2386, %v2893
        %v2910 = vadd.f32 %v2389, %v2894
        %v2911 = vadd.f32 %v2386, %v2895
        %v2912 = vadd.f32 %v2392, %v2896
        %v2913 = vadd.f32 %v2395, %v2897
        %v2914 = vadd.f32 %v2398, %v2898
        %v2915 = vadd.f32 %v2401, %v2899
        %v2916 = vadd.f32 %v2398, %v2900
        %2917 = vst.msk [vmem:[%s2859 + $0x8] sm:$0x1] %vm1975, %v2909
        %2918 = vst.msk [vmem:[%s2859 + $0x18] sm:$0x1] %vm1975, %v2910
        %2919 = vst.msk [vmem:[%s2859 + $0x28] sm:$0x1] %vm1975, %v2911
        %2920 = vst.msk [vmem:[%s2859 + $0x38] sm:$0x1] %vm1975, %v2912
        %2921 = vst.msk [vmem:[%s2859 + $0x48] sm:$0x1] %vm1975, %v2913
        %2922 = vst.msk [vmem:[%s2859 + $0x58] sm:$0x1] %vm1975, %v2914
        %2923 = vst.msk [vmem:[%s2859 + $0x68] sm:$0x1] %vm1975, %v2915
        %2924 = vst.msk [vmem:[%s2859 + $0x78] sm:$0x1] %vm1975, %v2916
        %v2925 = vld [vmem:[%s11] sm:$0xff]
        %v2926 = vld [vmem:[%s11 + $0x8] sm:$0xff]
        %v2927 = vld [vmem:[%s11 + $0x10] sm:$0xff]
        %v2928 = vld [vmem:[%s11 + $0x18] sm:$0xff]
        %v2929 = vld [vmem:[%s11 + $0x20] sm:$0xff]
        %v2930 = vld [vmem:[%s11 + $0x28] sm:$0xff]
        %v2931 = vld [vmem:[%s11 + $0x30] sm:$0xff]
        %v2932 = vld [vmem:[%s11 + $0x38] sm:$0xff]
        %v2933 = vld [vmem:[%s11 + $0x40] sm:$0xff]
        %v2934 = vld [vmem:[#allocation2] sm:$0xff]
        %v2935 = vld [vmem:[#allocation2 + $0x10] sm:$0xff]
        %v2936 = vld [vmem:[#allocation2 + $0x20] sm:$0xff]
        %v2937 = vld [vmem:[#allocation2 + $0x30] sm:$0xff]
        %v2938 = vld [vmem:[#allocation2 + $0x40] sm:$0xff]
        %v2939 = vld [vmem:[#allocation2 + $0x50] sm:$0xff]
        %v2940 = vld [vmem:[#allocation2 + $0x60] sm:$0xff]
        %v2941 = vld [vmem:[#allocation2 + $0x70] sm:$0xff]
        %v2942 = vld [vmem:[#allocation2 + $0x1] sm:$0xff]
        %v2943 = vld [vmem:[#allocation2 + $0x11] sm:$0xff]
        %v2944 = vld [vmem:[#allocation2 + $0x21] sm:$0xff]
        %v2945 = vld [vmem:[#allocation2 + $0x31] sm:$0xff]
        %v2946 = vld [vmem:[#allocation2 + $0x41] sm:$0xff]
        %v2947 = vld [vmem:[#allocation2 + $0x51] sm:$0xff]
        %v2948 = vld [vmem:[#allocation2 + $0x61] sm:$0xff]
        %v2949 = vld [vmem:[#allocation2 + $0x71] sm:$0xff]
        %v2951 = vsel %vm522, %v2942, 0
        %v2954 = vsel %vm522, %v2943, 0
        %v2957 = vsel %vm522, %v2944, 0
        %v2960 = vsel %vm522, %v2945, 0
        %v2963 = vsel %vm522, %v2946, 0
        %v2966 = vsel %vm522, %v2947, 0
        %v2969 = vsel %vm522, %v2948, 0
        %v2972 = vsel %vm522, %v2949, 0
        %2974 = vmatprep.subr.mxu0 0.0
        %2975 = vmatpush1.msra.mxu0 0.0
        %2976 = vmatprep.subr.mxu0 0.0
        %2977 = vmatpush1.msra.mxu0 0.0
        %2978 = vmatprep.subr.mxu0 0.0
        %2979 = vmatpush1.msra.mxu0 0.0
        %2980 = vmatprep.subr.mxu0 0.0
        %2981 = vmatpush1.msra.mxu0 0.0
        %2982 = vmatprep.subr.mxu0 0.0
        %2983 = vmatpush1.msra.mxu0 0.0
        %2984 = vmatprep.subr.mxu0 0.0
        %2985 = vmatpush1.msra.mxu0 0.0
        %2986 = vmatprep.subr.mxu0 0.0
        %2987 = vmatpush1.msra.mxu0 0.0
        %2988 = vmatprep.subr.mxu0 0.0
        %2989 = vmatpush1.msra.mxu0 0.0
        %2990 = vmatprep.subr.mxu0 0.0
        %2991 = vmatpush1.msra.mxu0 0.0
        %2992 = vmatprep.subr.mxu0 0.0
        %2993 = vmatpush1.msra.mxu0 0.0
        %2994 = vmatprep.subr.mxu0 0.0
        %2995 = vmatpush1.msra.mxu0 0.0
        %2996 = vmatprep.subr.mxu0 0.0
        %2997 = vmatpush1.msra.mxu0 0.0
        %2998 = vmatprep.subr.mxu0 0.0
        %2999 = vmatpush1.msra.mxu0 0.0
        %3000 = vmatprep.subr.mxu0 0.0
        %3001 = vmatpush1.msra.mxu0 0.0
        %3002 = vmatprep.subr.mxu0 0.0
        %3003 = vmatpush1.msra.mxu0 0.0
        %3004 = vmatprep.subr.mxu0 0.0
        %3005 = vmatpush1.msra.mxu0 %v2926
        %3006 = vmatprep.subr.mxu0 0.0
        %3007 = vmatpush2.msra.mxu0 0.0
        %3008 = vmatprep.subr.mxu0 0.0
        %3009 = vmatpush2.msra.mxu0 0.0
        %3010 = vmatprep.subr.mxu0 0.0
        %3011 = vmatpush2.msra.mxu0 0.0
        %3012 = vmatprep.subr.mxu0 0.0
        %3013 = vmatpush2.msra.mxu0 0.0
        %3014 = vmatprep.subr.mxu0 0.0
        %3015 = vmatpush2.msra.mxu0 0.0
        %3016 = vmatprep.subr.mxu0 0.0
        %3017 = vmatpush2.msra.mxu0 0.0
        %3018 = vmatprep.subr.mxu0 0.0
        %3019 = vmatpush2.msra.mxu0 0.0
        %3020 = vmatprep.subr.mxu0 0.0
        %3021 = vmatpush2.msra.mxu0 0.0
        %3022 = vmatprep.subr.mxu0 0.0
        %3023 = vmatpush2.msra.mxu0 0.0
        %3024 = vmatprep.subr.mxu0 0.0
        %3025 = vmatpush2.msra.mxu0 0.0
        %3026 = vmatprep.subr.mxu0 0.0
        %3027 = vmatpush2.msra.mxu0 0.0
        %3028 = vmatprep.subr.mxu0 0.0
        %3029 = vmatpush2.msra.mxu0 0.0
        %3030 = vmatprep.subr.mxu0 0.0
        %3031 = vmatpush2.msra.mxu0 0.0
        %3032 = vmatprep.subr.mxu0 0.0
        %3033 = vmatpush2.msra.mxu0 0.0
        %3034 = vmatprep.subr.mxu0 0.0
        %3035 = vmatpush2.msra.mxu0 0.0
        %3036 = vmatprep.subr.mxu0 0.0
        %3037 = vmatpush2.msra.mxu0 0.0
        %3038 = vmatprep.mubr.f32.mxu0 0.0
        %3039 = vmatmul.mubr.f32.gmra.mxu0 %v2951
        %v3040 = vpop.f32.mrf.mxu0
        %v3041 = vadd.f32 0.0, %v3040
        %v3042 = vpop.f32.mrf.mxu0
        %3043 = vmatprep.mubr.f32.mxu0 0.0
        %3044 = vmatmul.mubr.f32.gmra.mxu0 %v2954
        %v3045 = vpop.f32.mrf.mxu0
        %v3046 = vadd.f32 0.0, %v3045
        %v3047 = vpop.f32.mrf.mxu0
        %3048 = vmatprep.mubr.f32.mxu0 0.0
        %3049 = vmatmul.mubr.f32.gmra.mxu0 %v2957
        %v3050 = vpop.f32.mrf.mxu0
        %v3051 = vadd.f32 0.0, %v3050
        %v3052 = vpop.f32.mrf.mxu0
        %3053 = vmatprep.mubr.f32.mxu0 0.0
        %3054 = vmatmul.mubr.f32.gmra.mxu0 %v2960
        %v3055 = vpop.f32.mrf.mxu0
        %v3056 = vadd.f32 0.0, %v3055
        %v3057 = vpop.f32.mrf.mxu0
        %3058 = vmatprep.mubr.f32.mxu0 0.0
        %3059 = vmatmul.mubr.f32.gmra.mxu0 %v2963
        %v3060 = vpop.f32.mrf.mxu0
        %v3061 = vadd.f32 0.0, %v3060
        %v3062 = vpop.f32.mrf.mxu0
        %3063 = vmatprep.mubr.f32.mxu0 0.0
        %3064 = vmatmul.mubr.f32.gmra.mxu0 %v2966
        %v3065 = vpop.f32.mrf.mxu0
        %v3066 = vadd.f32 0.0, %v3065
        %v3067 = vpop.f32.mrf.mxu0
        %3068 = vmatprep.mubr.f32.mxu0 0.0
        %3069 = vmatmul.mubr.f32.gmra.mxu0 %v2969
        %v3070 = vpop.f32.mrf.mxu0
        %v3071 = vadd.f32 0.0, %v3070
        %v3072 = vpop.f32.mrf.mxu0
        %3073 = vmatprep.mubr.f32.mxu0 0.0
        %3074 = vmatmul.mubr.f32.gmra.mxu0 %v2972
        %v3075 = vpop.f32.mrf.mxu0
        %v3076 = vadd.f32 0.0, %v3075
        %v3077 = vpop.f32.mrf.mxu0
        %3078 = vdwg.mxu0
        %v3080 = vsel %vm522, %v2934, 0
        %v3083 = vsel %vm522, %v2935, 0
        %v3086 = vsel %vm522, %v2936, 0
        %v3089 = vsel %vm522, %v2937, 0
        %v3092 = vsel %vm522, %v2938, 0
        %v3095 = vsel %vm522, %v2939, 0
        %v3098 = vsel %vm522, %v2940, 0
        %v3101 = vsel %vm522, %v2941, 0
        %3103 = vmatprep.subr.mxu0 0.0
        %3104 = vmatpush1.msra.mxu0 0.0
        %3105 = vmatprep.subr.mxu0 0.0
        %3106 = vmatpush1.msra.mxu0 0.0
        %3107 = vmatprep.subr.mxu0 0.0
        %3108 = vmatpush1.msra.mxu0 0.0
        %3109 = vmatprep.subr.mxu0 0.0
        %3110 = vmatpush1.msra.mxu0 0.0
        %3111 = vmatprep.subr.mxu0 0.0
        %3112 = vmatpush1.msra.mxu0 0.0
        %3113 = vmatprep.subr.mxu0 0.0
        %3114 = vmatpush1.msra.mxu0 0.0
        %3115 = vmatprep.subr.mxu0 0.0
        %3116 = vmatpush1.msra.mxu0 0.0
        %3117 = vmatprep.subr.mxu0 0.0
        %3118 = vmatpush1.msra.mxu0 0.0
        %3119 = vmatprep.subr.mxu0 0.0
        %3120 = vmatpush1.msra.mxu0 0.0
        %3121 = vmatprep.subr.mxu0 0.0
        %3122 = vmatpush1.msra.mxu0 0.0
        %3123 = vmatprep.subr.mxu0 0.0
        %3124 = vmatpush1.msra.mxu0 0.0
        %3125 = vmatprep.subr.mxu0 0.0
        %3126 = vmatpush1.msra.mxu0 0.0
        %3127 = vmatprep.subr.mxu0 0.0
        %3128 = vmatpush1.msra.mxu0 0.0
        %3129 = vmatprep.subr.mxu0 0.0
        %3130 = vmatpush1.msra.mxu0 0.0
        %3131 = vmatprep.subr.mxu0 0.0
        %3132 = vmatpush1.msra.mxu0 0.0
        %3133 = vmatprep.subr.mxu0 0.0
        %3134 = vmatpush1.msra.mxu0 %v2925
        %3135 = vmatprep.subr.mxu0 0.0
        %3136 = vmatpush2.msra.mxu0 0.0
        %3137 = vmatprep.subr.mxu0 0.0
        %3138 = vmatpush2.msra.mxu0 0.0
        %3139 = vmatprep.subr.mxu0 0.0
        %3140 = vmatpush2.msra.mxu0 0.0
        %3141 = vmatprep.subr.mxu0 0.0
        %3142 = vmatpush2.msra.mxu0 0.0
        %3143 = vmatprep.subr.mxu0 0.0
        %3144 = vmatpush2.msra.mxu0 0.0
        %3145 = vmatprep.subr.mxu0 0.0
        %3146 = vmatpush2.msra.mxu0 0.0
        %3147 = vmatprep.subr.mxu0 0.0
        %3148 = vmatpush2.msra.mxu0 0.0
        %3149 = vmatprep.subr.mxu0 0.0
        %3150 = vmatpush2.msra.mxu0 0.0
        %3151 = vmatprep.subr.mxu0 0.0
        %3152 = vmatpush2.msra.mxu0 0.0
        %3153 = vmatprep.subr.mxu0 0.0
        %3154 = vmatpush2.msra.mxu0 0.0
        %3155 = vmatprep.subr.mxu0 0.0
        %3156 = vmatpush2.msra.mxu0 0.0
        %3157 = vmatprep.subr.mxu0 0.0
        %3158 = vmatpush2.msra.mxu0 0.0
        %3159 = vmatprep.subr.mxu0 0.0
        %3160 = vmatpush2.msra.mxu0 0.0
        %3161 = vmatprep.subr.mxu0 0.0
        %3162 = vmatpush2.msra.mxu0 0.0
        %3163 = vmatprep.subr.mxu0 0.0
        %3164 = vmatpush2.msra.mxu0 0.0
        %3165 = vmatprep.subr.mxu0 0.0
        %3166 = vmatpush2.msra.mxu0 0.0
        %3167 = vmatprep.mubr.f32.mxu0 0.0
        %3168 = vmatmul.mubr.f32.gmra.mxu0 %v3080
        %v3169 = vpop.f32.mrf.mxu0
        %v3170 = vadd.f32 %v3041, %v3169
        %v3171 = vpop.f32.mrf.mxu0
        %3172 = vmatprep.mubr.f32.mxu0 0.0
        %3173 = vmatmul.mubr.f32.gmra.mxu0 %v3083
        %v3174 = vpop.f32.mrf.mxu0
        %v3175 = vadd.f32 %v3046, %v3174
        %v3176 = vpop.f32.mrf.mxu0
        %3177 = vmatprep.mubr.f32.mxu0 0.0
        %3178 = vmatmul.mubr.f32.gmra.mxu0 %v3086
        %v3179 = vpop.f32.mrf.mxu0
        %v3180 = vadd.f32 %v3051, %v3179
        %v3181 = vpop.f32.mrf.mxu0
        %3182 = vmatprep.mubr.f32.mxu0 0.0
        %3183 = vmatmul.mubr.f32.gmra.mxu0 %v3089
        %v3184 = vpop.f32.mrf.mxu0
        %v3185 = vadd.f32 %v3056, %v3184
        %v3186 = vpop.f32.mrf.mxu0
        %3187 = vmatprep.mubr.f32.mxu0 0.0
        %3188 = vmatmul.mubr.f32.gmra.mxu0 %v3092
        %v3189 = vpop.f32.mrf.mxu0
        %v3190 = vadd.f32 %v3061, %v3189
        %v3191 = vpop.f32.mrf.mxu0
        %3192 = vmatprep.mubr.f32.mxu0 0.0
        %3193 = vmatmul.mubr.f32.gmra.mxu0 %v3095
        %v3194 = vpop.f32.mrf.mxu0
        %v3195 = vadd.f32 %v3066, %v3194
        %v3196 = vpop.f32.mrf.mxu0
        %3197 = vmatprep.mubr.f32.mxu0 0.0
        %3198 = vmatmul.mubr.f32.gmra.mxu0 %v3098
        %v3199 = vpop.f32.mrf.mxu0
        %v3200 = vadd.f32 %v3071, %v3199
        %v3201 = vpop.f32.mrf.mxu0
        %3202 = vmatprep.mubr.f32.mxu0 0.0
        %3203 = vmatmul.mubr.f32.gmra.mxu0 %v3101
        %v3204 = vpop.f32.mrf.mxu0
        %v3205 = vadd.f32 %v3076, %v3204
        %v3206 = vpop.f32.mrf.mxu0
        %3207 = vdwg.mxu0
        %v3208 = vld [vmem:[#allocation2 + $0x2] sm:$0xff]
        %v3209 = vld [vmem:[#allocation2 + $0x12] sm:$0xff]
        %v3210 = vld [vmem:[#allocation2 + $0x22] sm:$0xff]
        %v3211 = vld [vmem:[#allocation2 + $0x32] sm:$0xff]
        %v3212 = vld [vmem:[#allocation2 + $0x42] sm:$0xff]
        %v3213 = vld [vmem:[#allocation2 + $0x52] sm:$0xff]
        %v3214 = vld [vmem:[#allocation2 + $0x62] sm:$0xff]
        %v3215 = vld [vmem:[#allocation2 + $0x72] sm:$0xff]
        %v3217 = vsel %vm522, %v3208, 0
        %v3220 = vsel %vm522, %v3209, 0
        %v3223 = vsel %vm522, %v3210, 0
        %v3226 = vsel %vm522, %v3211, 0
        %v3229 = vsel %vm522, %v3212, 0
        %v3232 = vsel %vm522, %v3213, 0
        %v3235 = vsel %vm522, %v3214, 0
        %v3238 = vsel %vm522, %v3215, 0
        %3240 = vmatprep.subr.mxu0 0.0
        %3241 = vmatpush1.msra.mxu0 0.0
        %3242 = vmatprep.subr.mxu0 0.0
        %3243 = vmatpush1.msra.mxu0 0.0
        %3244 = vmatprep.subr.mxu0 0.0
        %3245 = vmatpush1.msra.mxu0 0.0
        %3246 = vmatprep.subr.mxu0 0.0
        %3247 = vmatpush1.msra.mxu0 0.0
        %3248 = vmatprep.subr.mxu0 0.0
        %3249 = vmatpush1.msra.mxu0 0.0
        %3250 = vmatprep.subr.mxu0 0.0
        %3251 = vmatpush1.msra.mxu0 0.0
        %3252 = vmatprep.subr.mxu0 0.0
        %3253 = vmatpush1.msra.mxu0 0.0
        %3254 = vmatprep.subr.mxu0 0.0
        %3255 = vmatpush1.msra.mxu0 0.0
        %3256 = vmatprep.subr.mxu0 0.0
        %3257 = vmatpush1.msra.mxu0 0.0
        %3258 = vmatprep.subr.mxu0 0.0
        %3259 = vmatpush1.msra.mxu0 0.0
        %3260 = vmatprep.subr.mxu0 0.0
        %3261 = vmatpush1.msra.mxu0 0.0
        %3262 = vmatprep.subr.mxu0 0.0
        %3263 = vmatpush1.msra.mxu0 0.0
        %3264 = vmatprep.subr.mxu0 0.0
        %3265 = vmatpush1.msra.mxu0 0.0
        %3266 = vmatprep.subr.mxu0 0.0
        %3267 = vmatpush1.msra.mxu0 0.0
        %3268 = vmatprep.subr.mxu0 0.0
        %3269 = vmatpush1.msra.mxu0 0.0
        %3270 = vmatprep.subr.mxu0 0.0
        %3271 = vmatpush1.msra.mxu0 %v2927
        %3272 = vmatprep.subr.mxu0 0.0
        %3273 = vmatpush2.msra.mxu0 0.0
        %3274 = vmatprep.subr.mxu0 0.0
        %3275 = vmatpush2.msra.mxu0 0.0
        %3276 = vmatprep.subr.mxu0 0.0
        %3277 = vmatpush2.msra.mxu0 0.0
        %3278 = vmatprep.subr.mxu0 0.0
        %3279 = vmatpush2.msra.mxu0 0.0
        %3280 = vmatprep.subr.mxu0 0.0
        %3281 = vmatpush2.msra.mxu0 0.0
        %3282 = vmatprep.subr.mxu0 0.0
        %3283 = vmatpush2.msra.mxu0 0.0
        %3284 = vmatprep.subr.mxu0 0.0
        %3285 = vmatpush2.msra.mxu0 0.0
        %3286 = vmatprep.subr.mxu0 0.0
        %3287 = vmatpush2.msra.mxu0 0.0
        %3288 = vmatprep.subr.mxu0 0.0
        %3289 = vmatpush2.msra.mxu0 0.0
        %3290 = vmatprep.subr.mxu0 0.0
        %3291 = vmatpush2.msra.mxu0 0.0
        %3292 = vmatprep.subr.mxu0 0.0
        %3293 = vmatpush2.msra.mxu0 0.0
        %3294 = vmatprep.subr.mxu0 0.0
        %3295 = vmatpush2.msra.mxu0 0.0
        %3296 = vmatprep.subr.mxu0 0.0
        %3297 = vmatpush2.msra.mxu0 0.0
        %3298 = vmatprep.subr.mxu0 0.0
        %3299 = vmatpush2.msra.mxu0 0.0
        %3300 = vmatprep.subr.mxu0 0.0
        %3301 = vmatpush2.msra.mxu0 0.0
        %3302 = vmatprep.subr.mxu0 0.0
        %3303 = vmatpush2.msra.mxu0 0.0
        %3304 = vmatprep.mubr.f32.mxu0 0.0
        %3305 = vmatmul.mubr.f32.gmra.mxu0 %v3217
        %v3306 = vpop.f32.mrf.mxu0
        %v3307 = vadd.f32 0.0, %v3306
        %v3308 = vpop.f32.mrf.mxu0
        %3309 = vmatprep.mubr.f32.mxu0 0.0
        %3310 = vmatmul.mubr.f32.gmra.mxu0 %v3220
        %v3311 = vpop.f32.mrf.mxu0
        %v3312 = vadd.f32 0.0, %v3311
        %v3313 = vpop.f32.mrf.mxu0
        %3314 = vmatprep.mubr.f32.mxu0 0.0
        %3315 = vmatmul.mubr.f32.gmra.mxu0 %v3223
        %v3316 = vpop.f32.mrf.mxu0
        %v3317 = vadd.f32 0.0, %v3316
        %v3318 = vpop.f32.mrf.mxu0
        %3319 = vmatprep.mubr.f32.mxu0 0.0
        %3320 = vmatmul.mubr.f32.gmra.mxu0 %v3226
        %v3321 = vpop.f32.mrf.mxu0
        %v3322 = vadd.f32 0.0, %v3321
        %v3323 = vpop.f32.mrf.mxu0
        %3324 = vmatprep.mubr.f32.mxu0 0.0
        %3325 = vmatmul.mubr.f32.gmra.mxu0 %v3229
        %v3326 = vpop.f32.mrf.mxu0
        %v3327 = vadd.f32 0.0, %v3326
        %v3328 = vpop.f32.mrf.mxu0
        %3329 = vmatprep.mubr.f32.mxu0 0.0
        %3330 = vmatmul.mubr.f32.gmra.mxu0 %v3232
        %v3331 = vpop.f32.mrf.mxu0
        %v3332 = vadd.f32 0.0, %v3331
        %v3333 = vpop.f32.mrf.mxu0
        %3334 = vmatprep.mubr.f32.mxu0 0.0
        %3335 = vmatmul.mubr.f32.gmra.mxu0 %v3235
        %v3336 = vpop.f32.mrf.mxu0
        %v3337 = vadd.f32 0.0, %v3336
        %v3338 = vpop.f32.mrf.mxu0
        %3339 = vmatprep.mubr.f32.mxu0 0.0
        %3340 = vmatmul.mubr.f32.gmra.mxu0 %v3238
        %v3341 = vpop.f32.mrf.mxu0
        %v3342 = vadd.f32 0.0, %v3341
        %v3343 = vpop.f32.mrf.mxu0
        %3344 = vdwg.mxu0
        %v3345 = vadd.f32 %v3170, %v3307
        %v3346 = vadd.f32 %v3175, %v3312
        %v3347 = vadd.f32 %v3180, %v3317
        %v3348 = vadd.f32 %v3185, %v3322
        %v3349 = vadd.f32 %v3190, %v3327
        %v3350 = vadd.f32 %v3195, %v3332
        %v3351 = vadd.f32 %v3200, %v3337
        %v3352 = vadd.f32 %v3205, %v3342
        %v3353 = vld [vmem:[%s2859] sm:$0xff]
        %v3354 = vld [vmem:[%s2859 + $0x10] sm:$0xff]
        %v3355 = vld [vmem:[%s2859 + $0x20] sm:$0xff]
        %v3356 = vld [vmem:[%s2859 + $0x30] sm:$0xff]
        %v3357 = vld [vmem:[%s2859 + $0x40] sm:$0xff]
        %v3358 = vld [vmem:[%s2859 + $0x50] sm:$0xff]
        %v3359 = vld [vmem:[%s2859 + $0x60] sm:$0xff]
        %v3360 = vld [vmem:[%s2859 + $0x70] sm:$0xff]
        %v3362 = vsel %vm522, %v3353, 0
        %v3365 = vsel %vm522, %v3354, 0
        %v3368 = vsel %vm522, %v3355, 0
        %v3371 = vsel %vm522, %v3356, 0
        %v3374 = vsel %vm522, %v3357, 0
        %v3377 = vsel %vm522, %v3358, 0
        %v3380 = vsel %vm522, %v3359, 0
        %v3383 = vsel %vm522, %v3360, 0
        %3385 = vmatprep.subr.mxu0 0.0
        %3386 = vmatpush1.msra.mxu0 0.0
        %3387 = vmatprep.subr.mxu0 0.0
        %3388 = vmatpush1.msra.mxu0 0.0
        %3389 = vmatprep.subr.mxu0 0.0
        %3390 = vmatpush1.msra.mxu0 0.0
        %3391 = vmatprep.subr.mxu0 0.0
        %3392 = vmatpush1.msra.mxu0 0.0
        %3393 = vmatprep.subr.mxu0 0.0
        %3394 = vmatpush1.msra.mxu0 0.0
        %3395 = vmatprep.subr.mxu0 0.0
        %3396 = vmatpush1.msra.mxu0 0.0
        %3397 = vmatprep.subr.mxu0 0.0
        %3398 = vmatpush1.msra.mxu0 0.0
        %3399 = vmatprep.subr.mxu0 0.0
        %3400 = vmatpush1.msra.mxu0 0.0
        %3401 = vmatprep.subr.mxu0 0.0
        %3402 = vmatpush1.msra.mxu0 0.0
        %3403 = vmatprep.subr.mxu0 0.0
        %3404 = vmatpush1.msra.mxu0 0.0
        %3405 = vmatprep.subr.mxu0 0.0
        %3406 = vmatpush1.msra.mxu0 0.0
        %3407 = vmatprep.subr.mxu0 0.0
        %3408 = vmatpush1.msra.mxu0 0.0
        %3409 = vmatprep.subr.mxu0 0.0
        %3410 = vmatpush1.msra.mxu0 0.0
        %3411 = vmatprep.subr.mxu0 0.0
        %3412 = vmatpush1.msra.mxu0 0.0
        %3413 = vmatprep.subr.mxu0 0.0
        %3414 = vmatpush1.msra.mxu0 0.0
        %3415 = vmatprep.subr.mxu0 0.0
        %3416 = vmatpush1.msra.mxu0 %v2928
        %3417 = vmatprep.subr.mxu0 0.0
        %3418 = vmatpush2.msra.mxu0 0.0
        %3419 = vmatprep.subr.mxu0 0.0
        %3420 = vmatpush2.msra.mxu0 0.0
        %3421 = vmatprep.subr.mxu0 0.0
        %3422 = vmatpush2.msra.mxu0 0.0
        %3423 = vmatprep.subr.mxu0 0.0
        %3424 = vmatpush2.msra.mxu0 0.0
        %3425 = vmatprep.subr.mxu0 0.0
        %3426 = vmatpush2.msra.mxu0 0.0
        %3427 = vmatprep.subr.mxu0 0.0
        %3428 = vmatpush2.msra.mxu0 0.0
        %3429 = vmatprep.subr.mxu0 0.0
        %3430 = vmatpush2.msra.mxu0 0.0
        %3431 = vmatprep.subr.mxu0 0.0
        %3432 = vmatpush2.msra.mxu0 0.0
        %3433 = vmatprep.subr.mxu0 0.0
        %3434 = vmatpush2.msra.mxu0 0.0
        %3435 = vmatprep.subr.mxu0 0.0
        %3436 = vmatpush2.msra.mxu0 0.0
        %3437 = vmatprep.subr.mxu0 0.0
        %3438 = vmatpush2.msra.mxu0 0.0
        %3439 = vmatprep.subr.mxu0 0.0
        %3440 = vmatpush2.msra.mxu0 0.0
        %3441 = vmatprep.subr.mxu0 0.0
        %3442 = vmatpush2.msra.mxu0 0.0
        %3443 = vmatprep.subr.mxu0 0.0
        %3444 = vmatpush2.msra.mxu0 0.0
        %3445 = vmatprep.subr.mxu0 0.0
        %3446 = vmatpush2.msra.mxu0 0.0
        %3447 = vmatprep.subr.mxu0 0.0
        %3448 = vmatpush2.msra.mxu0 0.0
        %3449 = vmatprep.mubr.f32.mxu0 0.0
        %3450 = vmatmul.mubr.f32.gmra.mxu0 %v3362
        %v3451 = vpop.f32.mrf.mxu0
        %v3452 = vadd.f32 0.0, %v3451
        %v3453 = vpop.f32.mrf.mxu0
        %3454 = vmatprep.mubr.f32.mxu0 0.0
        %3455 = vmatmul.mubr.f32.gmra.mxu0 %v3365
        %v3456 = vpop.f32.mrf.mxu0
        %v3457 = vadd.f32 0.0, %v3456
        %v3458 = vpop.f32.mrf.mxu0
        %3459 = vmatprep.mubr.f32.mxu0 0.0
        %3460 = vmatmul.mubr.f32.gmra.mxu0 %v3368
        %v3461 = vpop.f32.mrf.mxu0
        %v3462 = vadd.f32 0.0, %v3461
        %v3463 = vpop.f32.mrf.mxu0
        %3464 = vmatprep.mubr.f32.mxu0 0.0
        %3465 = vmatmul.mubr.f32.gmra.mxu0 %v3371
        %v3466 = vpop.f32.mrf.mxu0
        %v3467 = vadd.f32 0.0, %v3466
        %v3468 = vpop.f32.mrf.mxu0
        %3469 = vmatprep.mubr.f32.mxu0 0.0
        %3470 = vmatmul.mubr.f32.gmra.mxu0 %v3374
        %v3471 = vpop.f32.mrf.mxu0
        %v3472 = vadd.f32 0.0, %v3471
        %v3473 = vpop.f32.mrf.mxu0
        %3474 = vmatprep.mubr.f32.mxu0 0.0
        %3475 = vmatmul.mubr.f32.gmra.mxu0 %v3377
        %v3476 = vpop.f32.mrf.mxu0
        %v3477 = vadd.f32 0.0, %v3476
        %v3478 = vpop.f32.mrf.mxu0
        %3479 = vmatprep.mubr.f32.mxu0 0.0
        %3480 = vmatmul.mubr.f32.gmra.mxu0 %v3380
        %v3481 = vpop.f32.mrf.mxu0
        %v3482 = vadd.f32 0.0, %v3481
        %v3483 = vpop.f32.mrf.mxu0
        %3484 = vmatprep.mubr.f32.mxu0 0.0
        %3485 = vmatmul.mubr.f32.gmra.mxu0 %v3383
        %v3486 = vpop.f32.mrf.mxu0
        %v3487 = vadd.f32 0.0, %v3486
        %v3488 = vpop.f32.mrf.mxu0
        %3489 = vdwg.mxu0
        %v3490 = vadd.f32 %v3345, %v3452
        %v3491 = vadd.f32 %v3346, %v3457
        %v3492 = vadd.f32 %v3347, %v3462
        %v3493 = vadd.f32 %v3348, %v3467
        %v3494 = vadd.f32 %v3349, %v3472
        %v3495 = vadd.f32 %v3350, %v3477
        %v3496 = vadd.f32 %v3351, %v3482
        %v3497 = vadd.f32 %v3352, %v3487
        %v3498 = vld [vmem:[%s2859 + $0x1] sm:$0xff]
        %v3499 = vld [vmem:[%s2859 + $0x11] sm:$0xff]
        %v3500 = vld [vmem:[%s2859 + $0x21] sm:$0xff]
        %v3501 = vld [vmem:[%s2859 + $0x31] sm:$0xff]
        %v3502 = vld [vmem:[%s2859 + $0x41] sm:$0xff]
        %v3503 = vld [vmem:[%s2859 + $0x51] sm:$0xff]
        %v3504 = vld [vmem:[%s2859 + $0x61] sm:$0xff]
        %v3505 = vld [vmem:[%s2859 + $0x71] sm:$0xff]
        %v3507 = vsel %vm522, %v3498, 0
        %v3510 = vsel %vm522, %v3499, 0
        %v3513 = vsel %vm522, %v3500, 0
        %v3516 = vsel %vm522, %v3501, 0
        %v3519 = vsel %vm522, %v3502, 0
        %v3522 = vsel %vm522, %v3503, 0
        %v3525 = vsel %vm522, %v3504, 0
        %v3528 = vsel %vm522, %v3505, 0
        %3530 = vmatprep.subr.mxu0 0.0
        %3531 = vmatpush1.msra.mxu0 0.0
        %3532 = vmatprep.subr.mxu0 0.0
        %3533 = vmatpush1.msra.mxu0 0.0
        %3534 = vmatprep.subr.mxu0 0.0
        %3535 = vmatpush1.msra.mxu0 0.0
        %3536 = vmatprep.subr.mxu0 0.0
        %3537 = vmatpush1.msra.mxu0 0.0
        %3538 = vmatprep.subr.mxu0 0.0
        %3539 = vmatpush1.msra.mxu0 0.0
        %3540 = vmatprep.subr.mxu0 0.0
        %3541 = vmatpush1.msra.mxu0 0.0
        %3542 = vmatprep.subr.mxu0 0.0
        %3543 = vmatpush1.msra.mxu0 0.0
        %3544 = vmatprep.subr.mxu0 0.0
        %3545 = vmatpush1.msra.mxu0 0.0
        %3546 = vmatprep.subr.mxu0 0.0
        %3547 = vmatpush1.msra.mxu0 0.0
        %3548 = vmatprep.subr.mxu0 0.0
        %3549 = vmatpush1.msra.mxu0 0.0
        %3550 = vmatprep.subr.mxu0 0.0
        %3551 = vmatpush1.msra.mxu0 0.0
        %3552 = vmatprep.subr.mxu0 0.0
        %3553 = vmatpush1.msra.mxu0 0.0
        %3554 = vmatprep.subr.mxu0 0.0
        %3555 = vmatpush1.msra.mxu0 0.0
        %3556 = vmatprep.subr.mxu0 0.0
        %3557 = vmatpush1.msra.mxu0 0.0
        %3558 = vmatprep.subr.mxu0 0.0
        %3559 = vmatpush1.msra.mxu0 0.0
        %3560 = vmatprep.subr.mxu0 0.0
        %3561 = vmatpush1.msra.mxu0 %v2929
        %3562 = vmatprep.subr.mxu0 0.0
        %3563 = vmatpush2.msra.mxu0 0.0
        %3564 = vmatprep.subr.mxu0 0.0
        %3565 = vmatpush2.msra.mxu0 0.0
        %3566 = vmatprep.subr.mxu0 0.0
        %3567 = vmatpush2.msra.mxu0 0.0
        %3568 = vmatprep.subr.mxu0 0.0
        %3569 = vmatpush2.msra.mxu0 0.0
        %3570 = vmatprep.subr.mxu0 0.0
        %3571 = vmatpush2.msra.mxu0 0.0
        %3572 = vmatprep.subr.mxu0 0.0
        %3573 = vmatpush2.msra.mxu0 0.0
        %3574 = vmatprep.subr.mxu0 0.0
        %3575 = vmatpush2.msra.mxu0 0.0
        %3576 = vmatprep.subr.mxu0 0.0
        %3577 = vmatpush2.msra.mxu0 0.0
        %3578 = vmatprep.subr.mxu0 0.0
        %3579 = vmatpush2.msra.mxu0 0.0
        %3580 = vmatprep.subr.mxu0 0.0
        %3581 = vmatpush2.msra.mxu0 0.0
        %3582 = vmatprep.subr.mxu0 0.0
        %3583 = vmatpush2.msra.mxu0 0.0
        %3584 = vmatprep.subr.mxu0 0.0
        %3585 = vmatpush2.msra.mxu0 0.0
        %3586 = vmatprep.subr.mxu0 0.0
        %3587 = vmatpush2.msra.mxu0 0.0
        %3588 = vmatprep.subr.mxu0 0.0
        %3589 = vmatpush2.msra.mxu0 0.0
        %3590 = vmatprep.subr.mxu0 0.0
        %3591 = vmatpush2.msra.mxu0 0.0
        %3592 = vmatprep.subr.mxu0 0.0
        %3593 = vmatpush2.msra.mxu0 0.0
        %3594 = vmatprep.mubr.f32.mxu0 0.0
        %3595 = vmatmul.mubr.f32.gmra.mxu0 %v3507
        %v3596 = vpop.f32.mrf.mxu0
        %v3597 = vadd.f32 0.0, %v3596
        %v3598 = vpop.f32.mrf.mxu0
        %3599 = vmatprep.mubr.f32.mxu0 0.0
        %3600 = vmatmul.mubr.f32.gmra.mxu0 %v3510
        %v3601 = vpop.f32.mrf.mxu0
        %v3602 = vadd.f32 0.0, %v3601
        %v3603 = vpop.f32.mrf.mxu0
        %3604 = vmatprep.mubr.f32.mxu0 0.0
        %3605 = vmatmul.mubr.f32.gmra.mxu0 %v3513
        %v3606 = vpop.f32.mrf.mxu0
        %v3607 = vadd.f32 0.0, %v3606
        %v3608 = vpop.f32.mrf.mxu0
        %3609 = vmatprep.mubr.f32.mxu0 0.0
        %3610 = vmatmul.mubr.f32.gmra.mxu0 %v3516
        %v3611 = vpop.f32.mrf.mxu0
        %v3612 = vadd.f32 0.0, %v3611
        %v3613 = vpop.f32.mrf.mxu0
        %3614 = vmatprep.mubr.f32.mxu0 0.0
        %3615 = vmatmul.mubr.f32.gmra.mxu0 %v3519
        %v3616 = vpop.f32.mrf.mxu0
        %v3617 = vadd.f32 0.0, %v3616
        %v3618 = vpop.f32.mrf.mxu0
        %3619 = vmatprep.mubr.f32.mxu0 0.0
        %3620 = vmatmul.mubr.f32.gmra.mxu0 %v3522
        %v3621 = vpop.f32.mrf.mxu0
        %v3622 = vadd.f32 0.0, %v3621
        %v3623 = vpop.f32.mrf.mxu0
        %3624 = vmatprep.mubr.f32.mxu0 0.0
        %3625 = vmatmul.mubr.f32.gmra.mxu0 %v3525
        %v3626 = vpop.f32.mrf.mxu0
        %v3627 = vadd.f32 0.0, %v3626
        %v3628 = vpop.f32.mrf.mxu0
        %3629 = vmatprep.mubr.f32.mxu0 0.0
        %3630 = vmatmul.mubr.f32.gmra.mxu0 %v3528
        %v3631 = vpop.f32.mrf.mxu0
        %v3632 = vadd.f32 0.0, %v3631
        %v3633 = vpop.f32.mrf.mxu0
        %3634 = vdwg.mxu0
        %v3635 = vadd.f32 %v3490, %v3597
        %v3636 = vadd.f32 %v3491, %v3602
        %v3637 = vadd.f32 %v3492, %v3607
        %v3638 = vadd.f32 %v3493, %v3612
        %v3639 = vadd.f32 %v3494, %v3617
        %v3640 = vadd.f32 %v3495, %v3622
        %v3641 = vadd.f32 %v3496, %v3627
        %v3642 = vadd.f32 %v3497, %v3632
        %v3643 = vld [vmem:[%s2859 + $0x2] sm:$0xff]
        %v3644 = vld [vmem:[%s2859 + $0x12] sm:$0xff]
        %v3645 = vld [vmem:[%s2859 + $0x22] sm:$0xff]
        %v3646 = vld [vmem:[%s2859 + $0x32] sm:$0xff]
        %v3647 = vld [vmem:[%s2859 + $0x42] sm:$0xff]
        %v3648 = vld [vmem:[%s2859 + $0x52] sm:$0xff]
        %v3649 = vld [vmem:[%s2859 + $0x62] sm:$0xff]
        %v3650 = vld [vmem:[%s2859 + $0x72] sm:$0xff]
        %v3652 = vsel %vm522, %v3643, 0
        %v3655 = vsel %vm522, %v3644, 0
        %v3658 = vsel %vm522, %v3645, 0
        %v3661 = vsel %vm522, %v3646, 0
        %v3664 = vsel %vm522, %v3647, 0
        %v3667 = vsel %vm522, %v3648, 0
        %v3670 = vsel %vm522, %v3649, 0
        %v3673 = vsel %vm522, %v3650, 0
        %3675 = vmatprep.subr.mxu0 0.0
        %3676 = vmatpush1.msra.mxu0 0.0
        %3677 = vmatprep.subr.mxu0 0.0
        %3678 = vmatpush1.msra.mxu0 0.0
        %3679 = vmatprep.subr.mxu0 0.0
        %3680 = vmatpush1.msra.mxu0 0.0
        %3681 = vmatprep.subr.mxu0 0.0
        %3682 = vmatpush1.msra.mxu0 0.0
        %3683 = vmatprep.subr.mxu0 0.0
        %3684 = vmatpush1.msra.mxu0 0.0
        %3685 = vmatprep.subr.mxu0 0.0
        %3686 = vmatpush1.msra.mxu0 0.0
        %3687 = vmatprep.subr.mxu0 0.0
        %3688 = vmatpush1.msra.mxu0 0.0
        %3689 = vmatprep.subr.mxu0 0.0
        %3690 = vmatpush1.msra.mxu0 0.0
        %3691 = vmatprep.subr.mxu0 0.0
        %3692 = vmatpush1.msra.mxu0 0.0
        %3693 = vmatprep.subr.mxu0 0.0
        %3694 = vmatpush1.msra.mxu0 0.0
        %3695 = vmatprep.subr.mxu0 0.0
        %3696 = vmatpush1.msra.mxu0 0.0
        %3697 = vmatprep.subr.mxu0 0.0
        %3698 = vmatpush1.msra.mxu0 0.0
        %3699 = vmatprep.subr.mxu0 0.0
        %3700 = vmatpush1.msra.mxu0 0.0
        %3701 = vmatprep.subr.mxu0 0.0
        %3702 = vmatpush1.msra.mxu0 0.0
        %3703 = vmatprep.subr.mxu0 0.0
        %3704 = vmatpush1.msra.mxu0 0.0
        %3705 = vmatprep.subr.mxu0 0.0
        %3706 = vmatpush1.msra.mxu0 %v2930
        %3707 = vmatprep.subr.mxu0 0.0
        %3708 = vmatpush2.msra.mxu0 0.0
        %3709 = vmatprep.subr.mxu0 0.0
        %3710 = vmatpush2.msra.mxu0 0.0
        %3711 = vmatprep.subr.mxu0 0.0
        %3712 = vmatpush2.msra.mxu0 0.0
        %3713 = vmatprep.subr.mxu0 0.0
        %3714 = vmatpush2.msra.mxu0 0.0
        %3715 = vmatprep.subr.mxu0 0.0
        %3716 = vmatpush2.msra.mxu0 0.0
        %3717 = vmatprep.subr.mxu0 0.0
        %3718 = vmatpush2.msra.mxu0 0.0
        %3719 = vmatprep.subr.mxu0 0.0
        %3720 = vmatpush2.msra.mxu0 0.0
        %3721 = vmatprep.subr.mxu0 0.0
        %3722 = vmatpush2.msra.mxu0 0.0
        %3723 = vmatprep.subr.mxu0 0.0
        %3724 = vmatpush2.msra.mxu0 0.0
        %3725 = vmatprep.subr.mxu0 0.0
        %3726 = vmatpush2.msra.mxu0 0.0
        %3727 = vmatprep.subr.mxu0 0.0
        %3728 = vmatpush2.msra.mxu0 0.0
        %3729 = vmatprep.subr.mxu0 0.0
        %3730 = vmatpush2.msra.mxu0 0.0
        %3731 = vmatprep.subr.mxu0 0.0
        %3732 = vmatpush2.msra.mxu0 0.0
        %3733 = vmatprep.subr.mxu0 0.0
        %3734 = vmatpush2.msra.mxu0 0.0
        %3735 = vmatprep.subr.mxu0 0.0
        %3736 = vmatpush2.msra.mxu0 0.0
        %3737 = vmatprep.subr.mxu0 0.0
        %3738 = vmatpush2.msra.mxu0 0.0
        %3739 = vmatprep.mubr.f32.mxu0 0.0
        %3740 = vmatmul.mubr.f32.gmra.mxu0 %v3652
        %v3741 = vpop.f32.mrf.mxu0
        %v3742 = vadd.f32 0.0, %v3741
        %v3743 = vpop.f32.mrf.mxu0
        %3744 = vmatprep.mubr.f32.mxu0 0.0
        %3745 = vmatmul.mubr.f32.gmra.mxu0 %v3655
        %v3746 = vpop.f32.mrf.mxu0
        %v3747 = vadd.f32 0.0, %v3746
        %v3748 = vpop.f32.mrf.mxu0
        %3749 = vmatprep.mubr.f32.mxu0 0.0
        %3750 = vmatmul.mubr.f32.gmra.mxu0 %v3658
        %v3751 = vpop.f32.mrf.mxu0
        %v3752 = vadd.f32 0.0, %v3751
        %v3753 = vpop.f32.mrf.mxu0
        %3754 = vmatprep.mubr.f32.mxu0 0.0
        %3755 = vmatmul.mubr.f32.gmra.mxu0 %v3661
        %v3756 = vpop.f32.mrf.mxu0
        %v3757 = vadd.f32 0.0, %v3756
        %v3758 = vpop.f32.mrf.mxu0
        %3759 = vmatprep.mubr.f32.mxu0 0.0
        %3760 = vmatmul.mubr.f32.gmra.mxu0 %v3664
        %v3761 = vpop.f32.mrf.mxu0
        %v3762 = vadd.f32 0.0, %v3761
        %v3763 = vpop.f32.mrf.mxu0
        %3764 = vmatprep.mubr.f32.mxu0 0.0
        %3765 = vmatmul.mubr.f32.gmra.mxu0 %v3667
        %v3766 = vpop.f32.mrf.mxu0
        %v3767 = vadd.f32 0.0, %v3766
        %v3768 = vpop.f32.mrf.mxu0
        %3769 = vmatprep.mubr.f32.mxu0 0.0
        %3770 = vmatmul.mubr.f32.gmra.mxu0 %v3670
        %v3771 = vpop.f32.mrf.mxu0
        %v3772 = vadd.f32 0.0, %v3771
        %v3773 = vpop.f32.mrf.mxu0
        %3774 = vmatprep.mubr.f32.mxu0 0.0
        %3775 = vmatmul.mubr.f32.gmra.mxu0 %v3673
        %v3776 = vpop.f32.mrf.mxu0
        %v3777 = vadd.f32 0.0, %v3776
        %v3778 = vpop.f32.mrf.mxu0
        %3779 = vdwg.mxu0
        %v3780 = vadd.f32 %v3635, %v3742
        %v3781 = vadd.f32 %v3636, %v3747
        %v3782 = vadd.f32 %v3637, %v3752
        %v3783 = vadd.f32 %v3638, %v3757
        %v3784 = vadd.f32 %v3639, %v3762
        %v3785 = vadd.f32 %v3640, %v3767
        %v3786 = vadd.f32 %v3641, %v3772
        %v3787 = vadd.f32 %v3642, %v3777
        %s3788 = scalar_lea.vmem [#allocation2], 32
        %v3789 = vld [vmem:[%s3788] sm:$0xff]
        %v3790 = vld [vmem:[%s3788 + $0x10] sm:$0xff]
        %v3791 = vld [vmem:[%s3788 + $0x20] sm:$0xff]
        %v3792 = vld [vmem:[%s3788 + $0x30] sm:$0xff]
        %v3793 = vld [vmem:[%s3788 + $0x40] sm:$0xff]
        %v3794 = vld [vmem:[%s3788 + $0x50] sm:$0xff]
        %v3795 = vld [vmem:[%s3788 + $0x60] sm:$0xff]
        %v3796 = vld [vmem:[%s3788 + $0x70] sm:$0xff]
        %v3798 = vsel %vm522, %v3789, 0
        %v3801 = vsel %vm522, %v3790, 0
        %v3804 = vsel %vm522, %v3791, 0
        %v3807 = vsel %vm522, %v3792, 0
        %v3810 = vsel %vm522, %v3793, 0
        %v3813 = vsel %vm522, %v3794, 0
        %v3816 = vsel %vm522, %v3795, 0
        %v3819 = vsel %vm522, %v3796, 0
        %3821 = vmatprep.subr.mxu0 0.0
        %3822 = vmatpush1.msra.mxu0 0.0
        %3823 = vmatprep.subr.mxu0 0.0
        %3824 = vmatpush1.msra.mxu0 0.0
        %3825 = vmatprep.subr.mxu0 0.0
        %3826 = vmatpush1.msra.mxu0 0.0
        %3827 = vmatprep.subr.mxu0 0.0
        %3828 = vmatpush1.msra.mxu0 0.0
        %3829 = vmatprep.subr.mxu0 0.0
        %3830 = vmatpush1.msra.mxu0 0.0
        %3831 = vmatprep.subr.mxu0 0.0
        %3832 = vmatpush1.msra.mxu0 0.0
        %3833 = vmatprep.subr.mxu0 0.0
        %3834 = vmatpush1.msra.mxu0 0.0
        %3835 = vmatprep.subr.mxu0 0.0
        %3836 = vmatpush1.msra.mxu0 0.0
        %3837 = vmatprep.subr.mxu0 0.0
        %3838 = vmatpush1.msra.mxu0 0.0
        %3839 = vmatprep.subr.mxu0 0.0
        %3840 = vmatpush1.msra.mxu0 0.0
        %3841 = vmatprep.subr.mxu0 0.0
        %3842 = vmatpush1.msra.mxu0 0.0
        %3843 = vmatprep.subr.mxu0 0.0
        %3844 = vmatpush1.msra.mxu0 0.0
        %3845 = vmatprep.subr.mxu0 0.0
        %3846 = vmatpush1.msra.mxu0 0.0
        %3847 = vmatprep.subr.mxu0 0.0
        %3848 = vmatpush1.msra.mxu0 0.0
        %3849 = vmatprep.subr.mxu0 0.0
        %3850 = vmatpush1.msra.mxu0 0.0
        %3851 = vmatprep.subr.mxu0 0.0
        %3852 = vmatpush1.msra.mxu0 %v2931
        %3853 = vmatprep.subr.mxu0 0.0
        %3854 = vmatpush2.msra.mxu0 0.0
        %3855 = vmatprep.subr.mxu0 0.0
        %3856 = vmatpush2.msra.mxu0 0.0
        %3857 = vmatprep.subr.mxu0 0.0
        %3858 = vmatpush2.msra.mxu0 0.0
        %3859 = vmatprep.subr.mxu0 0.0
        %3860 = vmatpush2.msra.mxu0 0.0
        %3861 = vmatprep.subr.mxu0 0.0
        %3862 = vmatpush2.msra.mxu0 0.0
        %3863 = vmatprep.subr.mxu0 0.0
        %3864 = vmatpush2.msra.mxu0 0.0
        %3865 = vmatprep.subr.mxu0 0.0
        %3866 = vmatpush2.msra.mxu0 0.0
        %3867 = vmatprep.subr.mxu0 0.0
        %3868 = vmatpush2.msra.mxu0 0.0
        %3869 = vmatprep.subr.mxu0 0.0
        %3870 = vmatpush2.msra.mxu0 0.0
        %3871 = vmatprep.subr.mxu0 0.0
        %3872 = vmatpush2.msra.mxu0 0.0
        %3873 = vmatprep.subr.mxu0 0.0
        %3874 = vmatpush2.msra.mxu0 0.0
        %3875 = vmatprep.subr.mxu0 0.0
        %3876 = vmatpush2.msra.mxu0 0.0
        %3877 = vmatprep.subr.mxu0 0.0
        %3878 = vmatpush2.msra.mxu0 0.0
        %3879 = vmatprep.subr.mxu0 0.0
        %3880 = vmatpush2.msra.mxu0 0.0
        %3881 = vmatprep.subr.mxu0 0.0
        %3882 = vmatpush2.msra.mxu0 0.0
        %3883 = vmatprep.subr.mxu0 0.0
        %3884 = vmatpush2.msra.mxu0 0.0
        %3885 = vmatprep.mubr.f32.mxu0 0.0
        %3886 = vmatmul.mubr.f32.gmra.mxu0 %v3798
        %v3887 = vpop.f32.mrf.mxu0
        %v3888 = vadd.f32 0.0, %v3887
        %v3889 = vpop.f32.mrf.mxu0
        %3890 = vmatprep.mubr.f32.mxu0 0.0
        %3891 = vmatmul.mubr.f32.gmra.mxu0 %v3801
        %v3892 = vpop.f32.mrf.mxu0
        %v3893 = vadd.f32 0.0, %v3892
        %v3894 = vpop.f32.mrf.mxu0
        %3895 = vmatprep.mubr.f32.mxu0 0.0
        %3896 = vmatmul.mubr.f32.gmra.mxu0 %v3804
        %v3897 = vpop.f32.mrf.mxu0
        %v3898 = vadd.f32 0.0, %v3897
        %v3899 = vpop.f32.mrf.mxu0
        %3900 = vmatprep.mubr.f32.mxu0 0.0
        %3901 = vmatmul.mubr.f32.gmra.mxu0 %v3807
        %v3902 = vpop.f32.mrf.mxu0
        %v3903 = vadd.f32 0.0, %v3902
        %v3904 = vpop.f32.mrf.mxu0
        %3905 = vmatprep.mubr.f32.mxu0 0.0
        %3906 = vmatmul.mubr.f32.gmra.mxu0 %v3810
        %v3907 = vpop.f32.mrf.mxu0
        %v3908 = vadd.f32 0.0, %v3907
        %v3909 = vpop.f32.mrf.mxu0
        %3910 = vmatprep.mubr.f32.mxu0 0.0
        %3911 = vmatmul.mubr.f32.gmra.mxu0 %v3813
        %v3912 = vpop.f32.mrf.mxu0
        %v3913 = vadd.f32 0.0, %v3912
        %v3914 = vpop.f32.mrf.mxu0
        %3915 = vmatprep.mubr.f32.mxu0 0.0
        %3916 = vmatmul.mubr.f32.gmra.mxu0 %v3816
        %v3917 = vpop.f32.mrf.mxu0
        %v3918 = vadd.f32 0.0, %v3917
        %v3919 = vpop.f32.mrf.mxu0
        %3920 = vmatprep.mubr.f32.mxu0 0.0
        %3921 = vmatmul.mubr.f32.gmra.mxu0 %v3819
        %v3922 = vpop.f32.mrf.mxu0
        %v3923 = vadd.f32 0.0, %v3922
        %v3924 = vpop.f32.mrf.mxu0
        %3925 = vdwg.mxu0
        %v3926 = vadd.f32 %v3780, %v3888
        %v3927 = vadd.f32 %v3781, %v3893
        %v3928 = vadd.f32 %v3782, %v3898
        %v3929 = vadd.f32 %v3783, %v3903
        %v3930 = vadd.f32 %v3784, %v3908
        %v3931 = vadd.f32 %v3785, %v3913
        %v3932 = vadd.f32 %v3786, %v3918
        %v3933 = vadd.f32 %v3787, %v3923
        %v3934 = vld [vmem:[%s3788 + $0x1] sm:$0xff]
        %v3935 = vld [vmem:[%s3788 + $0x11] sm:$0xff]
        %v3936 = vld [vmem:[%s3788 + $0x21] sm:$0xff]
        %v3937 = vld [vmem:[%s3788 + $0x31] sm:$0xff]
        %v3938 = vld [vmem:[%s3788 + $0x41] sm:$0xff]
        %v3939 = vld [vmem:[%s3788 + $0x51] sm:$0xff]
        %v3940 = vld [vmem:[%s3788 + $0x61] sm:$0xff]
        %v3941 = vld [vmem:[%s3788 + $0x71] sm:$0xff]
        %v3943 = vsel %vm522, %v3934, 0
        %v3946 = vsel %vm522, %v3935, 0
        %v3949 = vsel %vm522, %v3936, 0
        %v3952 = vsel %vm522, %v3937, 0
        %v3955 = vsel %vm522, %v3938, 0
        %v3958 = vsel %vm522, %v3939, 0
        %v3961 = vsel %vm522, %v3940, 0
        %v3964 = vsel %vm522, %v3941, 0
        %3966 = vmatprep.subr.mxu0 0.0
        %3967 = vmatpush1.msra.mxu0 0.0
        %3968 = vmatprep.subr.mxu0 0.0
        %3969 = vmatpush1.msra.mxu0 0.0
        %3970 = vmatprep.subr.mxu0 0.0
        %3971 = vmatpush1.msra.mxu0 0.0
        %3972 = vmatprep.subr.mxu0 0.0
        %3973 = vmatpush1.msra.mxu0 0.0
        %3974 = vmatprep.subr.mxu0 0.0
        %3975 = vmatpush1.msra.mxu0 0.0
        %3976 = vmatprep.subr.mxu0 0.0
        %3977 = vmatpush1.msra.mxu0 0.0
        %3978 = vmatprep.subr.mxu0 0.0
        %3979 = vmatpush1.msra.mxu0 0.0
        %3980 = vmatprep.subr.mxu0 0.0
        %3981 = vmatpush1.msra.mxu0 0.0
        %3982 = vmatprep.subr.mxu0 0.0
        %3983 = vmatpush1.msra.mxu0 0.0
        %3984 = vmatprep.subr.mxu0 0.0
        %3985 = vmatpush1.msra.mxu0 0.0
        %3986 = vmatprep.subr.mxu0 0.0
        %3987 = vmatpush1.msra.mxu0 0.0
        %3988 = vmatprep.subr.mxu0 0.0
        %3989 = vmatpush1.msra.mxu0 0.0
        %3990 = vmatprep.subr.mxu0 0.0
        %3991 = vmatpush1.msra.mxu0 0.0
        %3992 = vmatprep.subr.mxu0 0.0
        %3993 = vmatpush1.msra.mxu0 0.0
        %3994 = vmatprep.subr.mxu0 0.0
        %3995 = vmatpush1.msra.mxu0 0.0
        %3996 = vmatprep.subr.mxu0 0.0
        %3997 = vmatpush1.msra.mxu0 %v2932
        %3998 = vmatprep.subr.mxu0 0.0
        %3999 = vmatpush2.msra.mxu0 0.0
        %4000 = vmatprep.subr.mxu0 0.0
        %4001 = vmatpush2.msra.mxu0 0.0
        %4002 = vmatprep.subr.mxu0 0.0
        %4003 = vmatpush2.msra.mxu0 0.0
        %4004 = vmatprep.subr.mxu0 0.0
        %4005 = vmatpush2.msra.mxu0 0.0
        %4006 = vmatprep.subr.mxu0 0.0
        %4007 = vmatpush2.msra.mxu0 0.0
        %4008 = vmatprep.subr.mxu0 0.0
        %4009 = vmatpush2.msra.mxu0 0.0
        %4010 = vmatprep.subr.mxu0 0.0
        %4011 = vmatpush2.msra.mxu0 0.0
        %4012 = vmatprep.subr.mxu0 0.0
        %4013 = vmatpush2.msra.mxu0 0.0
        %4014 = vmatprep.subr.mxu0 0.0
        %4015 = vmatpush2.msra.mxu0 0.0
        %4016 = vmatprep.subr.mxu0 0.0
        %4017 = vmatpush2.msra.mxu0 0.0
        %4018 = vmatprep.subr.mxu0 0.0
        %4019 = vmatpush2.msra.mxu0 0.0
        %4020 = vmatprep.subr.mxu0 0.0
        %4021 = vmatpush2.msra.mxu0 0.0
        %4022 = vmatprep.subr.mxu0 0.0
        %4023 = vmatpush2.msra.mxu0 0.0
        %4024 = vmatprep.subr.mxu0 0.0
        %4025 = vmatpush2.msra.mxu0 0.0
        %4026 = vmatprep.subr.mxu0 0.0
        %4027 = vmatpush2.msra.mxu0 0.0
        %4028 = vmatprep.subr.mxu0 0.0
        %4029 = vmatpush2.msra.mxu0 0.0
        %4030 = vmatprep.mubr.f32.mxu0 0.0
        %4031 = vmatmul.mubr.f32.gmra.mxu0 %v3943
        %v4032 = vpop.f32.mrf.mxu0
        %v4033 = vadd.f32 0.0, %v4032
        %v4034 = vpop.f32.mrf.mxu0
        %4035 = vmatprep.mubr.f32.mxu0 0.0
        %4036 = vmatmul.mubr.f32.gmra.mxu0 %v3946
        %v4037 = vpop.f32.mrf.mxu0
        %v4038 = vadd.f32 0.0, %v4037
        %v4039 = vpop.f32.mrf.mxu0
        %4040 = vmatprep.mubr.f32.mxu0 0.0
        %4041 = vmatmul.mubr.f32.gmra.mxu0 %v3949
        %v4042 = vpop.f32.mrf.mxu0
        %v4043 = vadd.f32 0.0, %v4042
        %v4044 = vpop.f32.mrf.mxu0
        %4045 = vmatprep.mubr.f32.mxu0 0.0
        %4046 = vmatmul.mubr.f32.gmra.mxu0 %v3952
        %v4047 = vpop.f32.mrf.mxu0
        %v4048 = vadd.f32 0.0, %v4047
        %v4049 = vpop.f32.mrf.mxu0
        %4050 = vmatprep.mubr.f32.mxu0 0.0
        %4051 = vmatmul.mubr.f32.gmra.mxu0 %v3955
        %v4052 = vpop.f32.mrf.mxu0
        %v4053 = vadd.f32 0.0, %v4052
        %v4054 = vpop.f32.mrf.mxu0
        %4055 = vmatprep.mubr.f32.mxu0 0.0
        %4056 = vmatmul.mubr.f32.gmra.mxu0 %v3958
        %v4057 = vpop.f32.mrf.mxu0
        %v4058 = vadd.f32 0.0, %v4057
        %v4059 = vpop.f32.mrf.mxu0
        %4060 = vmatprep.mubr.f32.mxu0 0.0
        %4061 = vmatmul.mubr.f32.gmra.mxu0 %v3961
        %v4062 = vpop.f32.mrf.mxu0
        %v4063 = vadd.f32 0.0, %v4062
        %v4064 = vpop.f32.mrf.mxu0
        %4065 = vmatprep.mubr.f32.mxu0 0.0
        %4066 = vmatmul.mubr.f32.gmra.mxu0 %v3964
        %v4067 = vpop.f32.mrf.mxu0
        %v4068 = vadd.f32 0.0, %v4067
        %v4069 = vpop.f32.mrf.mxu0
        %4070 = vdwg.mxu0
        %v4071 = vadd.f32 %v3926, %v4033
        %v4072 = vadd.f32 %v3927, %v4038
        %v4073 = vadd.f32 %v3928, %v4043
        %v4074 = vadd.f32 %v3929, %v4048
        %v4075 = vadd.f32 %v3930, %v4053
        %v4076 = vadd.f32 %v3931, %v4058
        %v4077 = vadd.f32 %v3932, %v4063
        %v4078 = vadd.f32 %v3933, %v4068
        %v4079 = vld [vmem:[%s3788 + $0x2] sm:$0xff]
        %v4080 = vld [vmem:[%s3788 + $0x12] sm:$0xff]
        %v4081 = vld [vmem:[%s3788 + $0x22] sm:$0xff]
        %v4082 = vld [vmem:[%s3788 + $0x32] sm:$0xff]
        %v4083 = vld [vmem:[%s3788 + $0x42] sm:$0xff]
        %v4084 = vld [vmem:[%s3788 + $0x52] sm:$0xff]
        %v4085 = vld [vmem:[%s3788 + $0x62] sm:$0xff]
        %v4086 = vld [vmem:[%s3788 + $0x72] sm:$0xff]
        %v4088 = vsel %vm522, %v4079, 0
        %v4091 = vsel %vm522, %v4080, 0
        %v4094 = vsel %vm522, %v4081, 0
        %v4097 = vsel %vm522, %v4082, 0
        %v4100 = vsel %vm522, %v4083, 0
        %v4103 = vsel %vm522, %v4084, 0
        %v4106 = vsel %vm522, %v4085, 0
        %v4109 = vsel %vm522, %v4086, 0
        %4111 = vmatprep.subr.mxu0 0.0
        %4112 = vmatpush1.msra.mxu0 0.0
        %4113 = vmatprep.subr.mxu0 0.0
        %4114 = vmatpush1.msra.mxu0 0.0
        %4115 = vmatprep.subr.mxu0 0.0
        %4116 = vmatpush1.msra.mxu0 0.0
        %4117 = vmatprep.subr.mxu0 0.0
        %4118 = vmatpush1.msra.mxu0 0.0
        %4119 = vmatprep.subr.mxu0 0.0
        %4120 = vmatpush1.msra.mxu0 0.0
        %4121 = vmatprep.subr.mxu0 0.0
        %4122 = vmatpush1.msra.mxu0 0.0
        %4123 = vmatprep.subr.mxu0 0.0
        %4124 = vmatpush1.msra.mxu0 0.0
        %4125 = vmatprep.subr.mxu0 0.0
        %4126 = vmatpush1.msra.mxu0 0.0
        %4127 = vmatprep.subr.mxu0 0.0
        %4128 = vmatpush1.msra.mxu0 0.0
        %4129 = vmatprep.subr.mxu0 0.0
        %4130 = vmatpush1.msra.mxu0 0.0
        %4131 = vmatprep.subr.mxu0 0.0
        %4132 = vmatpush1.msra.mxu0 0.0
        %4133 = vmatprep.subr.mxu0 0.0
        %4134 = vmatpush1.msra.mxu0 0.0
        %4135 = vmatprep.subr.mxu0 0.0
        %4136 = vmatpush1.msra.mxu0 0.0
        %4137 = vmatprep.subr.mxu0 0.0
        %4138 = vmatpush1.msra.mxu0 0.0
        %4139 = vmatprep.subr.mxu0 0.0
        %4140 = vmatpush1.msra.mxu0 0.0
        %4141 = vmatprep.subr.mxu0 0.0
        %4142 = vmatpush1.msra.mxu0 %v2933
        %4143 = vmatprep.subr.mxu0 0.0
        %4144 = vmatpush2.msra.mxu0 0.0
        %4145 = vmatprep.subr.mxu0 0.0
        %4146 = vmatpush2.msra.mxu0 0.0
        %4147 = vmatprep.subr.mxu0 0.0
        %4148 = vmatpush2.msra.mxu0 0.0
        %4149 = vmatprep.subr.mxu0 0.0
        %4150 = vmatpush2.msra.mxu0 0.0
        %4151 = vmatprep.subr.mxu0 0.0
        %4152 = vmatpush2.msra.mxu0 0.0
        %4153 = vmatprep.subr.mxu0 0.0
        %4154 = vmatpush2.msra.mxu0 0.0
        %4155 = vmatprep.subr.mxu0 0.0
        %4156 = vmatpush2.msra.mxu0 0.0
        %4157 = vmatprep.subr.mxu0 0.0
        %4158 = vmatpush2.msra.mxu0 0.0
        %4159 = vmatprep.subr.mxu0 0.0
        %4160 = vmatpush2.msra.mxu0 0.0
        %4161 = vmatprep.subr.mxu0 0.0
        %4162 = vmatpush2.msra.mxu0 0.0
        %4163 = vmatprep.subr.mxu0 0.0
        %4164 = vmatpush2.msra.mxu0 0.0
        %4165 = vmatprep.subr.mxu0 0.0
        %4166 = vmatpush2.msra.mxu0 0.0
        %4167 = vmatprep.subr.mxu0 0.0
        %4168 = vmatpush2.msra.mxu0 0.0
        %4169 = vmatprep.subr.mxu0 0.0
        %4170 = vmatpush2.msra.mxu0 0.0
        %4171 = vmatprep.subr.mxu0 0.0
        %4172 = vmatpush2.msra.mxu0 0.0
        %4173 = vmatprep.subr.mxu0 0.0
        %4174 = vmatpush2.msra.mxu0 0.0
        %4175 = vmatprep.mubr.f32.mxu0 0.0
        %4176 = vmatmul.mubr.f32.gmra.mxu0 %v4088
        %v4177 = vpop.f32.mrf.mxu0
        %v4178 = vadd.f32 0.0, %v4177
        %v4179 = vpop.f32.mrf.mxu0
        %4180 = vmatprep.mubr.f32.mxu0 0.0
        %4181 = vmatmul.mubr.f32.gmra.mxu0 %v4091
        %v4182 = vpop.f32.mrf.mxu0
        %v4183 = vadd.f32 0.0, %v4182
        %v4184 = vpop.f32.mrf.mxu0
        %4185 = vmatprep.mubr.f32.mxu0 0.0
        %4186 = vmatmul.mubr.f32.gmra.mxu0 %v4094
        %v4187 = vpop.f32.mrf.mxu0
        %v4188 = vadd.f32 0.0, %v4187
        %v4189 = vpop.f32.mrf.mxu0
        %4190 = vmatprep.mubr.f32.mxu0 0.0
        %4191 = vmatmul.mubr.f32.gmra.mxu0 %v4097
        %v4192 = vpop.f32.mrf.mxu0
        %v4193 = vadd.f32 0.0, %v4192
        %v4194 = vpop.f32.mrf.mxu0
        %4195 = vmatprep.mubr.f32.mxu0 0.0
        %4196 = vmatmul.mubr.f32.gmra.mxu0 %v4100
        %v4197 = vpop.f32.mrf.mxu0
        %v4198 = vadd.f32 0.0, %v4197
        %v4199 = vpop.f32.mrf.mxu0
        %4200 = vmatprep.mubr.f32.mxu0 0.0
        %4201 = vmatmul.mubr.f32.gmra.mxu0 %v4103
        %v4202 = vpop.f32.mrf.mxu0
        %v4203 = vadd.f32 0.0, %v4202
        %v4204 = vpop.f32.mrf.mxu0
        %4205 = vmatprep.mubr.f32.mxu0 0.0
        %4206 = vmatmul.mubr.f32.gmra.mxu0 %v4106
        %v4207 = vpop.f32.mrf.mxu0
        %v4208 = vadd.f32 0.0, %v4207
        %v4209 = vpop.f32.mrf.mxu0
        %4210 = vmatprep.mubr.f32.mxu0 0.0
        %4211 = vmatmul.mubr.f32.gmra.mxu0 %v4109
        %v4212 = vpop.f32.mrf.mxu0
        %v4213 = vadd.f32 0.0, %v4212
        %v4214 = vpop.f32.mrf.mxu0
        %4215 = vdwg.mxu0
        %v4216 = vadd.f32 %v4071, %v4178
        %v4217 = vadd.f32 %v4072, %v4183
        %v4218 = vadd.f32 %v4073, %v4188
        %v4219 = vadd.f32 %v4074, %v4193
        %v4220 = vadd.f32 %v4075, %v4198
        %v4221 = vadd.f32 %v4076, %v4203
        %v4222 = vadd.f32 %v4077, %v4208
        %v4223 = vadd.f32 %v4078, %v4213
        %v4224 = vld [vmem:[%s12] sm:$0x1]
        %v4226 = vlaneseq
        %v4227 = vshrl.u32 %v4226, 7
        %v4228 = vsub.s32 0, %v4227
        %v4229 = vrot.slane %v4224, %v4228
        %v4231 = vadd.f32 %v4216, %v4229
        %v4232 = vadd.f32 %v4217, %v4229
        %v4233 = vadd.f32 %v4218, %v4229
        %v4234 = vadd.f32 %v4219, %v4229
        %v4235 = vadd.f32 %v4220, %v4229
        %v4236 = vadd.f32 %v4221, %v4229
        %v4237 = vadd.f32 %v4222, %v4229
        %v4238 = vadd.f32 %v4223, %v4229
        %v4239 = vsel %vm522, %v4231, 0.0
        %v4240 = vsel %vm522, %v4232, 0.0
        %v4241 = vadd.f32 %v4239, %v4240
        %v4242 = vsel %vm522, %v4233, 0.0
        %v4243 = vadd.f32 %v4241, %v4242
        %v4244 = vsel %vm522, %v4234, 0.0
        %v4245 = vadd.f32 %v4243, %v4244
        %v4246 = vsel %vm522, %v4235, 0.0
        %v4247 = vadd.f32 %v4245, %v4246
        %v4248 = vsel %vm522, %v4236, 0.0
        %v4249 = vadd.f32 %v4247, %v4248
        %v4250 = vsel %vm522, %v4237, 0.0
        %v4251 = vadd.f32 %v4249, %v4250
        %v4252 = vsel %vm522, %v4238, 0.0
        %v4253 = vadd.f32 %v4251, %v4252
        %v4254 = vrot.slane %v4253, 4
        %v4255 = vadd.f32 %v4253, %v4254
        %v4256 = vrot.slane %v4255, 2
        %v4257 = vadd.f32 %v4255, %v4256
        %v4258 = vrot.slane %v4257, 1
        %v4259 = vadd.f32 %v4257, %v4258
        %v4260 = vmul.f32 %v4259, %v673
        %v4261 = vsub.f32 %v4231, %v4260
        %v4262 = vsub.f32 %v4232, %v4260
        %v4263 = vsub.f32 %v4233, %v4260
        %v4264 = vsub.f32 %v4234, %v4260
        %v4265 = vsub.f32 %v4235, %v4260
        %v4266 = vsub.f32 %v4236, %v4260
        %v4267 = vsub.f32 %v4237, %v4260
        %v4268 = vsub.f32 %v4238, %v4260
        %v4269 = vmul.f32 %v4261, %v4261
        %v4270 = vmul.f32 %v4262, %v4262
        %v4271 = vmul.f32 %v4263, %v4263
        %v4272 = vmul.f32 %v4264, %v4264
        %v4273 = vmul.f32 %v4265, %v4265
        %v4274 = vmul.f32 %v4266, %v4266
        %v4275 = vmul.f32 %v4267, %v4267
        %v4276 = vmul.f32 %v4268, %v4268
        %v4277 = vsel %vm522, %v4269, 0.0
        %v4278 = vsel %vm522, %v4270, 0.0
        %v4279 = vadd.f32 %v4277, %v4278
        %v4280 = vsel %vm522, %v4271, 0.0
        %v4281 = vadd.f32 %v4279, %v4280
        %v4282 = vsel %vm522, %v4272, 0.0
        %v4283 = vadd.f32 %v4281, %v4282
        %v4284 = vsel %vm522, %v4273, 0.0
        %v4285 = vadd.f32 %v4283, %v4284
        %v4286 = vsel %vm522, %v4274, 0.0
        %v4287 = vadd.f32 %v4285, %v4286
        %v4288 = vsel %vm522, %v4275, 0.0
        %v4289 = vadd.f32 %v4287, %v4288
        %v4290 = vsel %vm522, %v4276, 0.0
        %v4291 = vadd.f32 %v4289, %v4290
        %v4292 = vrot.slane %v4291, 4
        %v4293 = vadd.f32 %v4291, %v4292
        %v4294 = vrot.slane %v4293, 2
        %v4295 = vadd.f32 %v4293, %v4294
        %v4296 = vrot.slane %v4295, 1
        %v4297 = vadd.f32 %v4295, %v4296
        %v4298 = vmul.f32 %v4297, %v673
        %v4299 = vadd.f32 %v4298, 1e-05
        %v4300 = vrsqrt.pop %v4299
        %v4301 = vld [vmem:[%s13] sm:$0x1]
        %v4302 = vmul.f32 %v4300, %v4301
        %v4303 = vlaneseq
        %v4304 = vshrl.u32 %v4303, 7
        %v4305 = vsub.s32 0, %v4304
        %v4306 = vrot.slane %v4302, %v4305
        %v4307 = vmul.f32 %v4261, %v4306
        %v4308 = vmul.f32 %v4262, %v4306
        %v4309 = vmul.f32 %v4263, %v4306
        %v4310 = vmul.f32 %v4264, %v4306
        %v4311 = vmul.f32 %v4265, %v4306
        %v4312 = vmul.f32 %v4266, %v4306
        %v4313 = vmul.f32 %v4267, %v4306
        %v4314 = vmul.f32 %v4268, %v4306
        %v4315 = vld [vmem:[%s14] sm:$0x1]
        %v4317 = vlaneseq
        %v4318 = vshrl.u32 %v4317, 7
        %v4319 = vsub.s32 0, %v4318
        %v4320 = vrot.slane %v4315, %v4319
        %v4322 = vadd.f32 %v4307, %v4320
        %v4323 = vadd.f32 %v4308, %v4320
        %v4324 = vadd.f32 %v4309, %v4320
        %v4325 = vadd.f32 %v4310, %v4320
        %v4326 = vadd.f32 %v4311, %v4320
        %v4327 = vadd.f32 %v4312, %v4320
        %v4328 = vadd.f32 %v4313, %v4320
        %v4329 = vadd.f32 %v4314, %v4320
        %s4330 = sld [smem:[#allocation3]]
        %vm4331 = vcmp.gt.f32.partialorder %v4322, 0.0
        %vm4332 = vcmp.gt.f32.partialorder %v4323, 0.0
        %vm4333 = vcmp.gt.f32.partialorder %v4324, 0.0
        %vm4334 = vcmp.gt.f32.partialorder %v4325, 0.0
        %vm4335 = vcmp.gt.f32.partialorder %v4326, 0.0
        %vm4336 = vcmp.gt.f32.partialorder %v4327, 0.0
        %vm4337 = vcmp.gt.f32.partialorder %v4328, 0.0
        %vm4338 = vcmp.gt.f32.partialorder %v4329, 0.0
        %v4339 = vstv %s4330
        %v4340 = vmul.f32 %v4339, %v4322
        %v4341 = vmul.f32 %v4339, %v4323
        %v4342 = vmul.f32 %v4339, %v4324
        %v4343 = vmul.f32 %v4339, %v4325
        %v4344 = vmul.f32 %v4339, %v4326
        %v4345 = vmul.f32 %v4339, %v4327
        %v4346 = vmul.f32 %v4339, %v4328
        %v4347 = vmul.f32 %v4339, %v4329
        %v4348 = vsel %vm4331, %v4322, %v4340
        %v4349 = vsel %vm4332, %v4323, %v4341
        %v4350 = vsel %vm4333, %v4324, %v4342
        %v4351 = vsel %vm4334, %v4325, %v4343
        %v4352 = vsel %vm4335, %v4326, %v4344
        %v4353 = vsel %vm4336, %v4327, %v4345
        %v4354 = vsel %vm4337, %v4328, %v4346
        %v4355 = vsel %vm4338, %v4329, %v4347
        %v4356 = vsel %vm522, %v4348, 0.0
        %v4357 = vsel %vm522, %v4349, 0.0
        %v4358 = vadd.f32 %v4356, %v4357
        %v4359 = vsel %vm522, %v4350, 0.0
        %v4360 = vadd.f32 %v4358, %v4359
        %v4361 = vsel %vm522, %v4351, 0.0
        %v4362 = vadd.f32 %v4360, %v4361
        %v4363 = vsel %vm522, %v4352, 0.0
        %v4364 = vadd.f32 %v4362, %v4363
        %v4365 = vsel %vm522, %v4353, 0.0
        %v4366 = vadd.f32 %v4364, %v4365
        %v4367 = vsel %vm522, %v4354, 0.0
        %v4368 = vadd.f32 %v4366, %v4367
        %v4369 = vsel %vm522, %v4355, 0.0
        %v4370 = vadd.f32 %v4368, %v4369
        %v4371 = vrot.slane %v4370, 4
        %v4372 = vadd.f32 %v4370, %v4371
        %v4373 = vrot.slane %v4372, 2
        %v4374 = vadd.f32 %v4372, %v4373
        %v4375 = vrot.slane %v4374, 1
        %v4376 = vadd.f32 %v4374, %v4375
        %v4377 = vmul.f32 %v4376, %v673
        %4378 = vst.msk [vmem:[%s512] sm:$0x1] %vm1975, %v4377
        %s4379 = sand.u32 %s361, 1
        %s4380 = scalar_lea.sflag [#allocation6], %s4379
        %s4381 = sand.u32 %s361, 1
        %s4382 = scalar_lea.vmem [#allocation7], %s4381
        // Predicated region
        $region85: #{tpu_custom_call.1} parent=79 // pred_check
          %p4383 = pneg %p371
        $region86: #{tpu_custom_call.1} parent=79 // pred_check_branch
          %4385 = sbr.rel (%p4383) target = $region88
        $region87: #{tpu_custom_call.1} parent=79 // pred_region
          %s4387 = ssub.s32 16, 16
          %4388 = vsyncadd %s4380, %s4387
          %s4389 = smul.addr %s33, 16
          %s4390 = scalar_lea.hbm %s15, %s4389
          %s4392 = sshll.u32 %s4382, 4
          %s4393 = int_to_ptr.vmem [resolvable:$true] %s4392
          %4395 = dma.vmem_to_hbm [thread:$0]  %s4393, 16, %s4390, %s4380
        $region88: #{tpu_custom_call.1} parent=79 // pred_fallthru
          _
      $region80: #{tpu_custom_call.1} parent=5 // pred_fallthru
        _
      %p4396 = scmp.le.s32.totalorder 2, %s28
      // Predicated region
      $region89: #{tpu_custom_call.1} parent=5 // pred_check
        %p4397 = pneg %p4396
      $region90: #{tpu_custom_call.1} parent=5 // pred_check_branch
        %4399 = sbr.rel (%p4397) target = $region92
      $region91: #{tpu_custom_call.1} parent=5 // pred_region
        %s4400 = ssub.s32 %s28, 2
        // Predicated region
        $region93: #{tpu_custom_call.1} parent=91 // pred_check
          %p4401 = pneg %p377
        $region94: #{tpu_custom_call.1} parent=91 // pred_check_branch
          %4403 = sbr.rel (%p4401) target = $region96
        $region95: #{tpu_custom_call.1} parent=91 // pred_region
          %s4404 = sand.u32 %s362, 1
          %s4405 = scalar_lea.sflag [#allocation6], %s4404
          %s4406 = sand.u32 %s362, 1
          %s4407 = scalar_lea.vmem [#allocation7], %s4406
          %4408 = dma.done %s4405, 16
        $region96: #{tpu_custom_call.1} parent=91 // pred_fallthru
          _
      $region92: #{tpu_custom_call.1} parent=5 // pred_fallthru
        _
    $region6: #{tpu_custom_call.1} parent=1 // loop_footer
      %s32 = sadd.s32 1, %s28
    $region7: #{tpu_custom_call.1} parent=1 // loop_footer_branch
      %27 = sbr.rel target = $region3
    $region8: #{tpu_custom_call.1} parent=1 // loop_exit
      _
    %4409 = vsyncpa [#allocation5], 1
    %s4410 = scalar_lea.sflag [#allocation5], 1
    %4411 = vsyncpa %s4410, 1
    %4412 = vsyncpa [#allocation6], 1
    %s4413 = scalar_lea.sflag [#allocation6], 1
    %4414 = vsyncpa %s4413, 1

</llo_original>
